<compile_context>
chip_gen: v5e
topology: v5e:2x2
jax: 0.10.0
libtpu: 0.0.40
codegen_flags: <defaults>
</compile_context>

<pallas_src>
import jax
import jax.numpy as jnp
from jax.experimental import pallas as pl
from jax.experimental.pallas import tpu as pltpu

HIDDEN = 768


def dictnet_kernel(x_ref, w1_ref, b1_ref, w2_ref, b2_ref, w3_ref, b3_ref,
                   pred_ref):
    # One grid step == one batch element's full sequence: x is [S, H] f32.
    x = x_ref[0]                                                     # [S, H]

    # recnn: three chained Linear(768, 768) layers (no nonlinearity in the
    # original nn.Sequential).  bf16 operands into the MXU, f32 accumulation,
    # f32 bias add on the VPU.
    h = jnp.dot(x.astype(jnp.bfloat16), w1_ref[...],
                preferred_element_type=jnp.float32) + b1_ref[...]
    h = jnp.dot(h.astype(jnp.bfloat16), w2_ref[...],
                preferred_element_type=jnp.float32) + b2_ref[...]
    h = jnp.dot(h.astype(jnp.bfloat16), w3_ref[...],
                preferred_element_type=jnp.float32) + b3_ref[...]

    # mean pooling over the sequence axis (matches model_output.mean(axis=1),
    # i.e. divide by S regardless of attention_mask).
    pred = jnp.mean(h, axis=0, keepdims=True)                        # [1, H]
    pred_ref[...] = pred.reshape(1, 1, HIDDEN)


def dictnet_pallas(explanation, w1, b1, w2, b2, w3, b3):
    """explanation: [B, S, H] f32; weights [H, H] bf16; biases [1, H] f32."""
    B, S, H = explanation.shape

    flops = 2 * B * S * H * H * 3
    bytes_accessed = (3 * H * H * 2          # bf16 weights
                      + 3 * H * 4            # f32 biases
                      + B * S * H * 4        # f32 activations in
                      + B * H * 4)           # f32 pred out

    weight_spec = pl.BlockSpec((H, H), lambda b: (0, 0))   # resident in VMEM
    bias_spec = pl.BlockSpec((1, H), lambda b: (0, 0))     # resident in VMEM

    grid_spec = pltpu.PrefetchScalarGridSpec(
        num_scalar_prefetch=0,
        grid=(B,),
        in_specs=[
            pl.BlockSpec((1, S, H), lambda b: (b, 0, 0)),   # activation tile
            weight_spec, bias_spec,
            weight_spec, bias_spec,
            weight_spec, bias_spec,
        ],
        out_specs=pl.BlockSpec((1, 1, H), lambda b: (b, 0, 0)),
    )

    pred = pl.pallas_call(
        dictnet_kernel,
        out_shape=jax.ShapeDtypeStruct((B, 1, H), jnp.float32),
        grid_spec=grid_spec,
        compiler_params=pltpu.CompilerParams(
            dimension_semantics=("parallel",),        # megacore sharding (v7x)
            vmem_limit_bytes=32 * 1024 * 1024,
        ),
        cost_estimate=pl.CostEstimate(
            flops=flops, transcendentals=0, bytes_accessed=bytes_accessed),
    )(explanation, w1, b1, w2, b2, w3, b3)
    return pred.reshape(B, H)


def init_params(key, vocab_size):
    ks = jax.random.split(key, 9)
    scale = 1.0 / jnp.sqrt(jnp.float32(HIDDEN))
    params = {
        # frozen BERT word-embedding table (self.embedding_weight in the module)
        "embedding_weight": jax.random.normal(
            ks[0], (vocab_size, HIDDEN), jnp.float32) * 0.02,
        # stand-in BERT input embeddings (see TODO below)
        "bert_word_emb": jax.random.normal(
            ks[1], (vocab_size, HIDDEN), jnp.float32) * 0.02,
        "bert_type_emb": jax.random.normal(
            ks[2], (2, HIDDEN), jnp.float32) * 0.02,
        # recnn: three Linear(768, 768) layers, weights stored [in, out], bf16
        "w1": jax.random.uniform(ks[3], (HIDDEN, HIDDEN), jnp.float32,
                                 -scale, scale).astype(jnp.bfloat16),
        "b1": jax.random.uniform(ks[4], (1, HIDDEN), jnp.float32, -scale, scale),
        "w2": jax.random.uniform(ks[5], (HIDDEN, HIDDEN), jnp.float32,
                                 -scale, scale).astype(jnp.bfloat16),
        "b2": jax.random.uniform(ks[6], (1, HIDDEN), jnp.float32, -scale, scale),
        "w3": jax.random.uniform(ks[7], (HIDDEN, HIDDEN), jnp.float32,
                                 -scale, scale).astype(jnp.bfloat16),
        "b3": jax.random.uniform(ks[8], (1, HIDDEN), jnp.float32, -scale, scale),
    }
    return params


def dictnet_forward(params, word_ids, token_type_ids, input_ids, attention_mask):
    # TODO(synk): the pretrained BERT encoder (self.bert(...)[0]) has no clean
    # Pallas equivalent here; its output `explanation` is stood in by a
    # deterministic embedding lookup (word + token-type embeddings, masked).
    emb = params["bert_word_emb"][input_ids] + params["bert_type_emb"][token_type_ids]
    explanation = emb * attention_mask[..., None].astype(emb.dtype)   # [B, S, H]

    pred_embed = dictnet_pallas(
        explanation,
        params["w1"], params["b1"],
        params["w2"], params["b2"],
        params["w3"], params["b3"],
    )                                                                 # [B, H]

    # MSE loss (mean over all elements, matching F.mse_loss default reduction),
    # computed in plain JAX on the tiny [B, H] prediction.
    target = params["embedding_weight"][word_ids]                     # [B, H]
    diff = pred_embed - target
    loss = jnp.mean(diff * diff)

    return {"loss": loss, "pred_embed": pred_embed}


if __name__ == "__main__":
    B, S, VOCAB = 2, 8, 64

    key = jax.random.PRNGKey(0)
    k_params, k_ids, k_words = jax.random.split(key, 3)

    params = init_params(k_params, VOCAB)

    input_ids = jax.random.randint(k_ids, (B, S), 0, VOCAB, dtype=jnp.int32)
    token_type_ids = jnp.zeros((B, S), dtype=jnp.int32)
    attention_mask = jnp.ones((B, S), dtype=jnp.int32)
    word_ids = jax.random.randint(k_words, (B,), 0, VOCAB, dtype=jnp.int32)

    out = dictnet_forward(params, word_ids, token_type_ids, input_ids,
                          attention_mask)
    jax.block_until_ready(out)

    assert out["pred_embed"].shape == (B, HIDDEN)
    assert out["loss"].shape == ()
    print("KERNEL_OK")
</pallas_src>

<mosaic_0001>
module attributes {stable_mosaic.version = 11 : i64} {
  func.func @dictnet_kernel(%arg0: i32, %arg1: memref<1x8x768xf32, #tpu.memory_space<vmem>>, %arg2: memref<768x768xbf16, #tpu.memory_space<vmem>>, %arg3: memref<1x768xf32, #tpu.memory_space<vmem>>, %arg4: memref<768x768xbf16, #tpu.memory_space<vmem>>, %arg5: memref<1x768xf32, #tpu.memory_space<vmem>>, %arg6: memref<768x768xbf16, #tpu.memory_space<vmem>>, %arg7: memref<1x768xf32, #tpu.memory_space<vmem>>, %arg8: memref<1x1x768xf32, #tpu.memory_space<vmem>>) attributes {dimension_semantics = [#tpu.dimension_semantics<parallel>], iteration_bounds = array<i64: 2>, scalar_prefetch = 0 : i64, scratch_operands = 0 : i64, tpu.core_type = #tpu.core_type<tc>, window_params = [{transform_indices = @transform_0, window_bounds = array<i64: 1, 8, 768>}, {pipeline_mode = #tpu.pipeline_mode<synchronous>, transform_indices = @transform_1, window_bounds = array<i64: 768, 768>}, {pipeline_mode = #tpu.pipeline_mode<synchronous>, transform_indices = @transform_2, window_bounds = array<i64: 1, 768>}, {pipeline_mode = #tpu.pipeline_mode<synchronous>, transform_indices = @transform_3, window_bounds = array<i64: 768, 768>}, {pipeline_mode = #tpu.pipeline_mode<synchronous>, transform_indices = @transform_4, window_bounds = array<i64: 1, 768>}, {pipeline_mode = #tpu.pipeline_mode<synchronous>, transform_indices = @transform_5, window_bounds = array<i64: 768, 768>}, {pipeline_mode = #tpu.pipeline_mode<synchronous>, transform_indices = @transform_6, window_bounds = array<i64: 1, 768>}, {transform_indices = @transform_7, window_bounds = array<i64: 1, 1, 768>}]} {
    %c0 = arith.constant 0 : index
    %c0_0 = arith.constant 0 : index
    %c0_1 = arith.constant 0 : index
    %0 = vector.load %arg1[%c0, %c0_0, %c0_1] : memref<1x8x768xf32, #tpu.memory_space<vmem>>, vector<1x8x768xf32>
    %1 = vector.shape_cast %0 : vector<1x8x768xf32> to vector<8x768xf32>
    %2 = arith.truncf %1 : vector<8x768xf32> to vector<8x768xbf16>
    %c0_2 = arith.constant 0 : index
    %c0_3 = arith.constant 0 : index
    %3 = vector.load %arg2[%c0_2, %c0_3] : memref<768x768xbf16, #tpu.memory_space<vmem>>, vector<768x768xbf16>
    %cst = arith.constant dense<0.000000e+00> : vector<8x768xf32>
    %4 = tpu.matmul %2, %3, %cst {dimension_numbers = #tpu.dot_dimension_numbers<[1], [0], [0], [1], [0, 0, 1, 1], [], []>} : vector<8x768xbf16>, vector<768x768xbf16>, vector<8x768xf32> -> vector<8x768xf32>
    %c0_4 = arith.constant 0 : index
    %c0_5 = arith.constant 0 : index
    %5 = vector.load %arg3[%c0_4, %c0_5] : memref<1x768xf32, #tpu.memory_space<vmem>>, vector<1x768xf32>
    %6 = vector.broadcast %5 : vector<1x768xf32> to vector<8x768xf32>
    %7 = arith.addf %4, %6 : vector<8x768xf32>
    %8 = arith.truncf %7 : vector<8x768xf32> to vector<8x768xbf16>
    %c0_6 = arith.constant 0 : index
    %c0_7 = arith.constant 0 : index
    %9 = vector.load %arg4[%c0_6, %c0_7] : memref<768x768xbf16, #tpu.memory_space<vmem>>, vector<768x768xbf16>
    %cst_8 = arith.constant dense<0.000000e+00> : vector<8x768xf32>
    %10 = tpu.matmul %8, %9, %cst_8 {dimension_numbers = #tpu.dot_dimension_numbers<[1], [0], [0], [1], [0, 0, 1, 1], [], []>} : vector<8x768xbf16>, vector<768x768xbf16>, vector<8x768xf32> -> vector<8x768xf32>
    %c0_9 = arith.constant 0 : index
    %c0_10 = arith.constant 0 : index
    %11 = vector.load %arg5[%c0_9, %c0_10] : memref<1x768xf32, #tpu.memory_space<vmem>>, vector<1x768xf32>
    %12 = vector.broadcast %11 : vector<1x768xf32> to vector<8x768xf32>
    %13 = arith.addf %10, %12 : vector<8x768xf32>
    %14 = arith.truncf %13 : vector<8x768xf32> to vector<8x768xbf16>
    %c0_11 = arith.constant 0 : index
    %c0_12 = arith.constant 0 : index
    %15 = vector.load %arg6[%c0_11, %c0_12] : memref<768x768xbf16, #tpu.memory_space<vmem>>, vector<768x768xbf16>
    %cst_13 = arith.constant dense<0.000000e+00> : vector<8x768xf32>
    %16 = tpu.matmul %14, %15, %cst_13 {dimension_numbers = #tpu.dot_dimension_numbers<[1], [0], [0], [1], [0, 0, 1, 1], [], []>} : vector<8x768xbf16>, vector<768x768xbf16>, vector<8x768xf32> -> vector<8x768xf32>
    %c0_14 = arith.constant 0 : index
    %c0_15 = arith.constant 0 : index
    %17 = vector.load %arg7[%c0_14, %c0_15] : memref<1x768xf32, #tpu.memory_space<vmem>>, vector<1x768xf32>
    %18 = vector.broadcast %17 : vector<1x768xf32> to vector<8x768xf32>
    %19 = arith.addf %16, %18 : vector<8x768xf32>
    %cst_16 = arith.constant dense<0.000000e+00> : vector<768xf32>
    %20 = vector.multi_reduction <add>, %19, %cst_16 [0] : vector<8x768xf32> to vector<768xf32>
    %21 = vector.shape_cast %20 : vector<768xf32> to vector<1x768xf32>
    %cst_17 = arith.constant 8.000000e+00 : f32
    %22 = vector.broadcast %cst_17 : f32 to vector<1x768xf32>
    %23 = arith.divf %21, %22 : vector<1x768xf32>
    %24 = vector.shape_cast %23 : vector<1x768xf32> to vector<1x1x768xf32>
    %c0_18 = arith.constant 0 : index
    %c0_19 = arith.constant 0 : index
    %c0_20 = arith.constant 0 : index
    %25 = vector.load %arg8[%c0_18, %c0_19, %c0_20] : memref<1x1x768xf32, #tpu.memory_space<vmem>>, vector<1x1x768xf32>
    tpu.vector_store %arg8[%c0_18, %c0_19, %c0_20], %24 {strides = array<i32>} : memref<1x1x768xf32, #tpu.memory_space<vmem>>, vector<1x1x768xf32>,
    return
  }
  func.func @transform_0(%arg0: i32) -> (i32, i32, i32) {
    %c0_i32 = arith.constant 0 : i32
    %c0_i32_0 = arith.constant 0 : i32
    %c0_i32_1 = arith.constant 0 : i32
    return %arg0, %c0_i32, %c0_i32_0 : i32, i32, i32
  }
  func.func @transform_1(%arg0: i32) -> (i32, i32) {
    %c0_i32 = arith.constant 0 : i32
    %c0_i32_0 = arith.constant 0 : i32
    %c0_i32_1 = arith.constant 0 : i32
    return %c0_i32, %c0_i32_0 : i32, i32
  }
  func.func @transform_2(%arg0: i32) -> (i32, i32) {
    %c0_i32 = arith.constant 0 : i32
    %c0_i32_0 = arith.constant 0 : i32
    %c0_i32_1 = arith.constant 0 : i32
    return %c0_i32, %c0_i32_0 : i32, i32
  }
  func.func @transform_3(%arg0: i32) -> (i32, i32) {
    %c0_i32 = arith.constant 0 : i32
    %c0_i32_0 = arith.constant 0 : i32
    %c0_i32_1 = arith.constant 0 : i32
    return %c0_i32, %c0_i32_0 : i32, i32
  }
  func.func @transform_4(%arg0: i32) -> (i32, i32) {
    %c0_i32 = arith.constant 0 : i32
    %c0_i32_0 = arith.constant 0 : i32
    %c0_i32_1 = arith.constant 0 : i32
    return %c0_i32, %c0_i32_0 : i32, i32
  }
  func.func @transform_5(%arg0: i32) -> (i32, i32) {
    %c0_i32 = arith.constant 0 : i32
    %c0_i32_0 = arith.constant 0 : i32
    %c0_i32_1 = arith.constant 0 : i32
    return %c0_i32, %c0_i32_0 : i32, i32
  }
  func.func @transform_6(%arg0: i32) -> (i32, i32) {
    %c0_i32 = arith.constant 0 : i32
    %c0_i32_0 = arith.constant 0 : i32
    %c0_i32_1 = arith.constant 0 : i32
    return %c0_i32, %c0_i32_0 : i32, i32
  }
  func.func @transform_7(%arg0: i32) -> (i32, i32, i32) {
    %c0_i32 = arith.constant 0 : i32
    %c0_i32_0 = arith.constant 0 : i32
    %c0_i32_1 = arith.constant 0 : i32
    return %arg0, %c0_i32, %c0_i32_0 : i32, i32, i32
  }
}

</mosaic_0001>

<llo_original>
// kernel: tpu_custom_call.1
$region0: #{tpu_custom_call.1}
  #allocation0 [shape = 'u32[]', space=smem, size = 0x4, offset = 0x4, fixed_abs, tag = 'smem constant byte address 0x4 - core index']
  #allocation1 [shape = 'u32[72,128]{1,0:T(1,128)}', space=vmem, size = 0x9000, scoped, tag = 'internal scratch']
  %s0 = inlined_call_operand.hbm [shape: f32[2,8,768], index: 0, kind: input, shape index: {}]
  %s1 = inlined_call_operand.hbm [shape: bf16[768,768], index: 1, kind: input, shape index: {}]
  %s2 = inlined_call_operand.hbm [shape: f32[1,768], index: 2, kind: input, shape index: {}]
  %s3 = inlined_call_operand.hbm [shape: bf16[768,768], index: 3, kind: input, shape index: {}]
  %s4 = inlined_call_operand.hbm [shape: f32[1,768], index: 4, kind: input, shape index: {}]
  %s5 = inlined_call_operand.hbm [shape: bf16[768,768], index: 5, kind: input, shape index: {}]
  %s6 = inlined_call_operand.hbm [shape: f32[1,768], index: 6, kind: input, shape index: {}]
  %s7 = inlined_call_operand.hbm [shape: f32[2,1,768], index: 7, kind: output, shape index: {}]
  %s8 = sld [smem:[#allocation0]]
  $region89: #{tpu_custom_call.1} parent=0
    _
  %s10 = ssub.s32 1, %s8
  %s11 = scalar_select 0, %s10, %s8
  $region1: #{tpu_custom_call.1} parent=0
    #allocation2 [shape = 'u8[49152]{0}', space=vmem, size = 0xc000, scoped, tag = 'input window, operand 0']
    #allocation3 [shape = 's32[2]{0}', space=sflag, size = 0x8, scoped, tag = 'scoped memory for tpu_custom_call.1']
    #allocation4 [shape = 's32[2]{0}', space=sflag, size = 0x8, scoped, tag = 'scoped memory for tpu_custom_call.1']
    #allocation5 [shape = 'u8[1179648]{0}', space=vmem, size = 0x120000, scoped, tag = 'input window, operand 1, single buffered']
    #allocation6 [shape = 's32[1]{0}', space=sflag, size = 0x4, scoped, tag = 'scoped memory for tpu_custom_call.1']
    #allocation7 [shape = 'u8[3072]{0}', space=vmem, size = 0xc00, scoped, tag = 'input window, operand 2, single buffered']
    #allocation8 [shape = 'u8[1179648]{0}', space=vmem, size = 0x120000, scoped, tag = 'input window, operand 3, single buffered']
    #allocation9 [shape = 's32[1]{0}', space=sflag, size = 0x4, scoped, tag = 'scoped memory for tpu_custom_call.1']
    #allocation10 [shape = 'u8[3072]{0}', space=vmem, size = 0xc00, scoped, tag = 'input window, operand 4, single buffered']
    #allocation11 [shape = 'u8[1179648]{0}', space=vmem, size = 0x120000, scoped, tag = 'input window, operand 5, single buffered']
    #allocation12 [shape = 's32[1]{0}', space=sflag, size = 0x4, scoped, tag = 'scoped memory for tpu_custom_call.1']
    #allocation13 [shape = 'u8[3072]{0}', space=vmem, size = 0xc00, scoped, tag = 'input window, operand 6, single buffered']
    #allocation14 [shape = 'u8[6144]{0}', space=vmem, size = 0x1800, scoped, tag = 'output window, operand 0']
    %12 = vsyncpa [#allocation3], 0
    %s13 = scalar_lea.sflag [#allocation3], 1
    %14 = vsyncpa %s13, 0
    %15 = vsyncpa [#allocation6], 0
    %16 = vsyncpa [#allocation9], 0
    %17 = vsyncpa [#allocation12], 0
    %18 = vsyncpa [#allocation4], 0
    %s19 = scalar_lea.sflag [#allocation4], 1
    %20 = vsyncpa %s19, 0
    loop: start=0, step=1, limit=4
    $region2: #{tpu_custom_call.1} parent=1 // loop_pre_header
      _
    $region3: #{tpu_custom_call.1} parent=1 // loop_header
      %s22 = sphi 0, %s26
      %p23 = scmp.ge.s32.totalorder %s22, 4
      %s32 = sphi 0, %s34
      %s35 = sphi 0, %s32
      %s36 = sphi 0, %s35
      %s52 = sphi 0, %s36
      %s56 = sphi 0, %s56
      %s58 = sphi 0, %s56
      %s59 = sphi 0, %s58
      %s73 = sphi 0, %s59
      %s77 = sphi 0, %s77
      %s79 = sphi 0, %s77
      %s80 = sphi 0, %s79
      %s94 = sphi 0, %s80
      %s98 = sphi 0, %s98
      %s100 = sphi 0, %s98
      %s101 = sphi 0, %s100
      %s115 = sphi 0, %s101
      %s119 = sphi 0, %s119
      %s121 = sphi 0, %s119
      %s122 = sphi 0, %s121
      %s136 = sphi 0, %s122
      %s140 = sphi 0, %s140
      %s142 = sphi 0, %s140
      %s143 = sphi 0, %s142
      %s157 = sphi 0, %s143
      %s161 = sphi 0, %s161
      %s163 = sphi 0, %s161
      %s164 = sphi 0, %s163
      %s178 = sphi 0, %s164
      %s184 = sphi 0, %s186
      %s187 = sphi 0, %s184
      %s188 = sphi 0, %s187
      %s204 = sphi 0, %s188
    $region4: #{tpu_custom_call.1} parent=1 // loop_header_branch
      %25 = sbr.rel (%p23) target = $region8
    $region5: #{tpu_custom_call.1} parent=1 // loop_body
      %s27 = ssub.s32 %s22, 1
      %s28 = ssub.s32 %s22, 2
      %s29 = sadd.s32 %s22, 1
      %s30 = ssub.s32 %s22, %s29
      %p31 = scmp.eq.s32.totalorder %s30, 0
      %s33 = sadd.s32 %s32, 1
      %s34 = scalar_select %p31, %s32, %s33
      %p37 = pneg %p31
      %p38 = scmp.eq.s32.totalorder %s22, 1
      %p39 = por %p37, %p38
      %p40 = scmp.ne.s32.totalorder %s32, %s35
      %p41 = scmp.eq.s32.totalorder %s22, 0
      %p42 = por %p40, %p41
      %p43 = scmp.ne.s32.totalorder %s32, %s35
      %p44 = scmp.eq.s32.totalorder %s27, 1
      %p45 = por %p43, %p44
      %p46 = scmp.ne.s32.totalorder %s35, %s36
      %p47 = scmp.eq.s32.totalorder %s27, 0
      %p48 = por %p46, %p47
      %p49 = scmp.ne.s32.totalorder %s35, %s36
      %p50 = scmp.eq.s32.totalorder %s28, 1
      %p51 = por %p49, %p50
      %p53 = scmp.ne.s32.totalorder %s36, %s52
      %p54 = scmp.eq.s32.totalorder %s28, 0
      %p55 = por %p53, %p54
      %s57 = sadd.s32 %s56, 1
      %p60 = scmp.eq.s32.totalorder %s22, 1
      %p61 = scmp.ne.s32.totalorder %s56, %s58
      %p62 = scmp.eq.s32.totalorder %s22, 0
      %p63 = por %p61, %p62
      %p64 = scmp.ne.s32.totalorder %s56, %s58
      %p65 = scmp.eq.s32.totalorder %s27, 1
      %p66 = por %p64, %p65
      %p67 = scmp.ne.s32.totalorder %s58, %s59
      %p68 = scmp.eq.s32.totalorder %s27, 0
      %p69 = por %p67, %p68
      %p70 = scmp.ne.s32.totalorder %s58, %s59
      %p71 = scmp.eq.s32.totalorder %s28, 1
      %p72 = por %p70, %p71
      %p74 = scmp.ne.s32.totalorder %s59, %s73
      %p75 = scmp.eq.s32.totalorder %s28, 0
      %p76 = por %p74, %p75
      %s78 = sadd.s32 %s77, 1
      %p81 = scmp.eq.s32.totalorder %s22, 1
      %p82 = scmp.ne.s32.totalorder %s77, %s79
      %p83 = scmp.eq.s32.totalorder %s22, 0
      %p84 = por %p82, %p83
      %p85 = scmp.ne.s32.totalorder %s77, %s79
      %p86 = scmp.eq.s32.totalorder %s27, 1
      %p87 = por %p85, %p86
      %p88 = scmp.ne.s32.totalorder %s79, %s80
      %p89 = scmp.eq.s32.totalorder %s27, 0
      %p90 = por %p88, %p89
      %p91 = scmp.ne.s32.totalorder %s79, %s80
      %p92 = scmp.eq.s32.totalorder %s28, 1
      %p93 = por %p91, %p92
      %p95 = scmp.ne.s32.totalorder %s80, %s94
      %p96 = scmp.eq.s32.totalorder %s28, 0
      %p97 = por %p95, %p96
      %s99 = sadd.s32 %s98, 1
      %p102 = scmp.eq.s32.totalorder %s22, 1
      %p103 = scmp.ne.s32.totalorder %s98, %s100
      %p104 = scmp.eq.s32.totalorder %s22, 0
      %p105 = por %p103, %p104
      %p106 = scmp.ne.s32.totalorder %s98, %s100
      %p107 = scmp.eq.s32.totalorder %s27, 1
      %p108 = por %p106, %p107
      %p109 = scmp.ne.s32.totalorder %s100, %s101
      %p110 = scmp.eq.s32.totalorder %s27, 0
      %p111 = por %p109, %p110
      %p112 = scmp.ne.s32.totalorder %s100, %s101
      %p113 = scmp.eq.s32.totalorder %s28, 1
      %p114 = por %p112, %p113
      %p116 = scmp.ne.s32.totalorder %s101, %s115
      %p117 = scmp.eq.s32.totalorder %s28, 0
      %p118 = por %p116, %p117
      %s120 = sadd.s32 %s119, 1
      %p123 = scmp.eq.s32.totalorder %s22, 1
      %p124 = scmp.ne.s32.totalorder %s119, %s121
      %p125 = scmp.eq.s32.totalorder %s22, 0
      %p126 = por %p124, %p125
      %p127 = scmp.ne.s32.totalorder %s119, %s121
      %p128 = scmp.eq.s32.totalorder %s27, 1
      %p129 = por %p127, %p128
      %p130 = scmp.ne.s32.totalorder %s121, %s122
      %p131 = scmp.eq.s32.totalorder %s27, 0
      %p132 = por %p130, %p131
      %p133 = scmp.ne.s32.totalorder %s121, %s122
      %p134 = scmp.eq.s32.totalorder %s28, 1
      %p135 = por %p133, %p134
      %p137 = scmp.ne.s32.totalorder %s122, %s136
      %p138 = scmp.eq.s32.totalorder %s28, 0
      %p139 = por %p137, %p138
      %s141 = sadd.s32 %s140, 1
      %p144 = scmp.eq.s32.totalorder %s22, 1
      %p145 = scmp.ne.s32.totalorder %s140, %s142
      %p146 = scmp.eq.s32.totalorder %s22, 0
      %p147 = por %p145, %p146
      %p148 = scmp.ne.s32.totalorder %s140, %s142
      %p149 = scmp.eq.s32.totalorder %s27, 1
      %p150 = por %p148, %p149
      %p151 = scmp.ne.s32.totalorder %s142, %s143
      %p152 = scmp.eq.s32.totalorder %s27, 0
      %p153 = por %p151, %p152
      %p154 = scmp.ne.s32.totalorder %s142, %s143
      %p155 = scmp.eq.s32.totalorder %s28, 1
      %p156 = por %p154, %p155
      %p158 = scmp.ne.s32.totalorder %s143, %s157
      %p159 = scmp.eq.s32.totalorder %s28, 0
      %p160 = por %p158, %p159
      %s162 = sadd.s32 %s161, 1
      %p165 = scmp.eq.s32.totalorder %s22, 1
      %p166 = scmp.ne.s32.totalorder %s161, %s163
      %p167 = scmp.eq.s32.totalorder %s22, 0
      %p168 = por %p166, %p167
      %p169 = scmp.ne.s32.totalorder %s161, %s163
      %p170 = scmp.eq.s32.totalorder %s27, 1
      %p171 = por %p169, %p170
      %p172 = scmp.ne.s32.totalorder %s163, %s164
      %p173 = scmp.eq.s32.totalorder %s27, 0
      %p174 = por %p172, %p173
      %p175 = scmp.ne.s32.totalorder %s163, %s164
      %p176 = scmp.eq.s32.totalorder %s28, 1
      %p177 = por %p175, %p176
      %p179 = scmp.ne.s32.totalorder %s164, %s178
      %p180 = scmp.eq.s32.totalorder %s28, 0
      %p181 = por %p179, %p180
      %s182 = ssub.s32 %s22, %s29
      %p183 = scmp.eq.s32.totalorder %s182, 0
      %s185 = sadd.s32 %s184, 1
      %s186 = scalar_select %p183, %s184, %s185
      %p189 = pneg %p183
      %p190 = scmp.eq.s32.totalorder %s22, 1
      %p191 = por %p189, %p190
      %p192 = scmp.ne.s32.totalorder %s184, %s187
      %p193 = scmp.eq.s32.totalorder %s22, 0
      %p194 = por %p192, %p193
      %p195 = scmp.ne.s32.totalorder %s184, %s187
      %p196 = scmp.eq.s32.totalorder %s27, 1
      %p197 = por %p195, %p196
      %p198 = scmp.ne.s32.totalorder %s187, %s188
      %p199 = scmp.eq.s32.totalorder %s27, 0
      %p200 = por %p198, %p199
      %p201 = scmp.ne.s32.totalorder %s187, %s188
      %p202 = scmp.eq.s32.totalorder %s28, 1
      %p203 = por %p201, %p202
      %p205 = scmp.ne.s32.totalorder %s188, %s204
      %p206 = scmp.eq.s32.totalorder %s28, 0
      %p207 = por %p205, %p206
      %p208 = scmp.le.s32.totalorder 1, %s22
      %p209 = scmp.lt.s32.totalorder %s22, 3
      %p210 = pnand %p208, %p209
      %p211 = pneg %p210
      // Predicated region
      $region9: #{tpu_custom_call.1} parent=5 // pred_check
        _
      $region10: #{tpu_custom_call.1} parent=5 // pred_check_branch
        %213 = sbr.rel (%p210) target = $region12
      $region11: #{tpu_custom_call.1} parent=5 // pred_region
        %s214 = ssub.s32 %s22, 1
        // Predicated region
        $region13: #{tpu_custom_call.1} parent=11 // pred_check
          %p215 = pneg %p69
        $region14: #{tpu_custom_call.1} parent=11 // pred_check_branch
          %217 = sbr.rel (%p215) target = $region16
        $region15: #{tpu_custom_call.1} parent=11 // pred_region
          %219 = vsyncadd [#allocation6], 0
          %s220 = sshll.u32 %s1, 4
          %s221 = int_to_ptr.hbm [resolvable:$true] %s220
          %s222 = sshll.u32 [#allocation5], 4
          %s223 = int_to_ptr.vmem [resolvable:$true] %s222
          %228 = dma.hbm_to_vmem [thread:$0]  %s221, 36864, %s223, [#allocation6], 384, 384, 24
        $region16: #{tpu_custom_call.1} parent=11 // pred_fallthru
          _
        // Predicated region
        $region17: #{tpu_custom_call.1} parent=11 // pred_check
          %p229 = pneg %p90
        $region18: #{tpu_custom_call.1} parent=11 // pred_check_branch
          %231 = sbr.rel (%p229) target = $region20
        $region19: #{tpu_custom_call.1} parent=11 // pred_region
          %233 = vsyncadd [#allocation6], 0
          %s235 = sshll.u32 %s2, 4
          %s236 = int_to_ptr.hbm [resolvable:$true] %s235
          %s237 = sshll.u32 [#allocation7], 4
          %s238 = int_to_ptr.vmem [resolvable:$true] %s237
          %240 = dma.hbm_to_vmem [thread:$0]  %s236, 96, %s238, [#allocation6]
        $region20: #{tpu_custom_call.1} parent=11 // pred_fallthru
          _
        // Predicated region
        $region21: #{tpu_custom_call.1} parent=11 // pred_check
          %p241 = pneg %p111
        $region22: #{tpu_custom_call.1} parent=11 // pred_check_branch
          %243 = sbr.rel (%p241) target = $region24
        $region23: #{tpu_custom_call.1} parent=11 // pred_region
          %245 = vsyncadd [#allocation9], 0
          %s246 = sshll.u32 %s3, 4
          %s247 = int_to_ptr.hbm [resolvable:$true] %s246
          %s248 = sshll.u32 [#allocation8], 4
          %s249 = int_to_ptr.vmem [resolvable:$true] %s248
          %254 = dma.hbm_to_vmem [thread:$0]  %s247, 36864, %s249, [#allocation9], 384, 384, 24
        $region24: #{tpu_custom_call.1} parent=11 // pred_fallthru
          _
        // Predicated region
        $region25: #{tpu_custom_call.1} parent=11 // pred_check
          %p255 = pneg %p132
        $region26: #{tpu_custom_call.1} parent=11 // pred_check_branch
          %257 = sbr.rel (%p255) target = $region28
        $region27: #{tpu_custom_call.1} parent=11 // pred_region
          %259 = vsyncadd [#allocation9], 0
          %s261 = sshll.u32 %s4, 4
          %s262 = int_to_ptr.hbm [resolvable:$true] %s261
          %s263 = sshll.u32 [#allocation10], 4
          %s264 = int_to_ptr.vmem [resolvable:$true] %s263
          %266 = dma.hbm_to_vmem [thread:$0]  %s262, 96, %s264, [#allocation9]
        $region28: #{tpu_custom_call.1} parent=11 // pred_fallthru
          _
        // Predicated region
        $region29: #{tpu_custom_call.1} parent=11 // pred_check
          %p267 = pneg %p153
        $region30: #{tpu_custom_call.1} parent=11 // pred_check_branch
          %269 = sbr.rel (%p267) target = $region32
        $region31: #{tpu_custom_call.1} parent=11 // pred_region
          %271 = vsyncadd [#allocation12], 0
          %s272 = sshll.u32 %s5, 4
          %s273 = int_to_ptr.hbm [resolvable:$true] %s272
          %s274 = sshll.u32 [#allocation11], 4
          %s275 = int_to_ptr.vmem [resolvable:$true] %s274
          %280 = dma.hbm_to_vmem [thread:$0]  %s273, 36864, %s275, [#allocation12], 384, 384, 24
        $region32: #{tpu_custom_call.1} parent=11 // pred_fallthru
          _
        // Predicated region
        $region33: #{tpu_custom_call.1} parent=11 // pred_check
          %p281 = pneg %p174
        $region34: #{tpu_custom_call.1} parent=11 // pred_check_branch
          %283 = sbr.rel (%p281) target = $region36
        $region35: #{tpu_custom_call.1} parent=11 // pred_region
          %285 = vsyncadd [#allocation12], 0
          %s287 = sshll.u32 %s6, 4
          %s288 = int_to_ptr.hbm [resolvable:$true] %s287
          %s289 = sshll.u32 [#allocation13], 4
          %s290 = int_to_ptr.vmem [resolvable:$true] %s289
          %292 = dma.hbm_to_vmem [thread:$0]  %s288, 96, %s290, [#allocation12]
        $region36: #{tpu_custom_call.1} parent=11 // pred_fallthru
          _
      $region12: #{tpu_custom_call.1} parent=5 // pred_fallthru
        _
      %p293 = scmp.lt.s32.totalorder %s22, 2
      // Predicated region
      $region37: #{tpu_custom_call.1} parent=5 // pred_check
        %p294 = pneg %p293
      $region38: #{tpu_custom_call.1} parent=5 // pred_check_branch
        %296 = sbr.rel (%p294) target = $region40
      $region39: #{tpu_custom_call.1} parent=5 // pred_region
        // Predicated region
        $region41: #{tpu_custom_call.1} parent=39 // pred_check
          %p297 = pneg %p42
        $region42: #{tpu_custom_call.1} parent=39 // pred_check_branch
          %299 = sbr.rel (%p297) target = $region44
        $region43: #{tpu_custom_call.1} parent=39 // pred_region
          %s300 = sand.u32 %s32, 1
          %s301 = scalar_lea.sflag [#allocation3], %s300
          %s302 = sand.u32 %s32, 1
          %s303 = smul.addr %s302, 48
          %s304 = scalar_lea.vmem [#allocation2], %s303
          %306 = vsyncadd %s301, 0
          %s307 = smul.addr %s22, 6
          %s308 = smul.addr %s307, 8
          %s309 = scalar_lea.hbm %s0, %s308
          %s311 = sshll.u32 %s309, 4
          %s312 = int_to_ptr.hbm [resolvable:$true] %s311
          %s313 = sshll.u32 %s304, 4
          %s314 = int_to_ptr.vmem [resolvable:$true] %s313
          %316 = dma.hbm_to_vmem [thread:$0]  %s312, 768, %s314, %s301
        $region44: #{tpu_custom_call.1} parent=39 // pred_fallthru
          _
      $region40: #{tpu_custom_call.1} parent=5 // pred_fallthru
        _
      %p317 = scmp.le.s32.totalorder 1, %s22
      %p318 = scmp.lt.s32.totalorder %s22, 3
      %p319 = pnand %p317, %p318
      %p320 = pneg %p319
      // Predicated region
      $region45: #{tpu_custom_call.1} parent=5 // pred_check
        _
      $region46: #{tpu_custom_call.1} parent=5 // pred_check_branch
        %322 = sbr.rel (%p319) target = $region48
      $region47: #{tpu_custom_call.1} parent=5 // pred_region
        %s323 = ssub.s32 %s22, 1
        %s324 = sand.u32 %s35, 1
        %s325 = scalar_lea.sflag [#allocation3], %s324
        %s326 = sand.u32 %s35, 1
        %s327 = smul.addr %s326, 48
        %s328 = scalar_lea.vmem [#allocation2], %s327
        // Predicated region
        $region49: #{tpu_custom_call.1} parent=47 // pred_check
          %p329 = pneg %p48
        $region50: #{tpu_custom_call.1} parent=47 // pred_check_branch
          %331 = sbr.rel (%p329) target = $region52
        $region51: #{tpu_custom_call.1} parent=47 // pred_region
          %333 = dma.done %s325, 768
        $region52: #{tpu_custom_call.1} parent=47 // pred_fallthru
          _
        // Predicated region
        $region53: #{tpu_custom_call.1} parent=47 // pred_check
          %p334 = pneg %p69
        $region54: #{tpu_custom_call.1} parent=47 // pred_check_branch
          %336 = sbr.rel (%p334) target = $region56
        $region55: #{tpu_custom_call.1} parent=47 // pred_region
          %338 = dma.done [#allocation6], 36864
        $region56: #{tpu_custom_call.1} parent=47 // pred_fallthru
          _
        // Predicated region
        $region57: #{tpu_custom_call.1} parent=47 // pred_check
          %p339 = pneg %p90
        $region58: #{tpu_custom_call.1} parent=47 // pred_check_branch
          %341 = sbr.rel (%p339) target = $region60
        $region59: #{tpu_custom_call.1} parent=47 // pred_region
          %343 = dma.done [#allocation6], 96
        $region60: #{tpu_custom_call.1} parent=47 // pred_fallthru
          _
        // Predicated region
        $region61: #{tpu_custom_call.1} parent=47 // pred_check
          %p344 = pneg %p111
        $region62: #{tpu_custom_call.1} parent=47 // pred_check_branch
          %346 = sbr.rel (%p344) target = $region64
        $region63: #{tpu_custom_call.1} parent=47 // pred_region
          %348 = dma.done [#allocation9], 36864
        $region64: #{tpu_custom_call.1} parent=47 // pred_fallthru
          _
        // Predicated region
        $region65: #{tpu_custom_call.1} parent=47 // pred_check
          %p349 = pneg %p132
        $region66: #{tpu_custom_call.1} parent=47 // pred_check_branch
          %351 = sbr.rel (%p349) target = $region68
        $region67: #{tpu_custom_call.1} parent=47 // pred_region
          %353 = dma.done [#allocation9], 96
        $region68: #{tpu_custom_call.1} parent=47 // pred_fallthru
          _
        // Predicated region
        $region69: #{tpu_custom_call.1} parent=47 // pred_check
          %p354 = pneg %p153
        $region70: #{tpu_custom_call.1} parent=47 // pred_check_branch
          %356 = sbr.rel (%p354) target = $region72
        $region71: #{tpu_custom_call.1} parent=47 // pred_region
          %358 = dma.done [#allocation12], 36864
        $region72: #{tpu_custom_call.1} parent=47 // pred_fallthru
          _
        // Predicated region
        $region73: #{tpu_custom_call.1} parent=47 // pred_check
          %p359 = pneg %p174
        $region74: #{tpu_custom_call.1} parent=47 // pred_check_branch
          %361 = sbr.rel (%p359) target = $region76
        $region75: #{tpu_custom_call.1} parent=47 // pred_region
          %363 = dma.done [#allocation12], 96
        $region76: #{tpu_custom_call.1} parent=47 // pred_fallthru
          _
        %s364 = sand.u32 %s35, 1
        %s365 = scalar_lea.sflag [#allocation3], %s364
        %s366 = sand.u32 %s35, 1
        %s367 = smul.addr %s366, 48
        %s368 = scalar_lea.vmem [#allocation2], %s367
        %p369 = pneg %p48
        %p370 = pneg %p45
        %p371 = pneg %p69
        %p372 = pneg %p66
        %p373 = pneg %p90
        %p374 = pneg %p87
        %p375 = pneg %p111
        %p376 = pneg %p108
        %p377 = pneg %p132
        %p378 = pneg %p129
        %p379 = pneg %p153
        %p380 = pneg %p150
        %p381 = pneg %p174
        %p382 = pneg %p171
        %p383 = pneg %p200
        %p384 = pneg %p197
        %s385 = sand.u32 %s187, 1
        %s386 = scalar_lea.sflag [#allocation4], %s385
        %s387 = sand.u32 %s187, 1
        %s388 = smul.addr %s387, 6
        %s389 = scalar_lea.vmem [#allocation14], %s388
        %v390 = vld [vmem:[%s328] sm:$0xff]
        %v391 = vld [vmem:[%s328 + $0x8] sm:$0xff]
        %v392 = vld [vmem:[%s328 + $0x10] sm:$0xff]
        %v393 = vld [vmem:[%s328 + $0x18] sm:$0xff]
        %v394 = vld [vmem:[%s328 + $0x20] sm:$0xff]
        %v395 = vld [vmem:[%s328 + $0x28] sm:$0xff]
        %v396 = vpack.c.bf16 %v390, %v390
        %v397 = vpack.c.bf16 %v391, %v391
        %v398 = vpack.c.bf16 %v392, %v392
        %v399 = vpack.c.bf16 %v393, %v393
        %v400 = vpack.c.bf16 %v394, %v394
        %v401 = vpack.c.bf16 %v395, %v395
        %v402 = vld [vmem:[#allocation5] sm:$0xff]
        %v403 = vld [vmem:[#allocation5 + $0x8] sm:$0xff]
        %v404 = vld [vmem:[#allocation5 + $0x10] sm:$0xff]
        %v405 = vld [vmem:[#allocation5 + $0x18] sm:$0xff]
        %v406 = vld [vmem:[#allocation5 + $0x20] sm:$0xff]
        %v407 = vld [vmem:[#allocation5 + $0x28] sm:$0xff]
        %v408 = vld [vmem:[#allocation5 + $0x30] sm:$0xff]
        %v409 = vld [vmem:[#allocation5 + $0x38] sm:$0xff]
        %v410 = vld [vmem:[#allocation5 + $0x40] sm:$0xff]
        %v411 = vld [vmem:[#allocation5 + $0x48] sm:$0xff]
        %v412 = vld [vmem:[#allocation5 + $0x50] sm:$0xff]
        %v413 = vld [vmem:[#allocation5 + $0x58] sm:$0xff]
        %v414 = vld [vmem:[#allocation5 + $0x60] sm:$0xff]
        %v415 = vld [vmem:[#allocation5 + $0x68] sm:$0xff]
        %v416 = vld [vmem:[#allocation5 + $0x70] sm:$0xff]
        %v417 = vld [vmem:[#allocation5 + $0x78] sm:$0xff]
        %v418 = vld [vmem:[#allocation5 + $0x80] sm:$0xff]
        %v419 = vld [vmem:[#allocation5 + $0x88] sm:$0xff]
        %v420 = vld [vmem:[#allocation5 + $0x90] sm:$0xff]
        %v421 = vld [vmem:[#allocation5 + $0x98] sm:$0xff]
        %v422 = vld [vmem:[#allocation5 + $0xa0] sm:$0xff]
        %v423 = vld [vmem:[#allocation5 + $0xa8] sm:$0xff]
        %v424 = vld [vmem:[#allocation5 + $0xb0] sm:$0xff]
        %v425 = vld [vmem:[#allocation5 + $0xb8] sm:$0xff]
        %v426 = vld [vmem:[#allocation5 + $0xc0] sm:$0xff]
        %v427 = vld [vmem:[#allocation5 + $0xc8] sm:$0xff]
        %v428 = vld [vmem:[#allocation5 + $0xd0] sm:$0xff]
        %v429 = vld [vmem:[#allocation5 + $0xd8] sm:$0xff]
        %v430 = vld [vmem:[#allocation5 + $0xe0] sm:$0xff]
        %v431 = vld [vmem:[#allocation5 + $0xe8] sm:$0xff]
        %v432 = vld [vmem:[#allocation5 + $0xf0] sm:$0xff]
        %v433 = vld [vmem:[#allocation5 + $0xf8] sm:$0xff]
        %v434 = vld [vmem:[#allocation5 + $0x100] sm:$0xff]
        %v435 = vld [vmem:[#allocation5 + $0x108] sm:$0xff]
        %v436 = vld [vmem:[#allocation5 + $0x110] sm:$0xff]
        %v437 = vld [vmem:[#allocation5 + $0x118] sm:$0xff]
        %v438 = vld [vmem:[#allocation5 + $0x120] sm:$0xff]
        %v439 = vld [vmem:[#allocation5 + $0x128] sm:$0xff]
        %v440 = vld [vmem:[#allocation5 + $0x130] sm:$0xff]
        %v441 = vld [vmem:[#allocation5 + $0x138] sm:$0xff]
        %v442 = vld [vmem:[#allocation5 + $0x140] sm:$0xff]
        %v443 = vld [vmem:[#allocation5 + $0x148] sm:$0xff]
        %v444 = vld [vmem:[#allocation5 + $0x150] sm:$0xff]
        %v445 = vld [vmem:[#allocation5 + $0x158] sm:$0xff]
        %v446 = vld [vmem:[#allocation5 + $0x160] sm:$0xff]
        %v447 = vld [vmem:[#allocation5 + $0x168] sm:$0xff]
        %v448 = vld [vmem:[#allocation5 + $0x170] sm:$0xff]
        %v449 = vld [vmem:[#allocation5 + $0x178] sm:$0xff]
        %v450 = vld [vmem:[#allocation5 + $0x180] sm:$0xff]
        %v451 = vld [vmem:[#allocation5 + $0x188] sm:$0xff]
        %v452 = vld [vmem:[#allocation5 + $0x190] sm:$0xff]
        %v453 = vld [vmem:[#allocation5 + $0x198] sm:$0xff]
        %v454 = vld [vmem:[#allocation5 + $0x1a0] sm:$0xff]
        %v455 = vld [vmem:[#allocation5 + $0x1a8] sm:$0xff]
        %v456 = vld [vmem:[#allocation5 + $0x1b0] sm:$0xff]
        %v457 = vld [vmem:[#allocation5 + $0x1b8] sm:$0xff]
        %v458 = vld [vmem:[#allocation5 + $0x1c0] sm:$0xff]
        %v459 = vld [vmem:[#allocation5 + $0x1c8] sm:$0xff]
        %v460 = vld [vmem:[#allocation5 + $0x1d0] sm:$0xff]
        %v461 = vld [vmem:[#allocation5 + $0x1d8] sm:$0xff]
        %v462 = vld [vmem:[#allocation5 + $0x1e0] sm:$0xff]
        %v463 = vld [vmem:[#allocation5 + $0x1e8] sm:$0xff]
        %v464 = vld [vmem:[#allocation5 + $0x1f0] sm:$0xff]
        %v465 = vld [vmem:[#allocation5 + $0x1f8] sm:$0xff]
        %v466 = vld [vmem:[#allocation5 + $0x200] sm:$0xff]
        %v467 = vld [vmem:[#allocation5 + $0x208] sm:$0xff]
        %v468 = vld [vmem:[#allocation5 + $0x210] sm:$0xff]
        %v469 = vld [vmem:[#allocation5 + $0x218] sm:$0xff]
        %v470 = vld [vmem:[#allocation5 + $0x220] sm:$0xff]
        %v471 = vld [vmem:[#allocation5 + $0x228] sm:$0xff]
        %v472 = vld [vmem:[#allocation5 + $0x230] sm:$0xff]
        %v473 = vld [vmem:[#allocation5 + $0x238] sm:$0xff]
        %v474 = vld [vmem:[#allocation5 + $0x240] sm:$0xff]
        %v475 = vld [vmem:[#allocation5 + $0x248] sm:$0xff]
        %v476 = vld [vmem:[#allocation5 + $0x250] sm:$0xff]
        %v477 = vld [vmem:[#allocation5 + $0x258] sm:$0xff]
        %v478 = vld [vmem:[#allocation5 + $0x260] sm:$0xff]
        %v479 = vld [vmem:[#allocation5 + $0x268] sm:$0xff]
        %v480 = vld [vmem:[#allocation5 + $0x270] sm:$0xff]
        %v481 = vld [vmem:[#allocation5 + $0x278] sm:$0xff]
        %v482 = vld [vmem:[#allocation5 + $0x280] sm:$0xff]
        %v483 = vld [vmem:[#allocation5 + $0x288] sm:$0xff]
        %v484 = vld [vmem:[#allocation5 + $0x290] sm:$0xff]
        %v485 = vld [vmem:[#allocation5 + $0x298] sm:$0xff]
        %v486 = vld [vmem:[#allocation5 + $0x2a0] sm:$0xff]
        %v487 = vld [vmem:[#allocation5 + $0x2a8] sm:$0xff]
        %v488 = vld [vmem:[#allocation5 + $0x2b0] sm:$0xff]
        %v489 = vld [vmem:[#allocation5 + $0x2b8] sm:$0xff]
        %v490 = vld [vmem:[#allocation5 + $0x2c0] sm:$0xff]
        %v491 = vld [vmem:[#allocation5 + $0x2c8] sm:$0xff]
        %v492 = vld [vmem:[#allocation5 + $0x2d0] sm:$0xff]
        %v493 = vld [vmem:[#allocation5 + $0x2d8] sm:$0xff]
        %v494 = vld [vmem:[#allocation5 + $0x2e0] sm:$0xff]
        %v495 = vld [vmem:[#allocation5 + $0x2e8] sm:$0xff]
        %v496 = vld [vmem:[#allocation5 + $0x2f0] sm:$0xff]
        %v497 = vld [vmem:[#allocation5 + $0x2f8] sm:$0xff]
        %v498 = vld [vmem:[#allocation5 + $0x300] sm:$0xff]
        %v499 = vld [vmem:[#allocation5 + $0x308] sm:$0xff]
        %v500 = vld [vmem:[#allocation5 + $0x310] sm:$0xff]
        %v501 = vld [vmem:[#allocation5 + $0x318] sm:$0xff]
        %v502 = vld [vmem:[#allocation5 + $0x320] sm:$0xff]
        %v503 = vld [vmem:[#allocation5 + $0x328] sm:$0xff]
        %v504 = vld [vmem:[#allocation5 + $0x330] sm:$0xff]
        %v505 = vld [vmem:[#allocation5 + $0x338] sm:$0xff]
        %v506 = vld [vmem:[#allocation5 + $0x340] sm:$0xff]
        %v507 = vld [vmem:[#allocation5 + $0x348] sm:$0xff]
        %v508 = vld [vmem:[#allocation5 + $0x350] sm:$0xff]
        %v509 = vld [vmem:[#allocation5 + $0x358] sm:$0xff]
        %v510 = vld [vmem:[#allocation5 + $0x360] sm:$0xff]
        %v511 = vld [vmem:[#allocation5 + $0x368] sm:$0xff]
        %v512 = vld [vmem:[#allocation5 + $0x370] sm:$0xff]
        %v513 = vld [vmem:[#allocation5 + $0x378] sm:$0xff]
        %v514 = vld [vmem:[#allocation5 + $0x380] sm:$0xff]
        %v515 = vld [vmem:[#allocation5 + $0x388] sm:$0xff]
        %v516 = vld [vmem:[#allocation5 + $0x390] sm:$0xff]
        %v517 = vld [vmem:[#allocation5 + $0x398] sm:$0xff]
        %v518 = vld [vmem:[#allocation5 + $0x3a0] sm:$0xff]
        %v519 = vld [vmem:[#allocation5 + $0x3a8] sm:$0xff]
        %v520 = vld [vmem:[#allocation5 + $0x3b0] sm:$0xff]
        %v521 = vld [vmem:[#allocation5 + $0x3b8] sm:$0xff]
        %v522 = vld [vmem:[#allocation5 + $0x3c0] sm:$0xff]
        %v523 = vld [vmem:[#allocation5 + $0x3c8] sm:$0xff]
        %v524 = vld [vmem:[#allocation5 + $0x3d0] sm:$0xff]
        %v525 = vld [vmem:[#allocation5 + $0x3d8] sm:$0xff]
        %v526 = vld [vmem:[#allocation5 + $0x3e0] sm:$0xff]
        %v527 = vld [vmem:[#allocation5 + $0x3e8] sm:$0xff]
        %v528 = vld [vmem:[#allocation5 + $0x3f0] sm:$0xff]
        %v529 = vld [vmem:[#allocation5 + $0x3f8] sm:$0xff]
        %v530 = vld [vmem:[#allocation5 + $0x400] sm:$0xff]
        %v531 = vld [vmem:[#allocation5 + $0x408] sm:$0xff]
        %v532 = vld [vmem:[#allocation5 + $0x410] sm:$0xff]
        %v533 = vld [vmem:[#allocation5 + $0x418] sm:$0xff]
        %v534 = vld [vmem:[#allocation5 + $0x420] sm:$0xff]
        %v535 = vld [vmem:[#allocation5 + $0x428] sm:$0xff]
        %v536 = vld [vmem:[#allocation5 + $0x430] sm:$0xff]
        %v537 = vld [vmem:[#allocation5 + $0x438] sm:$0xff]
        %v538 = vld [vmem:[#allocation5 + $0x440] sm:$0xff]
        %v539 = vld [vmem:[#allocation5 + $0x448] sm:$0xff]
        %v540 = vld [vmem:[#allocation5 + $0x450] sm:$0xff]
        %v541 = vld [vmem:[#allocation5 + $0x458] sm:$0xff]
        %v542 = vld [vmem:[#allocation5 + $0x460] sm:$0xff]
        %v543 = vld [vmem:[#allocation5 + $0x468] sm:$0xff]
        %v544 = vld [vmem:[#allocation5 + $0x470] sm:$0xff]
        %v545 = vld [vmem:[#allocation5 + $0x478] sm:$0xff]
        %v546 = vld [vmem:[#allocation5 + $0x480] sm:$0xff]
        %v547 = vld [vmem:[#allocation5 + $0x488] sm:$0xff]
        %v548 = vld [vmem:[#allocation5 + $0x490] sm:$0xff]
        %v549 = vld [vmem:[#allocation5 + $0x498] sm:$0xff]
        %v550 = vld [vmem:[#allocation5 + $0x4a0] sm:$0xff]
        %v551 = vld [vmem:[#allocation5 + $0x4a8] sm:$0xff]
        %v552 = vld [vmem:[#allocation5 + $0x4b0] sm:$0xff]
        %v553 = vld [vmem:[#allocation5 + $0x4b8] sm:$0xff]
        %v554 = vld [vmem:[#allocation5 + $0x4c0] sm:$0xff]
        %v555 = vld [vmem:[#allocation5 + $0x4c8] sm:$0xff]
        %v556 = vld [vmem:[#allocation5 + $0x4d0] sm:$0xff]
        %v557 = vld [vmem:[#allocation5 + $0x4d8] sm:$0xff]
        %v558 = vld [vmem:[#allocation5 + $0x4e0] sm:$0xff]
        %v559 = vld [vmem:[#allocation5 + $0x4e8] sm:$0xff]
        %v560 = vld [vmem:[#allocation5 + $0x4f0] sm:$0xff]
        %v561 = vld [vmem:[#allocation5 + $0x4f8] sm:$0xff]
        %v562 = vld [vmem:[#allocation5 + $0x500] sm:$0xff]
        %v563 = vld [vmem:[#allocation5 + $0x508] sm:$0xff]
        %v564 = vld [vmem:[#allocation5 + $0x510] sm:$0xff]
        %v565 = vld [vmem:[#allocation5 + $0x518] sm:$0xff]
        %v566 = vld [vmem:[#allocation5 + $0x520] sm:$0xff]
        %v567 = vld [vmem:[#allocation5 + $0x528] sm:$0xff]
        %v568 = vld [vmem:[#allocation5 + $0x530] sm:$0xff]
        %v569 = vld [vmem:[#allocation5 + $0x538] sm:$0xff]
        %v570 = vld [vmem:[#allocation5 + $0x540] sm:$0xff]
        %v571 = vld [vmem:[#allocation5 + $0x548] sm:$0xff]
        %v572 = vld [vmem:[#allocation5 + $0x550] sm:$0xff]
        %v573 = vld [vmem:[#allocation5 + $0x558] sm:$0xff]
        %v574 = vld [vmem:[#allocation5 + $0x560] sm:$0xff]
        %v575 = vld [vmem:[#allocation5 + $0x568] sm:$0xff]
        %v576 = vld [vmem:[#allocation5 + $0x570] sm:$0xff]
        %v577 = vld [vmem:[#allocation5 + $0x578] sm:$0xff]
        %v578 = vld [vmem:[#allocation5 + $0x580] sm:$0xff]
        %v579 = vld [vmem:[#allocation5 + $0x588] sm:$0xff]
        %v580 = vld [vmem:[#allocation5 + $0x590] sm:$0xff]
        %v581 = vld [vmem:[#allocation5 + $0x598] sm:$0xff]
        %v582 = vld [vmem:[#allocation5 + $0x5a0] sm:$0xff]
        %v583 = vld [vmem:[#allocation5 + $0x5a8] sm:$0xff]
        %v584 = vld [vmem:[#allocation5 + $0x5b0] sm:$0xff]
        %v585 = vld [vmem:[#allocation5 + $0x5b8] sm:$0xff]
        %v586 = vld [vmem:[#allocation5 + $0x5c0] sm:$0xff]
        %v587 = vld [vmem:[#allocation5 + $0x5c8] sm:$0xff]
        %v588 = vld [vmem:[#allocation5 + $0x5d0] sm:$0xff]
        %v589 = vld [vmem:[#allocation5 + $0x5d8] sm:$0xff]
        %v590 = vld [vmem:[#allocation5 + $0x5e0] sm:$0xff]
        %v591 = vld [vmem:[#allocation5 + $0x5e8] sm:$0xff]
        %v592 = vld [vmem:[#allocation5 + $0x5f0] sm:$0xff]
        %v593 = vld [vmem:[#allocation5 + $0x5f8] sm:$0xff]
        %v594 = vld [vmem:[#allocation5 + $0x600] sm:$0xff]
        %v595 = vld [vmem:[#allocation5 + $0x608] sm:$0xff]
        %v596 = vld [vmem:[#allocation5 + $0x610] sm:$0xff]
        %v597 = vld [vmem:[#allocation5 + $0x618] sm:$0xff]
        %v598 = vld [vmem:[#allocation5 + $0x620] sm:$0xff]
        %v599 = vld [vmem:[#allocation5 + $0x628] sm:$0xff]
        %v600 = vld [vmem:[#allocation5 + $0x630] sm:$0xff]
        %v601 = vld [vmem:[#allocation5 + $0x638] sm:$0xff]
        %v602 = vld [vmem:[#allocation5 + $0x640] sm:$0xff]
        %v603 = vld [vmem:[#allocation5 + $0x648] sm:$0xff]
        %v604 = vld [vmem:[#allocation5 + $0x650] sm:$0xff]
        %v605 = vld [vmem:[#allocation5 + $0x658] sm:$0xff]
        %v606 = vld [vmem:[#allocation5 + $0x660] sm:$0xff]
        %v607 = vld [vmem:[#allocation5 + $0x668] sm:$0xff]
        %v608 = vld [vmem:[#allocation5 + $0x670] sm:$0xff]
        %v609 = vld [vmem:[#allocation5 + $0x678] sm:$0xff]
        %v610 = vld [vmem:[#allocation5 + $0x680] sm:$0xff]
        %v611 = vld [vmem:[#allocation5 + $0x688] sm:$0xff]
        %v612 = vld [vmem:[#allocation5 + $0x690] sm:$0xff]
        %v613 = vld [vmem:[#allocation5 + $0x698] sm:$0xff]
        %v614 = vld [vmem:[#allocation5 + $0x6a0] sm:$0xff]
        %v615 = vld [vmem:[#allocation5 + $0x6a8] sm:$0xff]
        %v616 = vld [vmem:[#allocation5 + $0x6b0] sm:$0xff]
        %v617 = vld [vmem:[#allocation5 + $0x6b8] sm:$0xff]
        %v618 = vld [vmem:[#allocation5 + $0x6c0] sm:$0xff]
        %v619 = vld [vmem:[#allocation5 + $0x6c8] sm:$0xff]
        %v620 = vld [vmem:[#allocation5 + $0x6d0] sm:$0xff]
        %v621 = vld [vmem:[#allocation5 + $0x6d8] sm:$0xff]
        %v622 = vld [vmem:[#allocation5 + $0x6e0] sm:$0xff]
        %v623 = vld [vmem:[#allocation5 + $0x6e8] sm:$0xff]
        %v624 = vld [vmem:[#allocation5 + $0x6f0] sm:$0xff]
        %v625 = vld [vmem:[#allocation5 + $0x6f8] sm:$0xff]
        %v626 = vld [vmem:[#allocation5 + $0x700] sm:$0xff]
        %v627 = vld [vmem:[#allocation5 + $0x708] sm:$0xff]
        %v628 = vld [vmem:[#allocation5 + $0x710] sm:$0xff]
        %v629 = vld [vmem:[#allocation5 + $0x718] sm:$0xff]
        %v630 = vld [vmem:[#allocation5 + $0x720] sm:$0xff]
        %v631 = vld [vmem:[#allocation5 + $0x728] sm:$0xff]
        %v632 = vld [vmem:[#allocation5 + $0x730] sm:$0xff]
        %v633 = vld [vmem:[#allocation5 + $0x738] sm:$0xff]
        %v634 = vld [vmem:[#allocation5 + $0x740] sm:$0xff]
        %v635 = vld [vmem:[#allocation5 + $0x748] sm:$0xff]
        %v636 = vld [vmem:[#allocation5 + $0x750] sm:$0xff]
        %v637 = vld [vmem:[#allocation5 + $0x758] sm:$0xff]
        %v638 = vld [vmem:[#allocation5 + $0x760] sm:$0xff]
        %v639 = vld [vmem:[#allocation5 + $0x768] sm:$0xff]
        %v640 = vld [vmem:[#allocation5 + $0x770] sm:$0xff]
        %v641 = vld [vmem:[#allocation5 + $0x778] sm:$0xff]
        %v642 = vld [vmem:[#allocation5 + $0x780] sm:$0xff]
        %v643 = vld [vmem:[#allocation5 + $0x788] sm:$0xff]
        %v644 = vld [vmem:[#allocation5 + $0x790] sm:$0xff]
        %v645 = vld [vmem:[#allocation5 + $0x798] sm:$0xff]
        %v646 = vld [vmem:[#allocation5 + $0x7a0] sm:$0xff]
        %v647 = vld [vmem:[#allocation5 + $0x7a8] sm:$0xff]
        %v648 = vld [vmem:[#allocation5 + $0x7b0] sm:$0xff]
        %v649 = vld [vmem:[#allocation5 + $0x7b8] sm:$0xff]
        %v650 = vld [vmem:[#allocation5 + $0x7c0] sm:$0xff]
        %v651 = vld [vmem:[#allocation5 + $0x7c8] sm:$0xff]
        %v652 = vld [vmem:[#allocation5 + $0x7d0] sm:$0xff]
        %v653 = vld [vmem:[#allocation5 + $0x7d8] sm:$0xff]
        %v654 = vld [vmem:[#allocation5 + $0x7e0] sm:$0xff]
        %v655 = vld [vmem:[#allocation5 + $0x7e8] sm:$0xff]
        %v656 = vld [vmem:[#allocation5 + $0x7f0] sm:$0xff]
        %v657 = vld [vmem:[#allocation5 + $0x7f8] sm:$0xff]
        %v658 = vld [vmem:[#allocation5 + $0x800] sm:$0xff]
        %v659 = vld [vmem:[#allocation5 + $0x808] sm:$0xff]
        %v660 = vld [vmem:[#allocation5 + $0x810] sm:$0xff]
        %v661 = vld [vmem:[#allocation5 + $0x818] sm:$0xff]
        %v662 = vld [vmem:[#allocation5 + $0x820] sm:$0xff]
        %v663 = vld [vmem:[#allocation5 + $0x828] sm:$0xff]
        %v664 = vld [vmem:[#allocation5 + $0x830] sm:$0xff]
        %v665 = vld [vmem:[#allocation5 + $0x838] sm:$0xff]
        %v666 = vld [vmem:[#allocation5 + $0x840] sm:$0xff]
        %v667 = vld [vmem:[#allocation5 + $0x848] sm:$0xff]
        %v668 = vld [vmem:[#allocation5 + $0x850] sm:$0xff]
        %v669 = vld [vmem:[#allocation5 + $0x858] sm:$0xff]
        %v670 = vld [vmem:[#allocation5 + $0x860] sm:$0xff]
        %v671 = vld [vmem:[#allocation5 + $0x868] sm:$0xff]
        %v672 = vld [vmem:[#allocation5 + $0x870] sm:$0xff]
        %v673 = vld [vmem:[#allocation5 + $0x878] sm:$0xff]
        %v674 = vld [vmem:[#allocation5 + $0x880] sm:$0xff]
        %v675 = vld [vmem:[#allocation5 + $0x888] sm:$0xff]
        %v676 = vld [vmem:[#allocation5 + $0x890] sm:$0xff]
        %v677 = vld [vmem:[#allocation5 + $0x898] sm:$0xff]
        %v678 = vld [vmem:[#allocation5 + $0x8a0] sm:$0xff]
        %v679 = vld [vmem:[#allocation5 + $0x8a8] sm:$0xff]
        %v680 = vld [vmem:[#allocation5 + $0x8b0] sm:$0xff]
        %v681 = vld [vmem:[#allocation5 + $0x8b8] sm:$0xff]
        %v682 = vld [vmem:[#allocation5 + $0x8c0] sm:$0xff]
        %v683 = vld [vmem:[#allocation5 + $0x8c8] sm:$0xff]
        %v684 = vld [vmem:[#allocation5 + $0x8d0] sm:$0xff]
        %v685 = vld [vmem:[#allocation5 + $0x8d8] sm:$0xff]
        %v686 = vld [vmem:[#allocation5 + $0x8e0] sm:$0xff]
        %v687 = vld [vmem:[#allocation5 + $0x8e8] sm:$0xff]
        %v688 = vld [vmem:[#allocation5 + $0x8f0] sm:$0xff]
        %v689 = vld [vmem:[#allocation5 + $0x8f8] sm:$0xff]
        %v690 = vld [vmem:[#allocation7] sm:$0x3f]
        %v692 = vperm.slane %v690, 0
        %v693 = vperm.slane %v690, 1
        %v694 = vperm.slane %v690, 2
        %v695 = vperm.slane %v690, 3
        %v696 = vperm.slane %v690, 4
        %v697 = vperm.slane %v690, 5
        %v992 = vunpack.c.l.b16 %v402
        %v993 = vunpack.c.h.b16 %v402
        %v994 = vunpack.c.l.b16 %v403
        %v995 = vunpack.c.h.b16 %v403
        %v996 = vunpack.c.l.b16 %v404
        %v997 = vunpack.c.h.b16 %v404
        %v998 = vunpack.c.l.b16 %v405
        %v999 = vunpack.c.h.b16 %v405
        %v1000 = vunpack.c.l.b16 %v406
        %v1001 = vunpack.c.h.b16 %v406
        %v1002 = vunpack.c.l.b16 %v407
        %v1003 = vunpack.c.h.b16 %v407
        %v1004 = vunpack.c.l.b16 %v408
        %v1005 = vunpack.c.h.b16 %v408
        %v1006 = vunpack.c.l.b16 %v409
        %v1007 = vunpack.c.h.b16 %v409
        %v1008 = vunpack.c.l.b16 %v410
        %v1009 = vunpack.c.h.b16 %v410
        %v1010 = vunpack.c.l.b16 %v411
        %v1011 = vunpack.c.h.b16 %v411
        %v1012 = vunpack.c.l.b16 %v412
        %v1013 = vunpack.c.h.b16 %v412
        %v1014 = vunpack.c.l.b16 %v413
        %v1015 = vunpack.c.h.b16 %v413
        %v1016 = vunpack.c.l.b16 %v414
        %v1017 = vunpack.c.h.b16 %v414
        %v1018 = vunpack.c.l.b16 %v415
        %v1019 = vunpack.c.h.b16 %v415
        %v1020 = vunpack.c.l.b16 %v416
        %v1021 = vunpack.c.h.b16 %v416
        %v1022 = vunpack.c.l.b16 %v417
        %v1023 = vunpack.c.h.b16 %v417
        %v1024 = vunpack.c.l.b16 %v418
        %v1025 = vunpack.c.h.b16 %v418
        %v1026 = vunpack.c.l.b16 %v419
        %v1027 = vunpack.c.h.b16 %v419
        %v1028 = vunpack.c.l.b16 %v420
        %v1029 = vunpack.c.h.b16 %v420
        %v1030 = vunpack.c.l.b16 %v421
        %v1031 = vunpack.c.h.b16 %v421
        %v1032 = vunpack.c.l.b16 %v422
        %v1033 = vunpack.c.h.b16 %v422
        %v1034 = vunpack.c.l.b16 %v423
        %v1035 = vunpack.c.h.b16 %v423
        %v1036 = vunpack.c.l.b16 %v424
        %v1037 = vunpack.c.h.b16 %v424
        %v1038 = vunpack.c.l.b16 %v425
        %v1039 = vunpack.c.h.b16 %v425
        %v1040 = vunpack.c.l.b16 %v426
        %v1041 = vunpack.c.h.b16 %v426
        %v1042 = vunpack.c.l.b16 %v427
        %v1043 = vunpack.c.h.b16 %v427
        %v1044 = vunpack.c.l.b16 %v428
        %v1045 = vunpack.c.h.b16 %v428
        %v1046 = vunpack.c.l.b16 %v429
        %v1047 = vunpack.c.h.b16 %v429
        %v1048 = vunpack.c.l.b16 %v430
        %v1049 = vunpack.c.h.b16 %v430
        %v1050 = vunpack.c.l.b16 %v431
        %v1051 = vunpack.c.h.b16 %v431
        %v1052 = vunpack.c.l.b16 %v432
        %v1053 = vunpack.c.h.b16 %v432
        %v1054 = vunpack.c.l.b16 %v433
        %v1055 = vunpack.c.h.b16 %v433
        %v1056 = vunpack.c.l.b16 %v434
        %v1057 = vunpack.c.h.b16 %v434
        %v1058 = vunpack.c.l.b16 %v435
        %v1059 = vunpack.c.h.b16 %v435
        %v1060 = vunpack.c.l.b16 %v436
        %v1061 = vunpack.c.h.b16 %v436
        %v1062 = vunpack.c.l.b16 %v437
        %v1063 = vunpack.c.h.b16 %v437
        %v1064 = vunpack.c.l.b16 %v438
        %v1065 = vunpack.c.h.b16 %v438
        %v1066 = vunpack.c.l.b16 %v439
        %v1067 = vunpack.c.h.b16 %v439
        %v1068 = vunpack.c.l.b16 %v440
        %v1069 = vunpack.c.h.b16 %v440
        %v1070 = vunpack.c.l.b16 %v441
        %v1071 = vunpack.c.h.b16 %v441
        %v1072 = vunpack.c.l.b16 %v442
        %v1073 = vunpack.c.h.b16 %v442
        %v1074 = vunpack.c.l.b16 %v443
        %v1075 = vunpack.c.h.b16 %v443
        %v1076 = vunpack.c.l.b16 %v444
        %v1077 = vunpack.c.h.b16 %v444
        %v1078 = vunpack.c.l.b16 %v445
        %v1079 = vunpack.c.h.b16 %v445
        %v1080 = vunpack.c.l.b16 %v446
        %v1081 = vunpack.c.h.b16 %v446
        %v1082 = vunpack.c.l.b16 %v447
        %v1083 = vunpack.c.h.b16 %v447
        %v1084 = vunpack.c.l.b16 %v448
        %v1085 = vunpack.c.h.b16 %v448
        %v1086 = vunpack.c.l.b16 %v449
        %v1087 = vunpack.c.h.b16 %v449
        %v1088 = vunpack.c.l.b16 %v450
        %v1089 = vunpack.c.h.b16 %v450
        %v1090 = vunpack.c.l.b16 %v451
        %v1091 = vunpack.c.h.b16 %v451
        %v1092 = vunpack.c.l.b16 %v452
        %v1093 = vunpack.c.h.b16 %v452
        %v1094 = vunpack.c.l.b16 %v453
        %v1095 = vunpack.c.h.b16 %v453
        %v1096 = vunpack.c.l.b16 %v454
        %v1097 = vunpack.c.h.b16 %v454
        %v1098 = vunpack.c.l.b16 %v455
        %v1099 = vunpack.c.h.b16 %v455
        %v1100 = vunpack.c.l.b16 %v456
        %v1101 = vunpack.c.h.b16 %v456
        %v1102 = vunpack.c.l.b16 %v457
        %v1103 = vunpack.c.h.b16 %v457
        %v1104 = vunpack.c.l.b16 %v458
        %v1105 = vunpack.c.h.b16 %v458
        %v1106 = vunpack.c.l.b16 %v459
        %v1107 = vunpack.c.h.b16 %v459
        %v1108 = vunpack.c.l.b16 %v460
        %v1109 = vunpack.c.h.b16 %v460
        %v1110 = vunpack.c.l.b16 %v461
        %v1111 = vunpack.c.h.b16 %v461
        %v1112 = vunpack.c.l.b16 %v462
        %v1113 = vunpack.c.h.b16 %v462
        %v1114 = vunpack.c.l.b16 %v463
        %v1115 = vunpack.c.h.b16 %v463
        %v1116 = vunpack.c.l.b16 %v464
        %v1117 = vunpack.c.h.b16 %v464
        %v1118 = vunpack.c.l.b16 %v465
        %v1119 = vunpack.c.h.b16 %v465
        %v1120 = vunpack.c.l.b16 %v466
        %v1121 = vunpack.c.h.b16 %v466
        %v1122 = vunpack.c.l.b16 %v467
        %v1123 = vunpack.c.h.b16 %v467
        %v1124 = vunpack.c.l.b16 %v468
        %v1125 = vunpack.c.h.b16 %v468
        %v1126 = vunpack.c.l.b16 %v469
        %v1127 = vunpack.c.h.b16 %v469
        %v1128 = vunpack.c.l.b16 %v470
        %v1129 = vunpack.c.h.b16 %v470
        %v1130 = vunpack.c.l.b16 %v471
        %v1131 = vunpack.c.h.b16 %v471
        %v1132 = vunpack.c.l.b16 %v472
        %v1133 = vunpack.c.h.b16 %v472
        %v1134 = vunpack.c.l.b16 %v473
        %v1135 = vunpack.c.h.b16 %v473
        %v1136 = vunpack.c.l.b16 %v474
        %v1137 = vunpack.c.h.b16 %v474
        %v1138 = vunpack.c.l.b16 %v475
        %v1139 = vunpack.c.h.b16 %v475
        %v1140 = vunpack.c.l.b16 %v476
        %v1141 = vunpack.c.h.b16 %v476
        %v1142 = vunpack.c.l.b16 %v477
        %v1143 = vunpack.c.h.b16 %v477
        %v1144 = vunpack.c.l.b16 %v478
        %v1145 = vunpack.c.h.b16 %v478
        %v1146 = vunpack.c.l.b16 %v479
        %v1147 = vunpack.c.h.b16 %v479
        %v1148 = vunpack.c.l.b16 %v480
        %v1149 = vunpack.c.h.b16 %v480
        %v1150 = vunpack.c.l.b16 %v481
        %v1151 = vunpack.c.h.b16 %v481
        %v1152 = vunpack.c.l.b16 %v482
        %v1153 = vunpack.c.h.b16 %v482
        %v1154 = vunpack.c.l.b16 %v483
        %v1155 = vunpack.c.h.b16 %v483
        %v1156 = vunpack.c.l.b16 %v484
        %v1157 = vunpack.c.h.b16 %v484
        %v1158 = vunpack.c.l.b16 %v485
        %v1159 = vunpack.c.h.b16 %v485
        %v1160 = vunpack.c.l.b16 %v486
        %v1161 = vunpack.c.h.b16 %v486
        %v1162 = vunpack.c.l.b16 %v487
        %v1163 = vunpack.c.h.b16 %v487
        %v1164 = vunpack.c.l.b16 %v488
        %v1165 = vunpack.c.h.b16 %v488
        %v1166 = vunpack.c.l.b16 %v489
        %v1167 = vunpack.c.h.b16 %v489
        %v1168 = vunpack.c.l.b16 %v490
        %v1169 = vunpack.c.h.b16 %v490
        %v1170 = vunpack.c.l.b16 %v491
        %v1171 = vunpack.c.h.b16 %v491
        %v1172 = vunpack.c.l.b16 %v492
        %v1173 = vunpack.c.h.b16 %v492
        %v1174 = vunpack.c.l.b16 %v493
        %v1175 = vunpack.c.h.b16 %v493
        %v1176 = vunpack.c.l.b16 %v494
        %v1177 = vunpack.c.h.b16 %v494
        %v1178 = vunpack.c.l.b16 %v495
        %v1179 = vunpack.c.h.b16 %v495
        %v1180 = vunpack.c.l.b16 %v496
        %v1181 = vunpack.c.h.b16 %v496
        %v1182 = vunpack.c.l.b16 %v497
        %v1183 = vunpack.c.h.b16 %v497
        %v1184 = vunpack.c.l.b16 %v498
        %v1185 = vunpack.c.h.b16 %v498
        %v1186 = vunpack.c.l.b16 %v499
        %v1187 = vunpack.c.h.b16 %v499
        %v1188 = vunpack.c.l.b16 %v500
        %v1189 = vunpack.c.h.b16 %v500
        %v1190 = vunpack.c.l.b16 %v501
        %v1191 = vunpack.c.h.b16 %v501
        %v1192 = vunpack.c.l.b16 %v502
        %v1193 = vunpack.c.h.b16 %v502
        %v1194 = vunpack.c.l.b16 %v503
        %v1195 = vunpack.c.h.b16 %v503
        %v1196 = vunpack.c.l.b16 %v504
        %v1197 = vunpack.c.h.b16 %v504
        %v1198 = vunpack.c.l.b16 %v505
        %v1199 = vunpack.c.h.b16 %v505
        %v1200 = vunpack.c.l.b16 %v506
        %v1201 = vunpack.c.h.b16 %v506
        %v1202 = vunpack.c.l.b16 %v507
        %v1203 = vunpack.c.h.b16 %v507
        %v1204 = vunpack.c.l.b16 %v508
        %v1205 = vunpack.c.h.b16 %v508
        %v1206 = vunpack.c.l.b16 %v509
        %v1207 = vunpack.c.h.b16 %v509
        %v1208 = vunpack.c.l.b16 %v510
        %v1209 = vunpack.c.h.b16 %v510
        %v1210 = vunpack.c.l.b16 %v511
        %v1211 = vunpack.c.h.b16 %v511
        %v1212 = vunpack.c.l.b16 %v512
        %v1213 = vunpack.c.h.b16 %v512
        %v1214 = vunpack.c.l.b16 %v513
        %v1215 = vunpack.c.h.b16 %v513
        %v1216 = vunpack.c.l.b16 %v514
        %v1217 = vunpack.c.h.b16 %v514
        %v1218 = vunpack.c.l.b16 %v515
        %v1219 = vunpack.c.h.b16 %v515
        %v1220 = vunpack.c.l.b16 %v516
        %v1221 = vunpack.c.h.b16 %v516
        %v1222 = vunpack.c.l.b16 %v517
        %v1223 = vunpack.c.h.b16 %v517
        %v1224 = vunpack.c.l.b16 %v518
        %v1225 = vunpack.c.h.b16 %v518
        %v1226 = vunpack.c.l.b16 %v519
        %v1227 = vunpack.c.h.b16 %v519
        %v1228 = vunpack.c.l.b16 %v520
        %v1229 = vunpack.c.h.b16 %v520
        %v1230 = vunpack.c.l.b16 %v521
        %v1231 = vunpack.c.h.b16 %v521
        %v1232 = vunpack.c.l.b16 %v522
        %v1233 = vunpack.c.h.b16 %v522
        %v1234 = vunpack.c.l.b16 %v523
        %v1235 = vunpack.c.h.b16 %v523
        %v1236 = vunpack.c.l.b16 %v524
        %v1237 = vunpack.c.h.b16 %v524
        %v1238 = vunpack.c.l.b16 %v525
        %v1239 = vunpack.c.h.b16 %v525
        %v1240 = vunpack.c.l.b16 %v526
        %v1241 = vunpack.c.h.b16 %v526
        %v1242 = vunpack.c.l.b16 %v527
        %v1243 = vunpack.c.h.b16 %v527
        %v1244 = vunpack.c.l.b16 %v528
        %v1245 = vunpack.c.h.b16 %v528
        %v1246 = vunpack.c.l.b16 %v529
        %v1247 = vunpack.c.h.b16 %v529
        %v1248 = vunpack.c.l.b16 %v530
        %v1249 = vunpack.c.h.b16 %v530
        %v1250 = vunpack.c.l.b16 %v531
        %v1251 = vunpack.c.h.b16 %v531
        %v1252 = vunpack.c.l.b16 %v532
        %v1253 = vunpack.c.h.b16 %v532
        %v1254 = vunpack.c.l.b16 %v533
        %v1255 = vunpack.c.h.b16 %v533
        %v1256 = vunpack.c.l.b16 %v534
        %v1257 = vunpack.c.h.b16 %v534
        %v1258 = vunpack.c.l.b16 %v535
        %v1259 = vunpack.c.h.b16 %v535
        %v1260 = vunpack.c.l.b16 %v536
        %v1261 = vunpack.c.h.b16 %v536
        %v1262 = vunpack.c.l.b16 %v537
        %v1263 = vunpack.c.h.b16 %v537
        %v1264 = vunpack.c.l.b16 %v538
        %v1265 = vunpack.c.h.b16 %v538
        %v1266 = vunpack.c.l.b16 %v539
        %v1267 = vunpack.c.h.b16 %v539
        %v1268 = vunpack.c.l.b16 %v540
        %v1269 = vunpack.c.h.b16 %v540
        %v1270 = vunpack.c.l.b16 %v541
        %v1271 = vunpack.c.h.b16 %v541
        %v1272 = vunpack.c.l.b16 %v542
        %v1273 = vunpack.c.h.b16 %v542
        %v1274 = vunpack.c.l.b16 %v543
        %v1275 = vunpack.c.h.b16 %v543
        %v1276 = vunpack.c.l.b16 %v544
        %v1277 = vunpack.c.h.b16 %v544
        %v1278 = vunpack.c.l.b16 %v545
        %v1279 = vunpack.c.h.b16 %v545
        %v1280 = vunpack.c.l.b16 %v546
        %v1281 = vunpack.c.h.b16 %v546
        %v1282 = vunpack.c.l.b16 %v547
        %v1283 = vunpack.c.h.b16 %v547
        %v1284 = vunpack.c.l.b16 %v548
        %v1285 = vunpack.c.h.b16 %v548
        %v1286 = vunpack.c.l.b16 %v549
        %v1287 = vunpack.c.h.b16 %v549
        %v1288 = vunpack.c.l.b16 %v550
        %v1289 = vunpack.c.h.b16 %v550
        %v1290 = vunpack.c.l.b16 %v551
        %v1291 = vunpack.c.h.b16 %v551
        %v1292 = vunpack.c.l.b16 %v552
        %v1293 = vunpack.c.h.b16 %v552
        %v1294 = vunpack.c.l.b16 %v553
        %v1295 = vunpack.c.h.b16 %v553
        %v1296 = vunpack.c.l.b16 %v554
        %v1297 = vunpack.c.h.b16 %v554
        %v1298 = vunpack.c.l.b16 %v555
        %v1299 = vunpack.c.h.b16 %v555
        %v1300 = vunpack.c.l.b16 %v556
        %v1301 = vunpack.c.h.b16 %v556
        %v1302 = vunpack.c.l.b16 %v557
        %v1303 = vunpack.c.h.b16 %v557
        %v1304 = vunpack.c.l.b16 %v558
        %v1305 = vunpack.c.h.b16 %v558
        %v1306 = vunpack.c.l.b16 %v559
        %v1307 = vunpack.c.h.b16 %v559
        %v1308 = vunpack.c.l.b16 %v560
        %v1309 = vunpack.c.h.b16 %v560
        %v1310 = vunpack.c.l.b16 %v561
        %v1311 = vunpack.c.h.b16 %v561
        %v1312 = vunpack.c.l.b16 %v562
        %v1313 = vunpack.c.h.b16 %v562
        %v1314 = vunpack.c.l.b16 %v563
        %v1315 = vunpack.c.h.b16 %v563
        %v1316 = vunpack.c.l.b16 %v564
        %v1317 = vunpack.c.h.b16 %v564
        %v1318 = vunpack.c.l.b16 %v565
        %v1319 = vunpack.c.h.b16 %v565
        %v1320 = vunpack.c.l.b16 %v566
        %v1321 = vunpack.c.h.b16 %v566
        %v1322 = vunpack.c.l.b16 %v567
        %v1323 = vunpack.c.h.b16 %v567
        %v1324 = vunpack.c.l.b16 %v568
        %v1325 = vunpack.c.h.b16 %v568
        %v1326 = vunpack.c.l.b16 %v569
        %v1327 = vunpack.c.h.b16 %v569
        %v1328 = vunpack.c.l.b16 %v570
        %v1329 = vunpack.c.h.b16 %v570
        %v1330 = vunpack.c.l.b16 %v571
        %v1331 = vunpack.c.h.b16 %v571
        %v1332 = vunpack.c.l.b16 %v572
        %v1333 = vunpack.c.h.b16 %v572
        %v1334 = vunpack.c.l.b16 %v573
        %v1335 = vunpack.c.h.b16 %v573
        %v1336 = vunpack.c.l.b16 %v574
        %v1337 = vunpack.c.h.b16 %v574
        %v1338 = vunpack.c.l.b16 %v575
        %v1339 = vunpack.c.h.b16 %v575
        %v1340 = vunpack.c.l.b16 %v576
        %v1341 = vunpack.c.h.b16 %v576
        %v1342 = vunpack.c.l.b16 %v577
        %v1343 = vunpack.c.h.b16 %v577
        %v1344 = vunpack.c.l.b16 %v578
        %v1345 = vunpack.c.h.b16 %v578
        %v1346 = vunpack.c.l.b16 %v579
        %v1347 = vunpack.c.h.b16 %v579
        %v1348 = vunpack.c.l.b16 %v580
        %v1349 = vunpack.c.h.b16 %v580
        %v1350 = vunpack.c.l.b16 %v581
        %v1351 = vunpack.c.h.b16 %v581
        %v1352 = vunpack.c.l.b16 %v582
        %v1353 = vunpack.c.h.b16 %v582
        %v1354 = vunpack.c.l.b16 %v583
        %v1355 = vunpack.c.h.b16 %v583
        %v1356 = vunpack.c.l.b16 %v584
        %v1357 = vunpack.c.h.b16 %v584
        %v1358 = vunpack.c.l.b16 %v585
        %v1359 = vunpack.c.h.b16 %v585
        %v1360 = vunpack.c.l.b16 %v586
        %v1361 = vunpack.c.h.b16 %v586
        %v1362 = vunpack.c.l.b16 %v587
        %v1363 = vunpack.c.h.b16 %v587
        %v1364 = vunpack.c.l.b16 %v588
        %v1365 = vunpack.c.h.b16 %v588
        %v1366 = vunpack.c.l.b16 %v589
        %v1367 = vunpack.c.h.b16 %v589
        %v1368 = vunpack.c.l.b16 %v590
        %v1369 = vunpack.c.h.b16 %v590
        %v1370 = vunpack.c.l.b16 %v591
        %v1371 = vunpack.c.h.b16 %v591
        %v1372 = vunpack.c.l.b16 %v592
        %v1373 = vunpack.c.h.b16 %v592
        %v1374 = vunpack.c.l.b16 %v593
        %v1375 = vunpack.c.h.b16 %v593
        %v1376 = vunpack.c.l.b16 %v594
        %v1377 = vunpack.c.h.b16 %v594
        %v1378 = vunpack.c.l.b16 %v595
        %v1379 = vunpack.c.h.b16 %v595
        %v1380 = vunpack.c.l.b16 %v596
        %v1381 = vunpack.c.h.b16 %v596
        %v1382 = vunpack.c.l.b16 %v597
        %v1383 = vunpack.c.h.b16 %v597
        %v1384 = vunpack.c.l.b16 %v598
        %v1385 = vunpack.c.h.b16 %v598
        %v1386 = vunpack.c.l.b16 %v599
        %v1387 = vunpack.c.h.b16 %v599
        %v1388 = vunpack.c.l.b16 %v600
        %v1389 = vunpack.c.h.b16 %v600
        %v1390 = vunpack.c.l.b16 %v601
        %v1391 = vunpack.c.h.b16 %v601
        %v1392 = vunpack.c.l.b16 %v602
        %v1393 = vunpack.c.h.b16 %v602
        %v1394 = vunpack.c.l.b16 %v603
        %v1395 = vunpack.c.h.b16 %v603
        %v1396 = vunpack.c.l.b16 %v604
        %v1397 = vunpack.c.h.b16 %v604
        %v1398 = vunpack.c.l.b16 %v605
        %v1399 = vunpack.c.h.b16 %v605
        %v1400 = vunpack.c.l.b16 %v606
        %v1401 = vunpack.c.h.b16 %v606
        %v1402 = vunpack.c.l.b16 %v607
        %v1403 = vunpack.c.h.b16 %v607
        %v1404 = vunpack.c.l.b16 %v608
        %v1405 = vunpack.c.h.b16 %v608
        %v1406 = vunpack.c.l.b16 %v609
        %v1407 = vunpack.c.h.b16 %v609
        %v1408 = vunpack.c.l.b16 %v610
        %v1409 = vunpack.c.h.b16 %v610
        %v1410 = vunpack.c.l.b16 %v611
        %v1411 = vunpack.c.h.b16 %v611
        %v1412 = vunpack.c.l.b16 %v612
        %v1413 = vunpack.c.h.b16 %v612
        %v1414 = vunpack.c.l.b16 %v613
        %v1415 = vunpack.c.h.b16 %v613
        %v1416 = vunpack.c.l.b16 %v614
        %v1417 = vunpack.c.h.b16 %v614
        %v1418 = vunpack.c.l.b16 %v615
        %v1419 = vunpack.c.h.b16 %v615
        %v1420 = vunpack.c.l.b16 %v616
        %v1421 = vunpack.c.h.b16 %v616
        %v1422 = vunpack.c.l.b16 %v617
        %v1423 = vunpack.c.h.b16 %v617
        %v1424 = vunpack.c.l.b16 %v618
        %v1425 = vunpack.c.h.b16 %v618
        %v1426 = vunpack.c.l.b16 %v619
        %v1427 = vunpack.c.h.b16 %v619
        %v1428 = vunpack.c.l.b16 %v620
        %v1429 = vunpack.c.h.b16 %v620
        %v1430 = vunpack.c.l.b16 %v621
        %v1431 = vunpack.c.h.b16 %v621
        %v1432 = vunpack.c.l.b16 %v622
        %v1433 = vunpack.c.h.b16 %v622
        %v1434 = vunpack.c.l.b16 %v623
        %v1435 = vunpack.c.h.b16 %v623
        %v1436 = vunpack.c.l.b16 %v624
        %v1437 = vunpack.c.h.b16 %v624
        %v1438 = vunpack.c.l.b16 %v625
        %v1439 = vunpack.c.h.b16 %v625
        %v1440 = vunpack.c.l.b16 %v626
        %v1441 = vunpack.c.h.b16 %v626
        %v1442 = vunpack.c.l.b16 %v627
        %v1443 = vunpack.c.h.b16 %v627
        %v1444 = vunpack.c.l.b16 %v628
        %v1445 = vunpack.c.h.b16 %v628
        %v1446 = vunpack.c.l.b16 %v629
        %v1447 = vunpack.c.h.b16 %v629
        %v1448 = vunpack.c.l.b16 %v630
        %v1449 = vunpack.c.h.b16 %v630
        %v1450 = vunpack.c.l.b16 %v631
        %v1451 = vunpack.c.h.b16 %v631
        %v1452 = vunpack.c.l.b16 %v632
        %v1453 = vunpack.c.h.b16 %v632
        %v1454 = vunpack.c.l.b16 %v633
        %v1455 = vunpack.c.h.b16 %v633
        %v1456 = vunpack.c.l.b16 %v634
        %v1457 = vunpack.c.h.b16 %v634
        %v1458 = vunpack.c.l.b16 %v635
        %v1459 = vunpack.c.h.b16 %v635
        %v1460 = vunpack.c.l.b16 %v636
        %v1461 = vunpack.c.h.b16 %v636
        %v1462 = vunpack.c.l.b16 %v637
        %v1463 = vunpack.c.h.b16 %v637
        %v1464 = vunpack.c.l.b16 %v638
        %v1465 = vunpack.c.h.b16 %v638
        %v1466 = vunpack.c.l.b16 %v639
        %v1467 = vunpack.c.h.b16 %v639
        %v1468 = vunpack.c.l.b16 %v640
        %v1469 = vunpack.c.h.b16 %v640
        %v1470 = vunpack.c.l.b16 %v641
        %v1471 = vunpack.c.h.b16 %v641
        %v1472 = vunpack.c.l.b16 %v642
        %v1473 = vunpack.c.h.b16 %v642
        %v1474 = vunpack.c.l.b16 %v643
        %v1475 = vunpack.c.h.b16 %v643
        %v1476 = vunpack.c.l.b16 %v644
        %v1477 = vunpack.c.h.b16 %v644
        %v1478 = vunpack.c.l.b16 %v645
        %v1479 = vunpack.c.h.b16 %v645
        %v1480 = vunpack.c.l.b16 %v646
        %v1481 = vunpack.c.h.b16 %v646
        %v1482 = vunpack.c.l.b16 %v647
        %v1483 = vunpack.c.h.b16 %v647
        %v1484 = vunpack.c.l.b16 %v648
        %v1485 = vunpack.c.h.b16 %v648
        %v1486 = vunpack.c.l.b16 %v649
        %v1487 = vunpack.c.h.b16 %v649
        %v1488 = vunpack.c.l.b16 %v650
        %v1489 = vunpack.c.h.b16 %v650
        %v1490 = vunpack.c.l.b16 %v651
        %v1491 = vunpack.c.h.b16 %v651
        %v1492 = vunpack.c.l.b16 %v652
        %v1493 = vunpack.c.h.b16 %v652
        %v1494 = vunpack.c.l.b16 %v653
        %v1495 = vunpack.c.h.b16 %v653
        %v1496 = vunpack.c.l.b16 %v654
        %v1497 = vunpack.c.h.b16 %v654
        %v1498 = vunpack.c.l.b16 %v655
        %v1499 = vunpack.c.h.b16 %v655
        %v1500 = vunpack.c.l.b16 %v656
        %v1501 = vunpack.c.h.b16 %v656
        %v1502 = vunpack.c.l.b16 %v657
        %v1503 = vunpack.c.h.b16 %v657
        %v1504 = vunpack.c.l.b16 %v658
        %v1505 = vunpack.c.h.b16 %v658
        %v1506 = vunpack.c.l.b16 %v659
        %v1507 = vunpack.c.h.b16 %v659
        %v1508 = vunpack.c.l.b16 %v660
        %v1509 = vunpack.c.h.b16 %v660
        %v1510 = vunpack.c.l.b16 %v661
        %v1511 = vunpack.c.h.b16 %v661
        %v1512 = vunpack.c.l.b16 %v662
        %v1513 = vunpack.c.h.b16 %v662
        %v1514 = vunpack.c.l.b16 %v663
        %v1515 = vunpack.c.h.b16 %v663
        %v1516 = vunpack.c.l.b16 %v664
        %v1517 = vunpack.c.h.b16 %v664
        %v1518 = vunpack.c.l.b16 %v665
        %v1519 = vunpack.c.h.b16 %v665
        %v1520 = vunpack.c.l.b16 %v666
        %v1521 = vunpack.c.h.b16 %v666
        %v1522 = vunpack.c.l.b16 %v667
        %v1523 = vunpack.c.h.b16 %v667
        %v1524 = vunpack.c.l.b16 %v668
        %v1525 = vunpack.c.h.b16 %v668
        %v1526 = vunpack.c.l.b16 %v669
        %v1527 = vunpack.c.h.b16 %v669
        %v1528 = vunpack.c.l.b16 %v670
        %v1529 = vunpack.c.h.b16 %v670
        %v1530 = vunpack.c.l.b16 %v671
        %v1531 = vunpack.c.h.b16 %v671
        %v1532 = vunpack.c.l.b16 %v672
        %v1533 = vunpack.c.h.b16 %v672
        %v1534 = vunpack.c.l.b16 %v673
        %v1535 = vunpack.c.h.b16 %v673
        %v1536 = vunpack.c.l.b16 %v674
        %v1537 = vunpack.c.h.b16 %v674
        %v1538 = vunpack.c.l.b16 %v675
        %v1539 = vunpack.c.h.b16 %v675
        %v1540 = vunpack.c.l.b16 %v676
        %v1541 = vunpack.c.h.b16 %v676
        %v1542 = vunpack.c.l.b16 %v677
        %v1543 = vunpack.c.h.b16 %v677
        %v1544 = vunpack.c.l.b16 %v678
        %v1545 = vunpack.c.h.b16 %v678
        %v1546 = vunpack.c.l.b16 %v679
        %v1547 = vunpack.c.h.b16 %v679
        %v1548 = vunpack.c.l.b16 %v680
        %v1549 = vunpack.c.h.b16 %v680
        %v1550 = vunpack.c.l.b16 %v681
        %v1551 = vunpack.c.h.b16 %v681
        %v1552 = vunpack.c.l.b16 %v682
        %v1553 = vunpack.c.h.b16 %v682
        %v1554 = vunpack.c.l.b16 %v683
        %v1555 = vunpack.c.h.b16 %v683
        %v1556 = vunpack.c.l.b16 %v684
        %v1557 = vunpack.c.h.b16 %v684
        %v1558 = vunpack.c.l.b16 %v685
        %v1559 = vunpack.c.h.b16 %v685
        %v1560 = vunpack.c.l.b16 %v686
        %v1561 = vunpack.c.h.b16 %v686
        %v1562 = vunpack.c.l.b16 %v687
        %v1563 = vunpack.c.h.b16 %v687
        %v1564 = vunpack.c.l.b16 %v688
        %v1565 = vunpack.c.h.b16 %v688
        %v1566 = vunpack.c.l.b16 %v689
        %v1567 = vunpack.c.h.b16 %v689
        %v1568 = vpack.c.b16 %v998, %v992
        %v1569 = vpack.c.b16 %v999, %v993
        %v1570 = vpack.c.b16 %v1000, %v994
        %v1571 = vpack.c.b16 %v1001, %v995
        %v1572 = vpack.c.b16 %v1002, %v996
        %v1573 = vpack.c.b16 %v1003, %v997
        %v1574 = vpack.c.b16 %v1010, %v1004
        %v1575 = vpack.c.b16 %v1011, %v1005
        %v1576 = vpack.c.b16 %v1012, %v1006
        %v1577 = vpack.c.b16 %v1013, %v1007
        %v1578 = vpack.c.b16 %v1014, %v1008
        %v1579 = vpack.c.b16 %v1015, %v1009
        %v1580 = vpack.c.b16 %v1022, %v1016
        %v1581 = vpack.c.b16 %v1023, %v1017
        %v1582 = vpack.c.b16 %v1024, %v1018
        %v1583 = vpack.c.b16 %v1025, %v1019
        %v1584 = vpack.c.b16 %v1026, %v1020
        %v1585 = vpack.c.b16 %v1027, %v1021
        %v1586 = vpack.c.b16 %v1034, %v1028
        %v1587 = vpack.c.b16 %v1035, %v1029
        %v1588 = vpack.c.b16 %v1036, %v1030
        %v1589 = vpack.c.b16 %v1037, %v1031
        %v1590 = vpack.c.b16 %v1038, %v1032
        %v1591 = vpack.c.b16 %v1039, %v1033
        %v1592 = vpack.c.b16 %v1046, %v1040
        %v1593 = vpack.c.b16 %v1047, %v1041
        %v1594 = vpack.c.b16 %v1048, %v1042
        %v1595 = vpack.c.b16 %v1049, %v1043
        %v1596 = vpack.c.b16 %v1050, %v1044
        %v1597 = vpack.c.b16 %v1051, %v1045
        %v1598 = vpack.c.b16 %v1058, %v1052
        %v1599 = vpack.c.b16 %v1059, %v1053
        %v1600 = vpack.c.b16 %v1060, %v1054
        %v1601 = vpack.c.b16 %v1061, %v1055
        %v1602 = vpack.c.b16 %v1062, %v1056
        %v1603 = vpack.c.b16 %v1063, %v1057
        %v1604 = vpack.c.b16 %v1070, %v1064
        %v1605 = vpack.c.b16 %v1071, %v1065
        %v1606 = vpack.c.b16 %v1072, %v1066
        %v1607 = vpack.c.b16 %v1073, %v1067
        %v1608 = vpack.c.b16 %v1074, %v1068
        %v1609 = vpack.c.b16 %v1075, %v1069
        %v1610 = vpack.c.b16 %v1082, %v1076
        %v1611 = vpack.c.b16 %v1083, %v1077
        %v1612 = vpack.c.b16 %v1084, %v1078
        %v1613 = vpack.c.b16 %v1085, %v1079
        %v1614 = vpack.c.b16 %v1086, %v1080
        %v1615 = vpack.c.b16 %v1087, %v1081
        %v1616 = vpack.c.b16 %v1094, %v1088
        %v1617 = vpack.c.b16 %v1095, %v1089
        %v1618 = vpack.c.b16 %v1096, %v1090
        %v1619 = vpack.c.b16 %v1097, %v1091
        %v1620 = vpack.c.b16 %v1098, %v1092
        %v1621 = vpack.c.b16 %v1099, %v1093
        %v1622 = vpack.c.b16 %v1106, %v1100
        %v1623 = vpack.c.b16 %v1107, %v1101
        %v1624 = vpack.c.b16 %v1108, %v1102
        %v1625 = vpack.c.b16 %v1109, %v1103
        %v1626 = vpack.c.b16 %v1110, %v1104
        %v1627 = vpack.c.b16 %v1111, %v1105
        %v1628 = vpack.c.b16 %v1118, %v1112
        %v1629 = vpack.c.b16 %v1119, %v1113
        %v1630 = vpack.c.b16 %v1120, %v1114
        %v1631 = vpack.c.b16 %v1121, %v1115
        %v1632 = vpack.c.b16 %v1122, %v1116
        %v1633 = vpack.c.b16 %v1123, %v1117
        %v1634 = vpack.c.b16 %v1130, %v1124
        %v1635 = vpack.c.b16 %v1131, %v1125
        %v1636 = vpack.c.b16 %v1132, %v1126
        %v1637 = vpack.c.b16 %v1133, %v1127
        %v1638 = vpack.c.b16 %v1134, %v1128
        %v1639 = vpack.c.b16 %v1135, %v1129
        %v1640 = vpack.c.b16 %v1142, %v1136
        %v1641 = vpack.c.b16 %v1143, %v1137
        %v1642 = vpack.c.b16 %v1144, %v1138
        %v1643 = vpack.c.b16 %v1145, %v1139
        %v1644 = vpack.c.b16 %v1146, %v1140
        %v1645 = vpack.c.b16 %v1147, %v1141
        %v1646 = vpack.c.b16 %v1154, %v1148
        %v1647 = vpack.c.b16 %v1155, %v1149
        %v1648 = vpack.c.b16 %v1156, %v1150
        %v1649 = vpack.c.b16 %v1157, %v1151
        %v1650 = vpack.c.b16 %v1158, %v1152
        %v1651 = vpack.c.b16 %v1159, %v1153
        %v1652 = vpack.c.b16 %v1166, %v1160
        %v1653 = vpack.c.b16 %v1167, %v1161
        %v1654 = vpack.c.b16 %v1168, %v1162
        %v1655 = vpack.c.b16 %v1169, %v1163
        %v1656 = vpack.c.b16 %v1170, %v1164
        %v1657 = vpack.c.b16 %v1171, %v1165
        %v1658 = vpack.c.b16 %v1178, %v1172
        %v1659 = vpack.c.b16 %v1179, %v1173
        %v1660 = vpack.c.b16 %v1180, %v1174
        %v1661 = vpack.c.b16 %v1181, %v1175
        %v1662 = vpack.c.b16 %v1182, %v1176
        %v1663 = vpack.c.b16 %v1183, %v1177
        %v1664 = vpack.c.b16 %v1190, %v1184
        %v1665 = vpack.c.b16 %v1191, %v1185
        %v1666 = vpack.c.b16 %v1192, %v1186
        %v1667 = vpack.c.b16 %v1193, %v1187
        %v1668 = vpack.c.b16 %v1194, %v1188
        %v1669 = vpack.c.b16 %v1195, %v1189
        %v1670 = vpack.c.b16 %v1202, %v1196
        %v1671 = vpack.c.b16 %v1203, %v1197
        %v1672 = vpack.c.b16 %v1204, %v1198
        %v1673 = vpack.c.b16 %v1205, %v1199
        %v1674 = vpack.c.b16 %v1206, %v1200
        %v1675 = vpack.c.b16 %v1207, %v1201
        %v1676 = vpack.c.b16 %v1214, %v1208
        %v1677 = vpack.c.b16 %v1215, %v1209
        %v1678 = vpack.c.b16 %v1216, %v1210
        %v1679 = vpack.c.b16 %v1217, %v1211
        %v1680 = vpack.c.b16 %v1218, %v1212
        %v1681 = vpack.c.b16 %v1219, %v1213
        %v1682 = vpack.c.b16 %v1226, %v1220
        %v1683 = vpack.c.b16 %v1227, %v1221
        %v1684 = vpack.c.b16 %v1228, %v1222
        %v1685 = vpack.c.b16 %v1229, %v1223
        %v1686 = vpack.c.b16 %v1230, %v1224
        %v1687 = vpack.c.b16 %v1231, %v1225
        %v1688 = vpack.c.b16 %v1238, %v1232
        %v1689 = vpack.c.b16 %v1239, %v1233
        %v1690 = vpack.c.b16 %v1240, %v1234
        %v1691 = vpack.c.b16 %v1241, %v1235
        %v1692 = vpack.c.b16 %v1242, %v1236
        %v1693 = vpack.c.b16 %v1243, %v1237
        %v1694 = vpack.c.b16 %v1250, %v1244
        %v1695 = vpack.c.b16 %v1251, %v1245
        %v1696 = vpack.c.b16 %v1252, %v1246
        %v1697 = vpack.c.b16 %v1253, %v1247
        %v1698 = vpack.c.b16 %v1254, %v1248
        %v1699 = vpack.c.b16 %v1255, %v1249
        %v1700 = vpack.c.b16 %v1262, %v1256
        %v1701 = vpack.c.b16 %v1263, %v1257
        %v1702 = vpack.c.b16 %v1264, %v1258
        %v1703 = vpack.c.b16 %v1265, %v1259
        %v1704 = vpack.c.b16 %v1266, %v1260
        %v1705 = vpack.c.b16 %v1267, %v1261
        %v1706 = vpack.c.b16 %v1274, %v1268
        %v1707 = vpack.c.b16 %v1275, %v1269
        %v1708 = vpack.c.b16 %v1276, %v1270
        %v1709 = vpack.c.b16 %v1277, %v1271
        %v1710 = vpack.c.b16 %v1278, %v1272
        %v1711 = vpack.c.b16 %v1279, %v1273
        %v1712 = vpack.c.b16 %v1286, %v1280
        %v1713 = vpack.c.b16 %v1287, %v1281
        %v1714 = vpack.c.b16 %v1288, %v1282
        %v1715 = vpack.c.b16 %v1289, %v1283
        %v1716 = vpack.c.b16 %v1290, %v1284
        %v1717 = vpack.c.b16 %v1291, %v1285
        %v1718 = vpack.c.b16 %v1298, %v1292
        %v1719 = vpack.c.b16 %v1299, %v1293
        %v1720 = vpack.c.b16 %v1300, %v1294
        %v1721 = vpack.c.b16 %v1301, %v1295
        %v1722 = vpack.c.b16 %v1302, %v1296
        %v1723 = vpack.c.b16 %v1303, %v1297
        %v1724 = vpack.c.b16 %v1310, %v1304
        %v1725 = vpack.c.b16 %v1311, %v1305
        %v1726 = vpack.c.b16 %v1312, %v1306
        %v1727 = vpack.c.b16 %v1313, %v1307
        %v1728 = vpack.c.b16 %v1314, %v1308
        %v1729 = vpack.c.b16 %v1315, %v1309
        %v1730 = vpack.c.b16 %v1322, %v1316
        %v1731 = vpack.c.b16 %v1323, %v1317
        %v1732 = vpack.c.b16 %v1324, %v1318
        %v1733 = vpack.c.b16 %v1325, %v1319
        %v1734 = vpack.c.b16 %v1326, %v1320
        %v1735 = vpack.c.b16 %v1327, %v1321
        %v1736 = vpack.c.b16 %v1334, %v1328
        %v1737 = vpack.c.b16 %v1335, %v1329
        %v1738 = vpack.c.b16 %v1336, %v1330
        %v1739 = vpack.c.b16 %v1337, %v1331
        %v1740 = vpack.c.b16 %v1338, %v1332
        %v1741 = vpack.c.b16 %v1339, %v1333
        %v1742 = vpack.c.b16 %v1346, %v1340
        %v1743 = vpack.c.b16 %v1347, %v1341
        %v1744 = vpack.c.b16 %v1348, %v1342
        %v1745 = vpack.c.b16 %v1349, %v1343
        %v1746 = vpack.c.b16 %v1350, %v1344
        %v1747 = vpack.c.b16 %v1351, %v1345
        %v1748 = vpack.c.b16 %v1358, %v1352
        %v1749 = vpack.c.b16 %v1359, %v1353
        %v1750 = vpack.c.b16 %v1360, %v1354
        %v1751 = vpack.c.b16 %v1361, %v1355
        %v1752 = vpack.c.b16 %v1362, %v1356
        %v1753 = vpack.c.b16 %v1363, %v1357
        %v1754 = vpack.c.b16 %v1370, %v1364
        %v1755 = vpack.c.b16 %v1371, %v1365
        %v1756 = vpack.c.b16 %v1372, %v1366
        %v1757 = vpack.c.b16 %v1373, %v1367
        %v1758 = vpack.c.b16 %v1374, %v1368
        %v1759 = vpack.c.b16 %v1375, %v1369
        %v1760 = vpack.c.b16 %v1382, %v1376
        %v1761 = vpack.c.b16 %v1383, %v1377
        %v1762 = vpack.c.b16 %v1384, %v1378
        %v1763 = vpack.c.b16 %v1385, %v1379
        %v1764 = vpack.c.b16 %v1386, %v1380
        %v1765 = vpack.c.b16 %v1387, %v1381
        %v1766 = vpack.c.b16 %v1394, %v1388
        %v1767 = vpack.c.b16 %v1395, %v1389
        %v1768 = vpack.c.b16 %v1396, %v1390
        %v1769 = vpack.c.b16 %v1397, %v1391
        %v1770 = vpack.c.b16 %v1398, %v1392
        %v1771 = vpack.c.b16 %v1399, %v1393
        %v1772 = vpack.c.b16 %v1406, %v1400
        %v1773 = vpack.c.b16 %v1407, %v1401
        %v1774 = vpack.c.b16 %v1408, %v1402
        %v1775 = vpack.c.b16 %v1409, %v1403
        %v1776 = vpack.c.b16 %v1410, %v1404
        %v1777 = vpack.c.b16 %v1411, %v1405
        %v1778 = vpack.c.b16 %v1418, %v1412
        %v1779 = vpack.c.b16 %v1419, %v1413
        %v1780 = vpack.c.b16 %v1420, %v1414
        %v1781 = vpack.c.b16 %v1421, %v1415
        %v1782 = vpack.c.b16 %v1422, %v1416
        %v1783 = vpack.c.b16 %v1423, %v1417
        %v1784 = vpack.c.b16 %v1430, %v1424
        %v1785 = vpack.c.b16 %v1431, %v1425
        %v1786 = vpack.c.b16 %v1432, %v1426
        %v1787 = vpack.c.b16 %v1433, %v1427
        %v1788 = vpack.c.b16 %v1434, %v1428
        %v1789 = vpack.c.b16 %v1435, %v1429
        %v1790 = vpack.c.b16 %v1442, %v1436
        %v1791 = vpack.c.b16 %v1443, %v1437
        %v1792 = vpack.c.b16 %v1444, %v1438
        %v1793 = vpack.c.b16 %v1445, %v1439
        %v1794 = vpack.c.b16 %v1446, %v1440
        %v1795 = vpack.c.b16 %v1447, %v1441
        %v1796 = vpack.c.b16 %v1454, %v1448
        %v1797 = vpack.c.b16 %v1455, %v1449
        %v1798 = vpack.c.b16 %v1456, %v1450
        %v1799 = vpack.c.b16 %v1457, %v1451
        %v1800 = vpack.c.b16 %v1458, %v1452
        %v1801 = vpack.c.b16 %v1459, %v1453
        %v1802 = vpack.c.b16 %v1466, %v1460
        %v1803 = vpack.c.b16 %v1467, %v1461
        %v1804 = vpack.c.b16 %v1468, %v1462
        %v1805 = vpack.c.b16 %v1469, %v1463
        %v1806 = vpack.c.b16 %v1470, %v1464
        %v1807 = vpack.c.b16 %v1471, %v1465
        %v1808 = vpack.c.b16 %v1478, %v1472
        %v1809 = vpack.c.b16 %v1479, %v1473
        %v1810 = vpack.c.b16 %v1480, %v1474
        %v1811 = vpack.c.b16 %v1481, %v1475
        %v1812 = vpack.c.b16 %v1482, %v1476
        %v1813 = vpack.c.b16 %v1483, %v1477
        %v1814 = vpack.c.b16 %v1490, %v1484
        %v1815 = vpack.c.b16 %v1491, %v1485
        %v1816 = vpack.c.b16 %v1492, %v1486
        %v1817 = vpack.c.b16 %v1493, %v1487
        %v1818 = vpack.c.b16 %v1494, %v1488
        %v1819 = vpack.c.b16 %v1495, %v1489
        %v1820 = vpack.c.b16 %v1502, %v1496
        %v1821 = vpack.c.b16 %v1503, %v1497
        %v1822 = vpack.c.b16 %v1504, %v1498
        %v1823 = vpack.c.b16 %v1505, %v1499
        %v1824 = vpack.c.b16 %v1506, %v1500
        %v1825 = vpack.c.b16 %v1507, %v1501
        %v1826 = vpack.c.b16 %v1514, %v1508
        %v1827 = vpack.c.b16 %v1515, %v1509
        %v1828 = vpack.c.b16 %v1516, %v1510
        %v1829 = vpack.c.b16 %v1517, %v1511
        %v1830 = vpack.c.b16 %v1518, %v1512
        %v1831 = vpack.c.b16 %v1519, %v1513
        %v1832 = vpack.c.b16 %v1526, %v1520
        %v1833 = vpack.c.b16 %v1527, %v1521
        %v1834 = vpack.c.b16 %v1528, %v1522
        %v1835 = vpack.c.b16 %v1529, %v1523
        %v1836 = vpack.c.b16 %v1530, %v1524
        %v1837 = vpack.c.b16 %v1531, %v1525
        %v1838 = vpack.c.b16 %v1538, %v1532
        %v1839 = vpack.c.b16 %v1539, %v1533
        %v1840 = vpack.c.b16 %v1540, %v1534
        %v1841 = vpack.c.b16 %v1541, %v1535
        %v1842 = vpack.c.b16 %v1542, %v1536
        %v1843 = vpack.c.b16 %v1543, %v1537
        %v1844 = vpack.c.b16 %v1550, %v1544
        %v1845 = vpack.c.b16 %v1551, %v1545
        %v1846 = vpack.c.b16 %v1552, %v1546
        %v1847 = vpack.c.b16 %v1553, %v1547
        %v1848 = vpack.c.b16 %v1554, %v1548
        %v1849 = vpack.c.b16 %v1555, %v1549
        %v1850 = vpack.c.b16 %v1562, %v1556
        %v1851 = vpack.c.b16 %v1563, %v1557
        %v1852 = vpack.c.b16 %v1564, %v1558
        %v1853 = vpack.c.b16 %v1565, %v1559
        %v1854 = vpack.c.b16 %v1566, %v1560
        %v1855 = vpack.c.b16 %v1567, %v1561
        %2144 = vmatpush.bf16.msra.mxu0 %v1610
        %2145 = vmatpush.bf16.msra.mxu0 %v1604
        %2146 = vmatpush.bf16.msra.mxu0 %v1598
        %2147 = vmatpush.bf16.msra.mxu0 %v1592
        %2148 = vmatpush.bf16.msra.mxu0 %v1586
        %2149 = vmatpush.bf16.msra.mxu0 %v1580
        %2150 = vmatpush.bf16.msra.mxu0 %v1574
        %2151 = vmatpush.bf16.msra.mxu0 %v1568
        %2152 = vmatmul.bf16.gmra.mxu0 %v396
        %v2153 = vpop.f32.mrf.mxu0
        %v2154 = vadd.f32 %v692, %v2153
        %v2155 = vpop.f32.mrf.mxu0
        %2156 = vdwg.mxu0
        %2157 = vmatpush.bf16.msra.mxu0 %v1658
        %2158 = vmatpush.bf16.msra.mxu0 %v1652
        %2159 = vmatpush.bf16.msra.mxu0 %v1646
        %2160 = vmatpush.bf16.msra.mxu0 %v1640
        %2161 = vmatpush.bf16.msra.mxu0 %v1634
        %2162 = vmatpush.bf16.msra.mxu0 %v1628
        %2163 = vmatpush.bf16.msra.mxu0 %v1622
        %2164 = vmatpush.bf16.msra.mxu0 %v1616
        %2165 = vmatmul.bf16.gmra.mxu0 %v397
        %v2166 = vpop.f32.mrf.mxu0
        %v2167 = vadd.f32 %v2154, %v2166
        %v2168 = vpop.f32.mrf.mxu0
        %2169 = vdwg.mxu0
        %2170 = vmatpush.bf16.msra.mxu0 %v1706
        %2171 = vmatpush.bf16.msra.mxu0 %v1700
        %2172 = vmatpush.bf16.msra.mxu0 %v1694
        %2173 = vmatpush.bf16.msra.mxu0 %v1688
        %2174 = vmatpush.bf16.msra.mxu0 %v1682
        %2175 = vmatpush.bf16.msra.mxu0 %v1676
        %2176 = vmatpush.bf16.msra.mxu0 %v1670
        %2177 = vmatpush.bf16.msra.mxu0 %v1664
        %2178 = vmatmul.bf16.gmra.mxu0 %v398
        %v2179 = vpop.f32.mrf.mxu0
        %v2180 = vadd.f32 %v2167, %v2179
        %v2181 = vpop.f32.mrf.mxu0
        %2182 = vdwg.mxu0
        %2183 = vmatpush.bf16.msra.mxu0 %v1754
        %2184 = vmatpush.bf16.msra.mxu0 %v1748
        %2185 = vmatpush.bf16.msra.mxu0 %v1742
        %2186 = vmatpush.bf16.msra.mxu0 %v1736
        %2187 = vmatpush.bf16.msra.mxu0 %v1730
        %2188 = vmatpush.bf16.msra.mxu0 %v1724
        %2189 = vmatpush.bf16.msra.mxu0 %v1718
        %2190 = vmatpush.bf16.msra.mxu0 %v1712
        %2191 = vmatmul.bf16.gmra.mxu0 %v399
        %v2192 = vpop.f32.mrf.mxu0
        %v2193 = vadd.f32 %v2180, %v2192
        %v2194 = vpop.f32.mrf.mxu0
        %2195 = vdwg.mxu0
        %2196 = vmatpush.bf16.msra.mxu0 %v1802
        %2197 = vmatpush.bf16.msra.mxu0 %v1796
        %2198 = vmatpush.bf16.msra.mxu0 %v1790
        %2199 = vmatpush.bf16.msra.mxu0 %v1784
        %2200 = vmatpush.bf16.msra.mxu0 %v1778
        %2201 = vmatpush.bf16.msra.mxu0 %v1772
        %2202 = vmatpush.bf16.msra.mxu0 %v1766
        %2203 = vmatpush.bf16.msra.mxu0 %v1760
        %2204 = vmatmul.bf16.gmra.mxu0 %v400
        %v2205 = vpop.f32.mrf.mxu0
        %v2206 = vadd.f32 %v2193, %v2205
        %v2207 = vpop.f32.mrf.mxu0
        %2208 = vdwg.mxu0
        %2209 = vmatpush.bf16.msra.mxu0 %v1850
        %2210 = vmatpush.bf16.msra.mxu0 %v1844
        %2211 = vmatpush.bf16.msra.mxu0 %v1838
        %2212 = vmatpush.bf16.msra.mxu0 %v1832
        %2213 = vmatpush.bf16.msra.mxu0 %v1826
        %2214 = vmatpush.bf16.msra.mxu0 %v1820
        %2215 = vmatpush.bf16.msra.mxu0 %v1814
        %2216 = vmatpush.bf16.msra.mxu0 %v1808
        %2217 = vmatmul.bf16.gmra.mxu0 %v401
        %v2218 = vpop.f32.mrf.mxu0
        %v2219 = vadd.f32 %v2206, %v2218
        %v2220 = vpop.f32.mrf.mxu0
        %2221 = vdwg.mxu0
        %2222 = vmatpush.bf16.msra.mxu0 %v1611
        %2223 = vmatpush.bf16.msra.mxu0 %v1605
        %2224 = vmatpush.bf16.msra.mxu0 %v1599
        %2225 = vmatpush.bf16.msra.mxu0 %v1593
        %2226 = vmatpush.bf16.msra.mxu0 %v1587
        %2227 = vmatpush.bf16.msra.mxu0 %v1581
        %2228 = vmatpush.bf16.msra.mxu0 %v1575
        %2229 = vmatpush.bf16.msra.mxu0 %v1569
        %2230 = vmatmul.bf16.gmra.mxu0 %v396
        %v2231 = vpop.f32.mrf.mxu0
        %v2232 = vadd.f32 %v693, %v2231
        %v2233 = vpop.f32.mrf.mxu0
        %2234 = vdwg.mxu0
        %2235 = vmatpush.bf16.msra.mxu0 %v1659
        %2236 = vmatpush.bf16.msra.mxu0 %v1653
        %2237 = vmatpush.bf16.msra.mxu0 %v1647
        %2238 = vmatpush.bf16.msra.mxu0 %v1641
        %2239 = vmatpush.bf16.msra.mxu0 %v1635
        %2240 = vmatpush.bf16.msra.mxu0 %v1629
        %2241 = vmatpush.bf16.msra.mxu0 %v1623
        %2242 = vmatpush.bf16.msra.mxu0 %v1617
        %2243 = vmatmul.bf16.gmra.mxu0 %v397
        %v2244 = vpop.f32.mrf.mxu0
        %v2245 = vadd.f32 %v2232, %v2244
        %v2246 = vpop.f32.mrf.mxu0
        %2247 = vdwg.mxu0
        %2248 = vmatpush.bf16.msra.mxu0 %v1707
        %2249 = vmatpush.bf16.msra.mxu0 %v1701
        %2250 = vmatpush.bf16.msra.mxu0 %v1695
        %2251 = vmatpush.bf16.msra.mxu0 %v1689
        %2252 = vmatpush.bf16.msra.mxu0 %v1683
        %2253 = vmatpush.bf16.msra.mxu0 %v1677
        %2254 = vmatpush.bf16.msra.mxu0 %v1671
        %2255 = vmatpush.bf16.msra.mxu0 %v1665
        %2256 = vmatmul.bf16.gmra.mxu0 %v398
        %v2257 = vpop.f32.mrf.mxu0
        %v2258 = vadd.f32 %v2245, %v2257
        %v2259 = vpop.f32.mrf.mxu0
        %2260 = vdwg.mxu0
        %2261 = vmatpush.bf16.msra.mxu0 %v1755
        %2262 = vmatpush.bf16.msra.mxu0 %v1749
        %2263 = vmatpush.bf16.msra.mxu0 %v1743
        %2264 = vmatpush.bf16.msra.mxu0 %v1737
        %2265 = vmatpush.bf16.msra.mxu0 %v1731
        %2266 = vmatpush.bf16.msra.mxu0 %v1725
        %2267 = vmatpush.bf16.msra.mxu0 %v1719
        %2268 = vmatpush.bf16.msra.mxu0 %v1713
        %2269 = vmatmul.bf16.gmra.mxu0 %v399
        %v2270 = vpop.f32.mrf.mxu0
        %v2271 = vadd.f32 %v2258, %v2270
        %v2272 = vpop.f32.mrf.mxu0
        %2273 = vdwg.mxu0
        %2274 = vmatpush.bf16.msra.mxu0 %v1803
        %2275 = vmatpush.bf16.msra.mxu0 %v1797
        %2276 = vmatpush.bf16.msra.mxu0 %v1791
        %2277 = vmatpush.bf16.msra.mxu0 %v1785
        %2278 = vmatpush.bf16.msra.mxu0 %v1779
        %2279 = vmatpush.bf16.msra.mxu0 %v1773
        %2280 = vmatpush.bf16.msra.mxu0 %v1767
        %2281 = vmatpush.bf16.msra.mxu0 %v1761
        %2282 = vmatmul.bf16.gmra.mxu0 %v400
        %v2283 = vpop.f32.mrf.mxu0
        %v2284 = vadd.f32 %v2271, %v2283
        %v2285 = vpop.f32.mrf.mxu0
        %2286 = vdwg.mxu0
        %2287 = vmatpush.bf16.msra.mxu0 %v1851
        %2288 = vmatpush.bf16.msra.mxu0 %v1845
        %2289 = vmatpush.bf16.msra.mxu0 %v1839
        %2290 = vmatpush.bf16.msra.mxu0 %v1833
        %2291 = vmatpush.bf16.msra.mxu0 %v1827
        %2292 = vmatpush.bf16.msra.mxu0 %v1821
        %2293 = vmatpush.bf16.msra.mxu0 %v1815
        %2294 = vmatpush.bf16.msra.mxu0 %v1809
        %2295 = vmatmul.bf16.gmra.mxu0 %v401
        %v2296 = vpop.f32.mrf.mxu0
        %v2297 = vadd.f32 %v2284, %v2296
        %v2298 = vpop.f32.mrf.mxu0
        %2299 = vdwg.mxu0
        %2300 = vmatpush.bf16.msra.mxu0 %v1612
        %2301 = vmatpush.bf16.msra.mxu0 %v1606
        %2302 = vmatpush.bf16.msra.mxu0 %v1600
        %2303 = vmatpush.bf16.msra.mxu0 %v1594
        %2304 = vmatpush.bf16.msra.mxu0 %v1588
        %2305 = vmatpush.bf16.msra.mxu0 %v1582
        %2306 = vmatpush.bf16.msra.mxu0 %v1576
        %2307 = vmatpush.bf16.msra.mxu0 %v1570
        %2308 = vmatmul.bf16.gmra.mxu0 %v396
        %v2309 = vpop.f32.mrf.mxu0
        %v2310 = vadd.f32 %v694, %v2309
        %v2311 = vpop.f32.mrf.mxu0
        %2312 = vdwg.mxu0
        %2313 = vmatpush.bf16.msra.mxu0 %v1660
        %2314 = vmatpush.bf16.msra.mxu0 %v1654
        %2315 = vmatpush.bf16.msra.mxu0 %v1648
        %2316 = vmatpush.bf16.msra.mxu0 %v1642
        %2317 = vmatpush.bf16.msra.mxu0 %v1636
        %2318 = vmatpush.bf16.msra.mxu0 %v1630
        %2319 = vmatpush.bf16.msra.mxu0 %v1624
        %2320 = vmatpush.bf16.msra.mxu0 %v1618
        %2321 = vmatmul.bf16.gmra.mxu0 %v397
        %v2322 = vpop.f32.mrf.mxu0
        %v2323 = vadd.f32 %v2310, %v2322
        %v2324 = vpop.f32.mrf.mxu0
        %2325 = vdwg.mxu0
        %2326 = vmatpush.bf16.msra.mxu0 %v1708
        %2327 = vmatpush.bf16.msra.mxu0 %v1702
        %2328 = vmatpush.bf16.msra.mxu0 %v1696
        %2329 = vmatpush.bf16.msra.mxu0 %v1690
        %2330 = vmatpush.bf16.msra.mxu0 %v1684
        %2331 = vmatpush.bf16.msra.mxu0 %v1678
        %2332 = vmatpush.bf16.msra.mxu0 %v1672
        %2333 = vmatpush.bf16.msra.mxu0 %v1666
        %2334 = vmatmul.bf16.gmra.mxu0 %v398
        %v2335 = vpop.f32.mrf.mxu0
        %v2336 = vadd.f32 %v2323, %v2335
        %v2337 = vpop.f32.mrf.mxu0
        %2338 = vdwg.mxu0
        %2339 = vmatpush.bf16.msra.mxu0 %v1756
        %2340 = vmatpush.bf16.msra.mxu0 %v1750
        %2341 = vmatpush.bf16.msra.mxu0 %v1744
        %2342 = vmatpush.bf16.msra.mxu0 %v1738
        %2343 = vmatpush.bf16.msra.mxu0 %v1732
        %2344 = vmatpush.bf16.msra.mxu0 %v1726
        %2345 = vmatpush.bf16.msra.mxu0 %v1720
        %2346 = vmatpush.bf16.msra.mxu0 %v1714
        %2347 = vmatmul.bf16.gmra.mxu0 %v399
        %v2348 = vpop.f32.mrf.mxu0
        %v2349 = vadd.f32 %v2336, %v2348
        %v2350 = vpop.f32.mrf.mxu0
        %2351 = vdwg.mxu0
        %2352 = vmatpush.bf16.msra.mxu0 %v1804
        %2353 = vmatpush.bf16.msra.mxu0 %v1798
        %2354 = vmatpush.bf16.msra.mxu0 %v1792
        %2355 = vmatpush.bf16.msra.mxu0 %v1786
        %2356 = vmatpush.bf16.msra.mxu0 %v1780
        %2357 = vmatpush.bf16.msra.mxu0 %v1774
        %2358 = vmatpush.bf16.msra.mxu0 %v1768
        %2359 = vmatpush.bf16.msra.mxu0 %v1762
        %2360 = vmatmul.bf16.gmra.mxu0 %v400
        %v2361 = vpop.f32.mrf.mxu0
        %v2362 = vadd.f32 %v2349, %v2361
        %v2363 = vpop.f32.mrf.mxu0
        %2364 = vdwg.mxu0
        %2365 = vmatpush.bf16.msra.mxu0 %v1852
        %2366 = vmatpush.bf16.msra.mxu0 %v1846
        %2367 = vmatpush.bf16.msra.mxu0 %v1840
        %2368 = vmatpush.bf16.msra.mxu0 %v1834
        %2369 = vmatpush.bf16.msra.mxu0 %v1828
        %2370 = vmatpush.bf16.msra.mxu0 %v1822
        %2371 = vmatpush.bf16.msra.mxu0 %v1816
        %2372 = vmatpush.bf16.msra.mxu0 %v1810
        %2373 = vmatmul.bf16.gmra.mxu0 %v401
        %v2374 = vpop.f32.mrf.mxu0
        %v2375 = vadd.f32 %v2362, %v2374
        %v2376 = vpop.f32.mrf.mxu0
        %2377 = vdwg.mxu0
        %2378 = vmatpush.bf16.msra.mxu0 %v1613
        %2379 = vmatpush.bf16.msra.mxu0 %v1607
        %2380 = vmatpush.bf16.msra.mxu0 %v1601
        %2381 = vmatpush.bf16.msra.mxu0 %v1595
        %2382 = vmatpush.bf16.msra.mxu0 %v1589
        %2383 = vmatpush.bf16.msra.mxu0 %v1583
        %2384 = vmatpush.bf16.msra.mxu0 %v1577
        %2385 = vmatpush.bf16.msra.mxu0 %v1571
        %2386 = vmatmul.bf16.gmra.mxu0 %v396
        %v2387 = vpop.f32.mrf.mxu0
        %v2388 = vadd.f32 %v695, %v2387
        %v2389 = vpop.f32.mrf.mxu0
        %2390 = vdwg.mxu0
        %2391 = vmatpush.bf16.msra.mxu0 %v1661
        %2392 = vmatpush.bf16.msra.mxu0 %v1655
        %2393 = vmatpush.bf16.msra.mxu0 %v1649
        %2394 = vmatpush.bf16.msra.mxu0 %v1643
        %2395 = vmatpush.bf16.msra.mxu0 %v1637
        %2396 = vmatpush.bf16.msra.mxu0 %v1631
        %2397 = vmatpush.bf16.msra.mxu0 %v1625
        %2398 = vmatpush.bf16.msra.mxu0 %v1619
        %2399 = vmatmul.bf16.gmra.mxu0 %v397
        %v2400 = vpop.f32.mrf.mxu0
        %v2401 = vadd.f32 %v2388, %v2400
        %v2402 = vpop.f32.mrf.mxu0
        %2403 = vdwg.mxu0
        %2404 = vmatpush.bf16.msra.mxu0 %v1709
        %2405 = vmatpush.bf16.msra.mxu0 %v1703
        %2406 = vmatpush.bf16.msra.mxu0 %v1697
        %2407 = vmatpush.bf16.msra.mxu0 %v1691
        %2408 = vmatpush.bf16.msra.mxu0 %v1685
        %2409 = vmatpush.bf16.msra.mxu0 %v1679
        %2410 = vmatpush.bf16.msra.mxu0 %v1673
        %2411 = vmatpush.bf16.msra.mxu0 %v1667
        %2412 = vmatmul.bf16.gmra.mxu0 %v398
        %v2413 = vpop.f32.mrf.mxu0
        %v2414 = vadd.f32 %v2401, %v2413
        %v2415 = vpop.f32.mrf.mxu0
        %2416 = vdwg.mxu0
        %2417 = vmatpush.bf16.msra.mxu0 %v1757
        %2418 = vmatpush.bf16.msra.mxu0 %v1751
        %2419 = vmatpush.bf16.msra.mxu0 %v1745
        %2420 = vmatpush.bf16.msra.mxu0 %v1739
        %2421 = vmatpush.bf16.msra.mxu0 %v1733
        %2422 = vmatpush.bf16.msra.mxu0 %v1727
        %2423 = vmatpush.bf16.msra.mxu0 %v1721
        %2424 = vmatpush.bf16.msra.mxu0 %v1715
        %2425 = vmatmul.bf16.gmra.mxu0 %v399
        %v2426 = vpop.f32.mrf.mxu0
        %v2427 = vadd.f32 %v2414, %v2426
        %v2428 = vpop.f32.mrf.mxu0
        %2429 = vdwg.mxu0
        %2430 = vmatpush.bf16.msra.mxu0 %v1805
        %2431 = vmatpush.bf16.msra.mxu0 %v1799
        %2432 = vmatpush.bf16.msra.mxu0 %v1793
        %2433 = vmatpush.bf16.msra.mxu0 %v1787
        %2434 = vmatpush.bf16.msra.mxu0 %v1781
        %2435 = vmatpush.bf16.msra.mxu0 %v1775
        %2436 = vmatpush.bf16.msra.mxu0 %v1769
        %2437 = vmatpush.bf16.msra.mxu0 %v1763
        %2438 = vmatmul.bf16.gmra.mxu0 %v400
        %v2439 = vpop.f32.mrf.mxu0
        %v2440 = vadd.f32 %v2427, %v2439
        %v2441 = vpop.f32.mrf.mxu0
        %2442 = vdwg.mxu0
        %2443 = vmatpush.bf16.msra.mxu0 %v1853
        %2444 = vmatpush.bf16.msra.mxu0 %v1847
        %2445 = vmatpush.bf16.msra.mxu0 %v1841
        %2446 = vmatpush.bf16.msra.mxu0 %v1835
        %2447 = vmatpush.bf16.msra.mxu0 %v1829
        %2448 = vmatpush.bf16.msra.mxu0 %v1823
        %2449 = vmatpush.bf16.msra.mxu0 %v1817
        %2450 = vmatpush.bf16.msra.mxu0 %v1811
        %2451 = vmatmul.bf16.gmra.mxu0 %v401
        %v2452 = vpop.f32.mrf.mxu0
        %v2453 = vadd.f32 %v2440, %v2452
        %v2454 = vpop.f32.mrf.mxu0
        %2455 = vdwg.mxu0
        %2456 = vmatpush.bf16.msra.mxu0 %v1614
        %2457 = vmatpush.bf16.msra.mxu0 %v1608
        %2458 = vmatpush.bf16.msra.mxu0 %v1602
        %2459 = vmatpush.bf16.msra.mxu0 %v1596
        %2460 = vmatpush.bf16.msra.mxu0 %v1590
        %2461 = vmatpush.bf16.msra.mxu0 %v1584
        %2462 = vmatpush.bf16.msra.mxu0 %v1578
        %2463 = vmatpush.bf16.msra.mxu0 %v1572
        %2464 = vmatmul.bf16.gmra.mxu0 %v396
        %v2465 = vpop.f32.mrf.mxu0
        %v2466 = vadd.f32 %v696, %v2465
        %v2467 = vpop.f32.mrf.mxu0
        %2468 = vdwg.mxu0
        %2469 = vmatpush.bf16.msra.mxu0 %v1662
        %2470 = vmatpush.bf16.msra.mxu0 %v1656
        %2471 = vmatpush.bf16.msra.mxu0 %v1650
        %2472 = vmatpush.bf16.msra.mxu0 %v1644
        %2473 = vmatpush.bf16.msra.mxu0 %v1638
        %2474 = vmatpush.bf16.msra.mxu0 %v1632
        %2475 = vmatpush.bf16.msra.mxu0 %v1626
        %2476 = vmatpush.bf16.msra.mxu0 %v1620
        %2477 = vmatmul.bf16.gmra.mxu0 %v397
        %v2478 = vpop.f32.mrf.mxu0
        %v2479 = vadd.f32 %v2466, %v2478
        %v2480 = vpop.f32.mrf.mxu0
        %2481 = vdwg.mxu0
        %2482 = vmatpush.bf16.msra.mxu0 %v1710
        %2483 = vmatpush.bf16.msra.mxu0 %v1704
        %2484 = vmatpush.bf16.msra.mxu0 %v1698
        %2485 = vmatpush.bf16.msra.mxu0 %v1692
        %2486 = vmatpush.bf16.msra.mxu0 %v1686
        %2487 = vmatpush.bf16.msra.mxu0 %v1680
        %2488 = vmatpush.bf16.msra.mxu0 %v1674
        %2489 = vmatpush.bf16.msra.mxu0 %v1668
        %2490 = vmatmul.bf16.gmra.mxu0 %v398
        %v2491 = vpop.f32.mrf.mxu0
        %v2492 = vadd.f32 %v2479, %v2491
        %v2493 = vpop.f32.mrf.mxu0
        %2494 = vdwg.mxu0
        %2495 = vmatpush.bf16.msra.mxu0 %v1758
        %2496 = vmatpush.bf16.msra.mxu0 %v1752
        %2497 = vmatpush.bf16.msra.mxu0 %v1746
        %2498 = vmatpush.bf16.msra.mxu0 %v1740
        %2499 = vmatpush.bf16.msra.mxu0 %v1734
        %2500 = vmatpush.bf16.msra.mxu0 %v1728
        %2501 = vmatpush.bf16.msra.mxu0 %v1722
        %2502 = vmatpush.bf16.msra.mxu0 %v1716
        %2503 = vmatmul.bf16.gmra.mxu0 %v399
        %v2504 = vpop.f32.mrf.mxu0
        %v2505 = vadd.f32 %v2492, %v2504
        %v2506 = vpop.f32.mrf.mxu0
        %2507 = vdwg.mxu0
        %2508 = vmatpush.bf16.msra.mxu0 %v1806
        %2509 = vmatpush.bf16.msra.mxu0 %v1800
        %2510 = vmatpush.bf16.msra.mxu0 %v1794
        %2511 = vmatpush.bf16.msra.mxu0 %v1788
        %2512 = vmatpush.bf16.msra.mxu0 %v1782
        %2513 = vmatpush.bf16.msra.mxu0 %v1776
        %2514 = vmatpush.bf16.msra.mxu0 %v1770
        %2515 = vmatpush.bf16.msra.mxu0 %v1764
        %2516 = vmatmul.bf16.gmra.mxu0 %v400
        %v2517 = vpop.f32.mrf.mxu0
        %v2518 = vadd.f32 %v2505, %v2517
        %v2519 = vpop.f32.mrf.mxu0
        %2520 = vdwg.mxu0
        %2521 = vmatpush.bf16.msra.mxu0 %v1854
        %2522 = vmatpush.bf16.msra.mxu0 %v1848
        %2523 = vmatpush.bf16.msra.mxu0 %v1842
        %2524 = vmatpush.bf16.msra.mxu0 %v1836
        %2525 = vmatpush.bf16.msra.mxu0 %v1830
        %2526 = vmatpush.bf16.msra.mxu0 %v1824
        %2527 = vmatpush.bf16.msra.mxu0 %v1818
        %2528 = vmatpush.bf16.msra.mxu0 %v1812
        %2529 = vmatmul.bf16.gmra.mxu0 %v401
        %v2530 = vpop.f32.mrf.mxu0
        %v2531 = vadd.f32 %v2518, %v2530
        %v2532 = vpop.f32.mrf.mxu0
        %2533 = vdwg.mxu0
        %2534 = vmatpush.bf16.msra.mxu0 %v1615
        %2535 = vmatpush.bf16.msra.mxu0 %v1609
        %2536 = vmatpush.bf16.msra.mxu0 %v1603
        %2537 = vmatpush.bf16.msra.mxu0 %v1597
        %2538 = vmatpush.bf16.msra.mxu0 %v1591
        %2539 = vmatpush.bf16.msra.mxu0 %v1585
        %2540 = vmatpush.bf16.msra.mxu0 %v1579
        %2541 = vmatpush.bf16.msra.mxu0 %v1573
        %2542 = vmatmul.bf16.gmra.mxu0 %v396
        %v2543 = vpop.f32.mrf.mxu0
        %v2544 = vadd.f32 %v697, %v2543
        %v2545 = vpop.f32.mrf.mxu0
        %2546 = vdwg.mxu0
        %2547 = vmatpush.bf16.msra.mxu0 %v1663
        %2548 = vmatpush.bf16.msra.mxu0 %v1657
        %2549 = vmatpush.bf16.msra.mxu0 %v1651
        %2550 = vmatpush.bf16.msra.mxu0 %v1645
        %2551 = vmatpush.bf16.msra.mxu0 %v1639
        %2552 = vmatpush.bf16.msra.mxu0 %v1633
        %2553 = vmatpush.bf16.msra.mxu0 %v1627
        %2554 = vmatpush.bf16.msra.mxu0 %v1621
        %2555 = vmatmul.bf16.gmra.mxu0 %v397
        %v2556 = vpop.f32.mrf.mxu0
        %v2557 = vadd.f32 %v2544, %v2556
        %v2558 = vpop.f32.mrf.mxu0
        %2559 = vdwg.mxu0
        %2560 = vmatpush.bf16.msra.mxu0 %v1711
        %2561 = vmatpush.bf16.msra.mxu0 %v1705
        %2562 = vmatpush.bf16.msra.mxu0 %v1699
        %2563 = vmatpush.bf16.msra.mxu0 %v1693
        %2564 = vmatpush.bf16.msra.mxu0 %v1687
        %2565 = vmatpush.bf16.msra.mxu0 %v1681
        %2566 = vmatpush.bf16.msra.mxu0 %v1675
        %2567 = vmatpush.bf16.msra.mxu0 %v1669
        %2568 = vmatmul.bf16.gmra.mxu0 %v398
        %v2569 = vpop.f32.mrf.mxu0
        %v2570 = vadd.f32 %v2557, %v2569
        %v2571 = vpop.f32.mrf.mxu0
        %2572 = vdwg.mxu0
        %2573 = vmatpush.bf16.msra.mxu0 %v1759
        %2574 = vmatpush.bf16.msra.mxu0 %v1753
        %2575 = vmatpush.bf16.msra.mxu0 %v1747
        %2576 = vmatpush.bf16.msra.mxu0 %v1741
        %2577 = vmatpush.bf16.msra.mxu0 %v1735
        %2578 = vmatpush.bf16.msra.mxu0 %v1729
        %2579 = vmatpush.bf16.msra.mxu0 %v1723
        %2580 = vmatpush.bf16.msra.mxu0 %v1717
        %2581 = vmatmul.bf16.gmra.mxu0 %v399
        %v2582 = vpop.f32.mrf.mxu0
        %v2583 = vadd.f32 %v2570, %v2582
        %v2584 = vpop.f32.mrf.mxu0
        %2585 = vdwg.mxu0
        %2586 = vmatpush.bf16.msra.mxu0 %v1807
        %2587 = vmatpush.bf16.msra.mxu0 %v1801
        %2588 = vmatpush.bf16.msra.mxu0 %v1795
        %2589 = vmatpush.bf16.msra.mxu0 %v1789
        %2590 = vmatpush.bf16.msra.mxu0 %v1783
        %2591 = vmatpush.bf16.msra.mxu0 %v1777
        %2592 = vmatpush.bf16.msra.mxu0 %v1771
        %2593 = vmatpush.bf16.msra.mxu0 %v1765
        %2594 = vmatmul.bf16.gmra.mxu0 %v400
        %v2595 = vpop.f32.mrf.mxu0
        %v2596 = vadd.f32 %v2583, %v2595
        %v2597 = vpop.f32.mrf.mxu0
        %2598 = vdwg.mxu0
        %2599 = vmatpush.bf16.msra.mxu0 %v1855
        %2600 = vmatpush.bf16.msra.mxu0 %v1849
        %2601 = vmatpush.bf16.msra.mxu0 %v1843
        %2602 = vmatpush.bf16.msra.mxu0 %v1837
        %2603 = vmatpush.bf16.msra.mxu0 %v1831
        %2604 = vmatpush.bf16.msra.mxu0 %v1825
        %2605 = vmatpush.bf16.msra.mxu0 %v1819
        %2606 = vmatpush.bf16.msra.mxu0 %v1813
        %2607 = vmatmul.bf16.gmra.mxu0 %v401
        %v2608 = vpop.f32.mrf.mxu0
        %v2609 = vadd.f32 %v2596, %v2608
        %v2610 = vpop.f32.mrf.mxu0
        %2611 = vdwg.mxu0
        %v2612 = vpack.c.bf16 %v2219, %v2219
        %v2613 = vpack.c.bf16 %v2297, %v2297
        %v2614 = vpack.c.bf16 %v2375, %v2375
        %v2615 = vpack.c.bf16 %v2453, %v2453
        %v2616 = vpack.c.bf16 %v2531, %v2531
        %v2617 = vpack.c.bf16 %v2609, %v2609
        %v2618 = vld [vmem:[#allocation8] sm:$0xff]
        %v2619 = vld [vmem:[#allocation8 + $0x8] sm:$0xff]
        %v2620 = vld [vmem:[#allocation8 + $0x10] sm:$0xff]
        %v2621 = vld [vmem:[#allocation8 + $0x18] sm:$0xff]
        %v2622 = vld [vmem:[#allocation8 + $0x20] sm:$0xff]
        %v2623 = vld [vmem:[#allocation8 + $0x28] sm:$0xff]
        %v2624 = vld [vmem:[#allocation8 + $0x30] sm:$0xff]
        %v2625 = vld [vmem:[#allocation8 + $0x38] sm:$0xff]
        %v2626 = vld [vmem:[#allocation8 + $0x40] sm:$0xff]
        %v2627 = vld [vmem:[#allocation8 + $0x48] sm:$0xff]
        %v2628 = vld [vmem:[#allocation8 + $0x50] sm:$0xff]
        %v2629 = vld [vmem:[#allocation8 + $0x58] sm:$0xff]
        %v2630 = vld [vmem:[#allocation8 + $0x60] sm:$0xff]
        %v2631 = vld [vmem:[#allocation8 + $0x68] sm:$0xff]
        %v2632 = vld [vmem:[#allocation8 + $0x70] sm:$0xff]
        %v2633 = vld [vmem:[#allocation8 + $0x78] sm:$0xff]
        %v2634 = vld [vmem:[#allocation8 + $0x80] sm:$0xff]
        %v2635 = vld [vmem:[#allocation8 + $0x88] sm:$0xff]
        %v2636 = vld [vmem:[#allocation8 + $0x90] sm:$0xff]
        %v2637 = vld [vmem:[#allocation8 + $0x98] sm:$0xff]
        %v2638 = vld [vmem:[#allocation8 + $0xa0] sm:$0xff]
        %v2639 = vld [vmem:[#allocation8 + $0xa8] sm:$0xff]
        %v2640 = vld [vmem:[#allocation8 + $0xb0] sm:$0xff]
        %v2641 = vld [vmem:[#allocation8 + $0xb8] sm:$0xff]
        %v2642 = vld [vmem:[#allocation8 + $0xc0] sm:$0xff]
        %v2643 = vld [vmem:[#allocation8 + $0xc8] sm:$0xff]
        %v2644 = vld [vmem:[#allocation8 + $0xd0] sm:$0xff]
        %v2645 = vld [vmem:[#allocation8 + $0xd8] sm:$0xff]
        %v2646 = vld [vmem:[#allocation8 + $0xe0] sm:$0xff]
        %v2647 = vld [vmem:[#allocation8 + $0xe8] sm:$0xff]
        %v2648 = vld [vmem:[#allocation8 + $0xf0] sm:$0xff]
        %v2649 = vld [vmem:[#allocation8 + $0xf8] sm:$0xff]
        %v2650 = vld [vmem:[#allocation8 + $0x100] sm:$0xff]
        %v2651 = vld [vmem:[#allocation8 + $0x108] sm:$0xff]
        %v2652 = vld [vmem:[#allocation8 + $0x110] sm:$0xff]
        %v2653 = vld [vmem:[#allocation8 + $0x118] sm:$0xff]
        %v2654 = vld [vmem:[#allocation8 + $0x120] sm:$0xff]
        %v2655 = vld [vmem:[#allocation8 + $0x128] sm:$0xff]
        %v2656 = vld [vmem:[#allocation8 + $0x130] sm:$0xff]
        %v2657 = vld [vmem:[#allocation8 + $0x138] sm:$0xff]
        %v2658 = vld [vmem:[#allocation8 + $0x140] sm:$0xff]
        %v2659 = vld [vmem:[#allocation8 + $0x148] sm:$0xff]
        %v2660 = vld [vmem:[#allocation8 + $0x150] sm:$0xff]
        %v2661 = vld [vmem:[#allocation8 + $0x158] sm:$0xff]
        %v2662 = vld [vmem:[#allocation8 + $0x160] sm:$0xff]
        %v2663 = vld [vmem:[#allocation8 + $0x168] sm:$0xff]
        %v2664 = vld [vmem:[#allocation8 + $0x170] sm:$0xff]
        %v2665 = vld [vmem:[#allocation8 + $0x178] sm:$0xff]
        %v2666 = vld [vmem:[#allocation8 + $0x180] sm:$0xff]
        %v2667 = vld [vmem:[#allocation8 + $0x188] sm:$0xff]
        %v2668 = vld [vmem:[#allocation8 + $0x190] sm:$0xff]
        %v2669 = vld [vmem:[#allocation8 + $0x198] sm:$0xff]
        %v2670 = vld [vmem:[#allocation8 + $0x1a0] sm:$0xff]
        %v2671 = vld [vmem:[#allocation8 + $0x1a8] sm:$0xff]
        %v2672 = vld [vmem:[#allocation8 + $0x1b0] sm:$0xff]
        %v2673 = vld [vmem:[#allocation8 + $0x1b8] sm:$0xff]
        %v2674 = vld [vmem:[#allocation8 + $0x1c0] sm:$0xff]
        %v2675 = vld [vmem:[#allocation8 + $0x1c8] sm:$0xff]
        %v2676 = vld [vmem:[#allocation8 + $0x1d0] sm:$0xff]
        %v2677 = vld [vmem:[#allocation8 + $0x1d8] sm:$0xff]
        %v2678 = vld [vmem:[#allocation8 + $0x1e0] sm:$0xff]
        %v2679 = vld [vmem:[#allocation8 + $0x1e8] sm:$0xff]
        %v2680 = vld [vmem:[#allocation8 + $0x1f0] sm:$0xff]
        %v2681 = vld [vmem:[#allocation8 + $0x1f8] sm:$0xff]
        %v2682 = vld [vmem:[#allocation8 + $0x200] sm:$0xff]
        %v2683 = vld [vmem:[#allocation8 + $0x208] sm:$0xff]
        %v2684 = vld [vmem:[#allocation8 + $0x210] sm:$0xff]
        %v2685 = vld [vmem:[#allocation8 + $0x218] sm:$0xff]
        %v2686 = vld [vmem:[#allocation8 + $0x220] sm:$0xff]
        %v2687 = vld [vmem:[#allocation8 + $0x228] sm:$0xff]
        %v2688 = vld [vmem:[#allocation8 + $0x230] sm:$0xff]
        %v2689 = vld [vmem:[#allocation8 + $0x238] sm:$0xff]
        %v2690 = vld [vmem:[#allocation8 + $0x240] sm:$0xff]
        %v2691 = vld [vmem:[#allocation8 + $0x248] sm:$0xff]
        %v2692 = vld [vmem:[#allocation8 + $0x250] sm:$0xff]
        %v2693 = vld [vmem:[#allocation8 + $0x258] sm:$0xff]
        %v2694 = vld [vmem:[#allocation8 + $0x260] sm:$0xff]
        %v2695 = vld [vmem:[#allocation8 + $0x268] sm:$0xff]
        %v2696 = vld [vmem:[#allocation8 + $0x270] sm:$0xff]
        %v2697 = vld [vmem:[#allocation8 + $0x278] sm:$0xff]
        %v2698 = vld [vmem:[#allocation8 + $0x280] sm:$0xff]
        %v2699 = vld [vmem:[#allocation8 + $0x288] sm:$0xff]
        %v2700 = vld [vmem:[#allocation8 + $0x290] sm:$0xff]
        %v2701 = vld [vmem:[#allocation8 + $0x298] sm:$0xff]
        %v2702 = vld [vmem:[#allocation8 + $0x2a0] sm:$0xff]
        %v2703 = vld [vmem:[#allocation8 + $0x2a8] sm:$0xff]
        %v2704 = vld [vmem:[#allocation8 + $0x2b0] sm:$0xff]
        %v2705 = vld [vmem:[#allocation8 + $0x2b8] sm:$0xff]
        %v2706 = vld [vmem:[#allocation8 + $0x2c0] sm:$0xff]
        %v2707 = vld [vmem:[#allocation8 + $0x2c8] sm:$0xff]
        %v2708 = vld [vmem:[#allocation8 + $0x2d0] sm:$0xff]
        %v2709 = vld [vmem:[#allocation8 + $0x2d8] sm:$0xff]
        %v2710 = vld [vmem:[#allocation8 + $0x2e0] sm:$0xff]
        %v2711 = vld [vmem:[#allocation8 + $0x2e8] sm:$0xff]
        %v2712 = vld [vmem:[#allocation8 + $0x2f0] sm:$0xff]
        %v2713 = vld [vmem:[#allocation8 + $0x2f8] sm:$0xff]
        %v2714 = vld [vmem:[#allocation8 + $0x300] sm:$0xff]
        %v2715 = vld [vmem:[#allocation8 + $0x308] sm:$0xff]
        %v2716 = vld [vmem:[#allocation8 + $0x310] sm:$0xff]
        %v2717 = vld [vmem:[#allocation8 + $0x318] sm:$0xff]
        %v2718 = vld [vmem:[#allocation8 + $0x320] sm:$0xff]
        %v2719 = vld [vmem:[#allocation8 + $0x328] sm:$0xff]
        %v2720 = vld [vmem:[#allocation8 + $0x330] sm:$0xff]
        %v2721 = vld [vmem:[#allocation8 + $0x338] sm:$0xff]
        %v2722 = vld [vmem:[#allocation8 + $0x340] sm:$0xff]
        %v2723 = vld [vmem:[#allocation8 + $0x348] sm:$0xff]
        %v2724 = vld [vmem:[#allocation8 + $0x350] sm:$0xff]
        %v2725 = vld [vmem:[#allocation8 + $0x358] sm:$0xff]
        %v2726 = vld [vmem:[#allocation8 + $0x360] sm:$0xff]
        %v2727 = vld [vmem:[#allocation8 + $0x368] sm:$0xff]
        %v2728 = vld [vmem:[#allocation8 + $0x370] sm:$0xff]
        %v2729 = vld [vmem:[#allocation8 + $0x378] sm:$0xff]
        %v2730 = vld [vmem:[#allocation8 + $0x380] sm:$0xff]
        %v2731 = vld [vmem:[#allocation8 + $0x388] sm:$0xff]
        %v2732 = vld [vmem:[#allocation8 + $0x390] sm:$0xff]
        %v2733 = vld [vmem:[#allocation8 + $0x398] sm:$0xff]
        %v2734 = vld [vmem:[#allocation8 + $0x3a0] sm:$0xff]
        %v2735 = vld [vmem:[#allocation8 + $0x3a8] sm:$0xff]
        %v2736 = vld [vmem:[#allocation8 + $0x3b0] sm:$0xff]
        %v2737 = vld [vmem:[#allocation8 + $0x3b8] sm:$0xff]
        %v2738 = vld [vmem:[#allocation8 + $0x3c0] sm:$0xff]
        %v2739 = vld [vmem:[#allocation8 + $0x3c8] sm:$0xff]
        %v2740 = vld [vmem:[#allocation8 + $0x3d0] sm:$0xff]
        %v2741 = vld [vmem:[#allocation8 + $0x3d8] sm:$0xff]
        %v2742 = vld [vmem:[#allocation8 + $0x3e0] sm:$0xff]
        %v2743 = vld [vmem:[#allocation8 + $0x3e8] sm:$0xff]
        %v2744 = vld [vmem:[#allocation8 + $0x3f0] sm:$0xff]
        %v2745 = vld [vmem:[#allocation8 + $0x3f8] sm:$0xff]
        %v2746 = vld [vmem:[#allocation8 + $0x400] sm:$0xff]
        %v2747 = vld [vmem:[#allocation8 + $0x408] sm:$0xff]
        %v2748 = vld [vmem:[#allocation8 + $0x410] sm:$0xff]
        %v2749 = vld [vmem:[#allocation8 + $0x418] sm:$0xff]
        %v2750 = vld [vmem:[#allocation8 + $0x420] sm:$0xff]
        %v2751 = vld [vmem:[#allocation8 + $0x428] sm:$0xff]
        %v2752 = vld [vmem:[#allocation8 + $0x430] sm:$0xff]
        %v2753 = vld [vmem:[#allocation8 + $0x438] sm:$0xff]
        %v2754 = vld [vmem:[#allocation8 + $0x440] sm:$0xff]
        %v2755 = vld [vmem:[#allocation8 + $0x448] sm:$0xff]
        %v2756 = vld [vmem:[#allocation8 + $0x450] sm:$0xff]
        %v2757 = vld [vmem:[#allocation8 + $0x458] sm:$0xff]
        %v2758 = vld [vmem:[#allocation8 + $0x460] sm:$0xff]
        %v2759 = vld [vmem:[#allocation8 + $0x468] sm:$0xff]
        %v2760 = vld [vmem:[#allocation8 + $0x470] sm:$0xff]
        %v2761 = vld [vmem:[#allocation8 + $0x478] sm:$0xff]
        %v2762 = vld [vmem:[#allocation8 + $0x480] sm:$0xff]
        %v2763 = vld [vmem:[#allocation8 + $0x488] sm:$0xff]
        %v2764 = vld [vmem:[#allocation8 + $0x490] sm:$0xff]
        %v2765 = vld [vmem:[#allocation8 + $0x498] sm:$0xff]
        %v2766 = vld [vmem:[#allocation8 + $0x4a0] sm:$0xff]
        %v2767 = vld [vmem:[#allocation8 + $0x4a8] sm:$0xff]
        %v2768 = vld [vmem:[#allocation8 + $0x4b0] sm:$0xff]
        %v2769 = vld [vmem:[#allocation8 + $0x4b8] sm:$0xff]
        %v2770 = vld [vmem:[#allocation8 + $0x4c0] sm:$0xff]
        %v2771 = vld [vmem:[#allocation8 + $0x4c8] sm:$0xff]
        %v2772 = vld [vmem:[#allocation8 + $0x4d0] sm:$0xff]
        %v2773 = vld [vmem:[#allocation8 + $0x4d8] sm:$0xff]
        %v2774 = vld [vmem:[#allocation8 + $0x4e0] sm:$0xff]
        %v2775 = vld [vmem:[#allocation8 + $0x4e8] sm:$0xff]
        %v2776 = vld [vmem:[#allocation8 + $0x4f0] sm:$0xff]
        %v2777 = vld [vmem:[#allocation8 + $0x4f8] sm:$0xff]
        %v2778 = vld [vmem:[#allocation8 + $0x500] sm:$0xff]
        %v2779 = vld [vmem:[#allocation8 + $0x508] sm:$0xff]
        %v2780 = vld [vmem:[#allocation8 + $0x510] sm:$0xff]
        %v2781 = vld [vmem:[#allocation8 + $0x518] sm:$0xff]
        %v2782 = vld [vmem:[#allocation8 + $0x520] sm:$0xff]
        %v2783 = vld [vmem:[#allocation8 + $0x528] sm:$0xff]
        %v2784 = vld [vmem:[#allocation8 + $0x530] sm:$0xff]
        %v2785 = vld [vmem:[#allocation8 + $0x538] sm:$0xff]
        %v2786 = vld [vmem:[#allocation8 + $0x540] sm:$0xff]
        %v2787 = vld [vmem:[#allocation8 + $0x548] sm:$0xff]
        %v2788 = vld [vmem:[#allocation8 + $0x550] sm:$0xff]
        %v2789 = vld [vmem:[#allocation8 + $0x558] sm:$0xff]
        %v2790 = vld [vmem:[#allocation8 + $0x560] sm:$0xff]
        %v2791 = vld [vmem:[#allocation8 + $0x568] sm:$0xff]
        %v2792 = vld [vmem:[#allocation8 + $0x570] sm:$0xff]
        %v2793 = vld [vmem:[#allocation8 + $0x578] sm:$0xff]
        %v2794 = vld [vmem:[#allocation8 + $0x580] sm:$0xff]
        %v2795 = vld [vmem:[#allocation8 + $0x588] sm:$0xff]
        %v2796 = vld [vmem:[#allocation8 + $0x590] sm:$0xff]
        %v2797 = vld [vmem:[#allocation8 + $0x598] sm:$0xff]
        %v2798 = vld [vmem:[#allocation8 + $0x5a0] sm:$0xff]
        %v2799 = vld [vmem:[#allocation8 + $0x5a8] sm:$0xff]
        %v2800 = vld [vmem:[#allocation8 + $0x5b0] sm:$0xff]
        %v2801 = vld [vmem:[#allocation8 + $0x5b8] sm:$0xff]
        %v2802 = vld [vmem:[#allocation8 + $0x5c0] sm:$0xff]
        %v2803 = vld [vmem:[#allocation8 + $0x5c8] sm:$0xff]
        %v2804 = vld [vmem:[#allocation8 + $0x5d0] sm:$0xff]
        %v2805 = vld [vmem:[#allocation8 + $0x5d8] sm:$0xff]
        %v2806 = vld [vmem:[#allocation8 + $0x5e0] sm:$0xff]
        %v2807 = vld [vmem:[#allocation8 + $0x5e8] sm:$0xff]
        %v2808 = vld [vmem:[#allocation8 + $0x5f0] sm:$0xff]
        %v2809 = vld [vmem:[#allocation8 + $0x5f8] sm:$0xff]
        %v2810 = vld [vmem:[#allocation8 + $0x600] sm:$0xff]
        %v2811 = vld [vmem:[#allocation8 + $0x608] sm:$0xff]
        %v2812 = vld [vmem:[#allocation8 + $0x610] sm:$0xff]
        %v2813 = vld [vmem:[#allocation8 + $0x618] sm:$0xff]
        %v2814 = vld [vmem:[#allocation8 + $0x620] sm:$0xff]
        %v2815 = vld [vmem:[#allocation8 + $0x628] sm:$0xff]
        %v2816 = vld [vmem:[#allocation8 + $0x630] sm:$0xff]
        %v2817 = vld [vmem:[#allocation8 + $0x638] sm:$0xff]
        %v2818 = vld [vmem:[#allocation8 + $0x640] sm:$0xff]
        %v2819 = vld [vmem:[#allocation8 + $0x648] sm:$0xff]
        %v2820 = vld [vmem:[#allocation8 + $0x650] sm:$0xff]
        %v2821 = vld [vmem:[#allocation8 + $0x658] sm:$0xff]
        %v2822 = vld [vmem:[#allocation8 + $0x660] sm:$0xff]
        %v2823 = vld [vmem:[#allocation8 + $0x668] sm:$0xff]
        %v2824 = vld [vmem:[#allocation8 + $0x670] sm:$0xff]
        %v2825 = vld [vmem:[#allocation8 + $0x678] sm:$0xff]
        %v2826 = vld [vmem:[#allocation8 + $0x680] sm:$0xff]
        %v2827 = vld [vmem:[#allocation8 + $0x688] sm:$0xff]
        %v2828 = vld [vmem:[#allocation8 + $0x690] sm:$0xff]
        %v2829 = vld [vmem:[#allocation8 + $0x698] sm:$0xff]
        %v2830 = vld [vmem:[#allocation8 + $0x6a0] sm:$0xff]
        %v2831 = vld [vmem:[#allocation8 + $0x6a8] sm:$0xff]
        %v2832 = vld [vmem:[#allocation8 + $0x6b0] sm:$0xff]
        %v2833 = vld [vmem:[#allocation8 + $0x6b8] sm:$0xff]
        %v2834 = vld [vmem:[#allocation8 + $0x6c0] sm:$0xff]
        %v2835 = vld [vmem:[#allocation8 + $0x6c8] sm:$0xff]
        %v2836 = vld [vmem:[#allocation8 + $0x6d0] sm:$0xff]
        %v2837 = vld [vmem:[#allocation8 + $0x6d8] sm:$0xff]
        %v2838 = vld [vmem:[#allocation8 + $0x6e0] sm:$0xff]
        %v2839 = vld [vmem:[#allocation8 + $0x6e8] sm:$0xff]
        %v2840 = vld [vmem:[#allocation8 + $0x6f0] sm:$0xff]
        %v2841 = vld [vmem:[#allocation8 + $0x6f8] sm:$0xff]
        %v2842 = vld [vmem:[#allocation8 + $0x700] sm:$0xff]
        %v2843 = vld [vmem:[#allocation8 + $0x708] sm:$0xff]
        %v2844 = vld [vmem:[#allocation8 + $0x710] sm:$0xff]
        %v2845 = vld [vmem:[#allocation8 + $0x718] sm:$0xff]
        %v2846 = vld [vmem:[#allocation8 + $0x720] sm:$0xff]
        %v2847 = vld [vmem:[#allocation8 + $0x728] sm:$0xff]
        %v2848 = vld [vmem:[#allocation8 + $0x730] sm:$0xff]
        %v2849 = vld [vmem:[#allocation8 + $0x738] sm:$0xff]
        %v2850 = vld [vmem:[#allocation8 + $0x740] sm:$0xff]
        %v2851 = vld [vmem:[#allocation8 + $0x748] sm:$0xff]
        %v2852 = vld [vmem:[#allocation8 + $0x750] sm:$0xff]
        %v2853 = vld [vmem:[#allocation8 + $0x758] sm:$0xff]
        %v2854 = vld [vmem:[#allocation8 + $0x760] sm:$0xff]
        %v2855 = vld [vmem:[#allocation8 + $0x768] sm:$0xff]
        %v2856 = vld [vmem:[#allocation8 + $0x770] sm:$0xff]
        %v2857 = vld [vmem:[#allocation8 + $0x778] sm:$0xff]
        %v2858 = vld [vmem:[#allocation8 + $0x780] sm:$0xff]
        %v2859 = vld [vmem:[#allocation8 + $0x788] sm:$0xff]
        %v2860 = vld [vmem:[#allocation8 + $0x790] sm:$0xff]
        %v2861 = vld [vmem:[#allocation8 + $0x798] sm:$0xff]
        %v2862 = vld [vmem:[#allocation8 + $0x7a0] sm:$0xff]
        %v2863 = vld [vmem:[#allocation8 + $0x7a8] sm:$0xff]
        %v2864 = vld [vmem:[#allocation8 + $0x7b0] sm:$0xff]
        %v2865 = vld [vmem:[#allocation8 + $0x7b8] sm:$0xff]
        %v2866 = vld [vmem:[#allocation8 + $0x7c0] sm:$0xff]
        %v2867 = vld [vmem:[#allocation8 + $0x7c8] sm:$0xff]
        %v2868 = vld [vmem:[#allocation8 + $0x7d0] sm:$0xff]
        %v2869 = vld [vmem:[#allocation8 + $0x7d8] sm:$0xff]
        %v2870 = vld [vmem:[#allocation8 + $0x7e0] sm:$0xff]
        %v2871 = vld [vmem:[#allocation8 + $0x7e8] sm:$0xff]
        %v2872 = vld [vmem:[#allocation8 + $0x7f0] sm:$0xff]
        %v2873 = vld [vmem:[#allocation8 + $0x7f8] sm:$0xff]
        %v2874 = vld [vmem:[#allocation8 + $0x800] sm:$0xff]
        %v2875 = vld [vmem:[#allocation8 + $0x808] sm:$0xff]
        %v2876 = vld [vmem:[#allocation8 + $0x810] sm:$0xff]
        %v2877 = vld [vmem:[#allocation8 + $0x818] sm:$0xff]
        %v2878 = vld [vmem:[#allocation8 + $0x820] sm:$0xff]
        %v2879 = vld [vmem:[#allocation8 + $0x828] sm:$0xff]
        %v2880 = vld [vmem:[#allocation8 + $0x830] sm:$0xff]
        %v2881 = vld [vmem:[#allocation8 + $0x838] sm:$0xff]
        %v2882 = vld [vmem:[#allocation8 + $0x840] sm:$0xff]
        %v2883 = vld [vmem:[#allocation8 + $0x848] sm:$0xff]
        %v2884 = vld [vmem:[#allocation8 + $0x850] sm:$0xff]
        %v2885 = vld [vmem:[#allocation8 + $0x858] sm:$0xff]
        %v2886 = vld [vmem:[#allocation8 + $0x860] sm:$0xff]
        %v2887 = vld [vmem:[#allocation8 + $0x868] sm:$0xff]
        %v2888 = vld [vmem:[#allocation8 + $0x870] sm:$0xff]
        %v2889 = vld [vmem:[#allocation8 + $0x878] sm:$0xff]
        %v2890 = vld [vmem:[#allocation8 + $0x880] sm:$0xff]
        %v2891 = vld [vmem:[#allocation8 + $0x888] sm:$0xff]
        %v2892 = vld [vmem:[#allocation8 + $0x890] sm:$0xff]
        %v2893 = vld [vmem:[#allocation8 + $0x898] sm:$0xff]
        %v2894 = vld [vmem:[#allocation8 + $0x8a0] sm:$0xff]
        %v2895 = vld [vmem:[#allocation8 + $0x8a8] sm:$0xff]
        %v2896 = vld [vmem:[#allocation8 + $0x8b0] sm:$0xff]
        %v2897 = vld [vmem:[#allocation8 + $0x8b8] sm:$0xff]
        %v2898 = vld [vmem:[#allocation8 + $0x8c0] sm:$0xff]
        %v2899 = vld [vmem:[#allocation8 + $0x8c8] sm:$0xff]
        %v2900 = vld [vmem:[#allocation8 + $0x8d0] sm:$0xff]
        %v2901 = vld [vmem:[#allocation8 + $0x8d8] sm:$0xff]
        %v2902 = vld [vmem:[#allocation8 + $0x8e0] sm:$0xff]
        %v2903 = vld [vmem:[#allocation8 + $0x8e8] sm:$0xff]
        %v2904 = vld [vmem:[#allocation8 + $0x8f0] sm:$0xff]
        %v2905 = vld [vmem:[#allocation8 + $0x8f8] sm:$0xff]
        %v2906 = vld [vmem:[#allocation10] sm:$0x3f]
        %v2908 = vperm.slane %v2906, 0
        %v2909 = vperm.slane %v2906, 1
        %v2910 = vperm.slane %v2906, 2
        %v2911 = vperm.slane %v2906, 3
        %v2912 = vperm.slane %v2906, 4
        %v2913 = vperm.slane %v2906, 5
        %v3208 = vunpack.c.l.b16 %v2618
        %v3209 = vunpack.c.h.b16 %v2618
        %v3210 = vunpack.c.l.b16 %v2619
        %v3211 = vunpack.c.h.b16 %v2619
        %v3212 = vunpack.c.l.b16 %v2620
        %v3213 = vunpack.c.h.b16 %v2620
        %v3214 = vunpack.c.l.b16 %v2621
        %v3215 = vunpack.c.h.b16 %v2621
        %v3216 = vunpack.c.l.b16 %v2622
        %v3217 = vunpack.c.h.b16 %v2622
        %v3218 = vunpack.c.l.b16 %v2623
        %v3219 = vunpack.c.h.b16 %v2623
        %v3220 = vunpack.c.l.b16 %v2624
        %v3221 = vunpack.c.h.b16 %v2624
        %v3222 = vunpack.c.l.b16 %v2625
        %v3223 = vunpack.c.h.b16 %v2625
        %v3224 = vunpack.c.l.b16 %v2626
        %v3225 = vunpack.c.h.b16 %v2626
        %v3226 = vunpack.c.l.b16 %v2627
        %v3227 = vunpack.c.h.b16 %v2627
        %v3228 = vunpack.c.l.b16 %v2628
        %v3229 = vunpack.c.h.b16 %v2628
        %v3230 = vunpack.c.l.b16 %v2629
        %v3231 = vunpack.c.h.b16 %v2629
        %v3232 = vunpack.c.l.b16 %v2630
        %v3233 = vunpack.c.h.b16 %v2630
        %v3234 = vunpack.c.l.b16 %v2631
        %v3235 = vunpack.c.h.b16 %v2631
        %v3236 = vunpack.c.l.b16 %v2632
        %v3237 = vunpack.c.h.b16 %v2632
        %v3238 = vunpack.c.l.b16 %v2633
        %v3239 = vunpack.c.h.b16 %v2633
        %v3240 = vunpack.c.l.b16 %v2634
        %v3241 = vunpack.c.h.b16 %v2634
        %v3242 = vunpack.c.l.b16 %v2635
        %v3243 = vunpack.c.h.b16 %v2635
        %v3244 = vunpack.c.l.b16 %v2636
        %v3245 = vunpack.c.h.b16 %v2636
        %v3246 = vunpack.c.l.b16 %v2637
        %v3247 = vunpack.c.h.b16 %v2637
        %v3248 = vunpack.c.l.b16 %v2638
        %v3249 = vunpack.c.h.b16 %v2638
        %v3250 = vunpack.c.l.b16 %v2639
        %v3251 = vunpack.c.h.b16 %v2639
        %v3252 = vunpack.c.l.b16 %v2640
        %v3253 = vunpack.c.h.b16 %v2640
        %v3254 = vunpack.c.l.b16 %v2641
        %v3255 = vunpack.c.h.b16 %v2641
        %v3256 = vunpack.c.l.b16 %v2642
        %v3257 = vunpack.c.h.b16 %v2642
        %v3258 = vunpack.c.l.b16 %v2643
        %v3259 = vunpack.c.h.b16 %v2643
        %v3260 = vunpack.c.l.b16 %v2644
        %v3261 = vunpack.c.h.b16 %v2644
        %v3262 = vunpack.c.l.b16 %v2645
        %v3263 = vunpack.c.h.b16 %v2645
        %v3264 = vunpack.c.l.b16 %v2646
        %v3265 = vunpack.c.h.b16 %v2646
        %v3266 = vunpack.c.l.b16 %v2647
        %v3267 = vunpack.c.h.b16 %v2647
        %v3268 = vunpack.c.l.b16 %v2648
        %v3269 = vunpack.c.h.b16 %v2648
        %v3270 = vunpack.c.l.b16 %v2649
        %v3271 = vunpack.c.h.b16 %v2649
        %v3272 = vunpack.c.l.b16 %v2650
        %v3273 = vunpack.c.h.b16 %v2650
        %v3274 = vunpack.c.l.b16 %v2651
        %v3275 = vunpack.c.h.b16 %v2651
        %v3276 = vunpack.c.l.b16 %v2652
        %v3277 = vunpack.c.h.b16 %v2652
        %v3278 = vunpack.c.l.b16 %v2653
        %v3279 = vunpack.c.h.b16 %v2653
        %v3280 = vunpack.c.l.b16 %v2654
        %v3281 = vunpack.c.h.b16 %v2654
        %v3282 = vunpack.c.l.b16 %v2655
        %v3283 = vunpack.c.h.b16 %v2655
        %v3284 = vunpack.c.l.b16 %v2656
        %v3285 = vunpack.c.h.b16 %v2656
        %v3286 = vunpack.c.l.b16 %v2657
        %v3287 = vunpack.c.h.b16 %v2657
        %v3288 = vunpack.c.l.b16 %v2658
        %v3289 = vunpack.c.h.b16 %v2658
        %v3290 = vunpack.c.l.b16 %v2659
        %v3291 = vunpack.c.h.b16 %v2659
        %v3292 = vunpack.c.l.b16 %v2660
        %v3293 = vunpack.c.h.b16 %v2660
        %v3294 = vunpack.c.l.b16 %v2661
        %v3295 = vunpack.c.h.b16 %v2661
        %v3296 = vunpack.c.l.b16 %v2662
        %v3297 = vunpack.c.h.b16 %v2662
        %v3298 = vunpack.c.l.b16 %v2663
        %v3299 = vunpack.c.h.b16 %v2663
        %v3300 = vunpack.c.l.b16 %v2664
        %v3301 = vunpack.c.h.b16 %v2664
        %v3302 = vunpack.c.l.b16 %v2665
        %v3303 = vunpack.c.h.b16 %v2665
        %v3304 = vunpack.c.l.b16 %v2666
        %v3305 = vunpack.c.h.b16 %v2666
        %v3306 = vunpack.c.l.b16 %v2667
        %v3307 = vunpack.c.h.b16 %v2667
        %v3308 = vunpack.c.l.b16 %v2668
        %v3309 = vunpack.c.h.b16 %v2668
        %v3310 = vunpack.c.l.b16 %v2669
        %v3311 = vunpack.c.h.b16 %v2669
        %v3312 = vunpack.c.l.b16 %v2670
        %v3313 = vunpack.c.h.b16 %v2670
        %v3314 = vunpack.c.l.b16 %v2671
        %v3315 = vunpack.c.h.b16 %v2671
        %v3316 = vunpack.c.l.b16 %v2672
        %v3317 = vunpack.c.h.b16 %v2672
        %v3318 = vunpack.c.l.b16 %v2673
        %v3319 = vunpack.c.h.b16 %v2673
        %v3320 = vunpack.c.l.b16 %v2674
        %v3321 = vunpack.c.h.b16 %v2674
        %v3322 = vunpack.c.l.b16 %v2675
        %v3323 = vunpack.c.h.b16 %v2675
        %v3324 = vunpack.c.l.b16 %v2676
        %v3325 = vunpack.c.h.b16 %v2676
        %v3326 = vunpack.c.l.b16 %v2677
        %v3327 = vunpack.c.h.b16 %v2677
        %v3328 = vunpack.c.l.b16 %v2678
        %v3329 = vunpack.c.h.b16 %v2678
        %v3330 = vunpack.c.l.b16 %v2679
        %v3331 = vunpack.c.h.b16 %v2679
        %v3332 = vunpack.c.l.b16 %v2680
        %v3333 = vunpack.c.h.b16 %v2680
        %v3334 = vunpack.c.l.b16 %v2681
        %v3335 = vunpack.c.h.b16 %v2681
        %v3336 = vunpack.c.l.b16 %v2682
        %v3337 = vunpack.c.h.b16 %v2682
        %v3338 = vunpack.c.l.b16 %v2683
        %v3339 = vunpack.c.h.b16 %v2683
        %v3340 = vunpack.c.l.b16 %v2684
        %v3341 = vunpack.c.h.b16 %v2684
        %v3342 = vunpack.c.l.b16 %v2685
        %v3343 = vunpack.c.h.b16 %v2685
        %v3344 = vunpack.c.l.b16 %v2686
        %v3345 = vunpack.c.h.b16 %v2686
        %v3346 = vunpack.c.l.b16 %v2687
        %v3347 = vunpack.c.h.b16 %v2687
        %v3348 = vunpack.c.l.b16 %v2688
        %v3349 = vunpack.c.h.b16 %v2688
        %v3350 = vunpack.c.l.b16 %v2689
        %v3351 = vunpack.c.h.b16 %v2689
        %v3352 = vunpack.c.l.b16 %v2690
        %v3353 = vunpack.c.h.b16 %v2690
        %v3354 = vunpack.c.l.b16 %v2691
        %v3355 = vunpack.c.h.b16 %v2691
        %v3356 = vunpack.c.l.b16 %v2692
        %v3357 = vunpack.c.h.b16 %v2692
        %v3358 = vunpack.c.l.b16 %v2693
        %v3359 = vunpack.c.h.b16 %v2693
        %v3360 = vunpack.c.l.b16 %v2694
        %v3361 = vunpack.c.h.b16 %v2694
        %v3362 = vunpack.c.l.b16 %v2695
        %v3363 = vunpack.c.h.b16 %v2695
        %v3364 = vunpack.c.l.b16 %v2696
        %v3365 = vunpack.c.h.b16 %v2696
        %v3366 = vunpack.c.l.b16 %v2697
        %v3367 = vunpack.c.h.b16 %v2697
        %v3368 = vunpack.c.l.b16 %v2698
        %v3369 = vunpack.c.h.b16 %v2698
        %v3370 = vunpack.c.l.b16 %v2699
        %v3371 = vunpack.c.h.b16 %v2699
        %v3372 = vunpack.c.l.b16 %v2700
        %v3373 = vunpack.c.h.b16 %v2700
        %v3374 = vunpack.c.l.b16 %v2701
        %v3375 = vunpack.c.h.b16 %v2701
        %v3376 = vunpack.c.l.b16 %v2702
        %v3377 = vunpack.c.h.b16 %v2702
        %v3378 = vunpack.c.l.b16 %v2703
        %v3379 = vunpack.c.h.b16 %v2703
        %v3380 = vunpack.c.l.b16 %v2704
        %v3381 = vunpack.c.h.b16 %v2704
        %v3382 = vunpack.c.l.b16 %v2705
        %v3383 = vunpack.c.h.b16 %v2705
        %v3384 = vunpack.c.l.b16 %v2706
        %v3385 = vunpack.c.h.b16 %v2706
        %v3386 = vunpack.c.l.b16 %v2707
        %v3387 = vunpack.c.h.b16 %v2707
        %v3388 = vunpack.c.l.b16 %v2708
        %v3389 = vunpack.c.h.b16 %v2708
        %v3390 = vunpack.c.l.b16 %v2709
        %v3391 = vunpack.c.h.b16 %v2709
        %v3392 = vunpack.c.l.b16 %v2710
        %v3393 = vunpack.c.h.b16 %v2710
        %v3394 = vunpack.c.l.b16 %v2711
        %v3395 = vunpack.c.h.b16 %v2711
        %v3396 = vunpack.c.l.b16 %v2712
        %v3397 = vunpack.c.h.b16 %v2712
        %v3398 = vunpack.c.l.b16 %v2713
        %v3399 = vunpack.c.h.b16 %v2713
        %v3400 = vunpack.c.l.b16 %v2714
        %v3401 = vunpack.c.h.b16 %v2714
        %v3402 = vunpack.c.l.b16 %v2715
        %v3403 = vunpack.c.h.b16 %v2715
        %v3404 = vunpack.c.l.b16 %v2716
        %v3405 = vunpack.c.h.b16 %v2716
        %v3406 = vunpack.c.l.b16 %v2717
        %v3407 = vunpack.c.h.b16 %v2717
        %v3408 = vunpack.c.l.b16 %v2718
        %v3409 = vunpack.c.h.b16 %v2718
        %v3410 = vunpack.c.l.b16 %v2719
        %v3411 = vunpack.c.h.b16 %v2719
        %v3412 = vunpack.c.l.b16 %v2720
        %v3413 = vunpack.c.h.b16 %v2720
        %v3414 = vunpack.c.l.b16 %v2721
        %v3415 = vunpack.c.h.b16 %v2721
        %v3416 = vunpack.c.l.b16 %v2722
        %v3417 = vunpack.c.h.b16 %v2722
        %v3418 = vunpack.c.l.b16 %v2723
        %v3419 = vunpack.c.h.b16 %v2723
        %v3420 = vunpack.c.l.b16 %v2724
        %v3421 = vunpack.c.h.b16 %v2724
        %v3422 = vunpack.c.l.b16 %v2725
        %v3423 = vunpack.c.h.b16 %v2725
        %v3424 = vunpack.c.l.b16 %v2726
        %v3425 = vunpack.c.h.b16 %v2726
        %v3426 = vunpack.c.l.b16 %v2727
        %v3427 = vunpack.c.h.b16 %v2727
        %v3428 = vunpack.c.l.b16 %v2728
        %v3429 = vunpack.c.h.b16 %v2728
        %v3430 = vunpack.c.l.b16 %v2729
        %v3431 = vunpack.c.h.b16 %v2729
        %v3432 = vunpack.c.l.b16 %v2730
        %v3433 = vunpack.c.h.b16 %v2730
        %v3434 = vunpack.c.l.b16 %v2731
        %v3435 = vunpack.c.h.b16 %v2731
        %v3436 = vunpack.c.l.b16 %v2732
        %v3437 = vunpack.c.h.b16 %v2732
        %v3438 = vunpack.c.l.b16 %v2733
        %v3439 = vunpack.c.h.b16 %v2733
        %v3440 = vunpack.c.l.b16 %v2734
        %v3441 = vunpack.c.h.b16 %v2734
        %v3442 = vunpack.c.l.b16 %v2735
        %v3443 = vunpack.c.h.b16 %v2735
        %v3444 = vunpack.c.l.b16 %v2736
        %v3445 = vunpack.c.h.b16 %v2736
        %v3446 = vunpack.c.l.b16 %v2737
        %v3447 = vunpack.c.h.b16 %v2737
        %v3448 = vunpack.c.l.b16 %v2738
        %v3449 = vunpack.c.h.b16 %v2738
        %v3450 = vunpack.c.l.b16 %v2739
        %v3451 = vunpack.c.h.b16 %v2739
        %v3452 = vunpack.c.l.b16 %v2740
        %v3453 = vunpack.c.h.b16 %v2740
        %v3454 = vunpack.c.l.b16 %v2741
        %v3455 = vunpack.c.h.b16 %v2741
        %v3456 = vunpack.c.l.b16 %v2742
        %v3457 = vunpack.c.h.b16 %v2742
        %v3458 = vunpack.c.l.b16 %v2743
        %v3459 = vunpack.c.h.b16 %v2743
        %v3460 = vunpack.c.l.b16 %v2744
        %v3461 = vunpack.c.h.b16 %v2744
        %v3462 = vunpack.c.l.b16 %v2745
        %v3463 = vunpack.c.h.b16 %v2745
        %v3464 = vunpack.c.l.b16 %v2746
        %v3465 = vunpack.c.h.b16 %v2746
        %v3466 = vunpack.c.l.b16 %v2747
        %v3467 = vunpack.c.h.b16 %v2747
        %v3468 = vunpack.c.l.b16 %v2748
        %v3469 = vunpack.c.h.b16 %v2748
        %v3470 = vunpack.c.l.b16 %v2749
        %v3471 = vunpack.c.h.b16 %v2749
        %v3472 = vunpack.c.l.b16 %v2750
        %v3473 = vunpack.c.h.b16 %v2750
        %v3474 = vunpack.c.l.b16 %v2751
        %v3475 = vunpack.c.h.b16 %v2751
        %v3476 = vunpack.c.l.b16 %v2752
        %v3477 = vunpack.c.h.b16 %v2752
        %v3478 = vunpack.c.l.b16 %v2753
        %v3479 = vunpack.c.h.b16 %v2753
        %v3480 = vunpack.c.l.b16 %v2754
        %v3481 = vunpack.c.h.b16 %v2754
        %v3482 = vunpack.c.l.b16 %v2755
        %v3483 = vunpack.c.h.b16 %v2755
        %v3484 = vunpack.c.l.b16 %v2756
        %v3485 = vunpack.c.h.b16 %v2756
        %v3486 = vunpack.c.l.b16 %v2757
        %v3487 = vunpack.c.h.b16 %v2757
        %v3488 = vunpack.c.l.b16 %v2758
        %v3489 = vunpack.c.h.b16 %v2758
        %v3490 = vunpack.c.l.b16 %v2759
        %v3491 = vunpack.c.h.b16 %v2759
        %v3492 = vunpack.c.l.b16 %v2760
        %v3493 = vunpack.c.h.b16 %v2760
        %v3494 = vunpack.c.l.b16 %v2761
        %v3495 = vunpack.c.h.b16 %v2761
        %v3496 = vunpack.c.l.b16 %v2762
        %v3497 = vunpack.c.h.b16 %v2762
        %v3498 = vunpack.c.l.b16 %v2763
        %v3499 = vunpack.c.h.b16 %v2763
        %v3500 = vunpack.c.l.b16 %v2764
        %v3501 = vunpack.c.h.b16 %v2764
        %v3502 = vunpack.c.l.b16 %v2765
        %v3503 = vunpack.c.h.b16 %v2765
        %v3504 = vunpack.c.l.b16 %v2766
        %v3505 = vunpack.c.h.b16 %v2766
        %v3506 = vunpack.c.l.b16 %v2767
        %v3507 = vunpack.c.h.b16 %v2767
        %v3508 = vunpack.c.l.b16 %v2768
        %v3509 = vunpack.c.h.b16 %v2768
        %v3510 = vunpack.c.l.b16 %v2769
        %v3511 = vunpack.c.h.b16 %v2769
        %v3512 = vunpack.c.l.b16 %v2770
        %v3513 = vunpack.c.h.b16 %v2770
        %v3514 = vunpack.c.l.b16 %v2771
        %v3515 = vunpack.c.h.b16 %v2771
        %v3516 = vunpack.c.l.b16 %v2772
        %v3517 = vunpack.c.h.b16 %v2772
        %v3518 = vunpack.c.l.b16 %v2773
        %v3519 = vunpack.c.h.b16 %v2773
        %v3520 = vunpack.c.l.b16 %v2774
        %v3521 = vunpack.c.h.b16 %v2774
        %v3522 = vunpack.c.l.b16 %v2775
        %v3523 = vunpack.c.h.b16 %v2775
        %v3524 = vunpack.c.l.b16 %v2776
        %v3525 = vunpack.c.h.b16 %v2776
        %v3526 = vunpack.c.l.b16 %v2777
        %v3527 = vunpack.c.h.b16 %v2777
        %v3528 = vunpack.c.l.b16 %v2778
        %v3529 = vunpack.c.h.b16 %v2778
        %v3530 = vunpack.c.l.b16 %v2779
        %v3531 = vunpack.c.h.b16 %v2779
        %v3532 = vunpack.c.l.b16 %v2780
        %v3533 = vunpack.c.h.b16 %v2780
        %v3534 = vunpack.c.l.b16 %v2781
        %v3535 = vunpack.c.h.b16 %v2781
        %v3536 = vunpack.c.l.b16 %v2782
        %v3537 = vunpack.c.h.b16 %v2782
        %v3538 = vunpack.c.l.b16 %v2783
        %v3539 = vunpack.c.h.b16 %v2783
        %v3540 = vunpack.c.l.b16 %v2784
        %v3541 = vunpack.c.h.b16 %v2784
        %v3542 = vunpack.c.l.b16 %v2785
        %v3543 = vunpack.c.h.b16 %v2785
        %v3544 = vunpack.c.l.b16 %v2786
        %v3545 = vunpack.c.h.b16 %v2786
        %v3546 = vunpack.c.l.b16 %v2787
        %v3547 = vunpack.c.h.b16 %v2787
        %v3548 = vunpack.c.l.b16 %v2788
        %v3549 = vunpack.c.h.b16 %v2788
        %v3550 = vunpack.c.l.b16 %v2789
        %v3551 = vunpack.c.h.b16 %v2789
        %v3552 = vunpack.c.l.b16 %v2790
        %v3553 = vunpack.c.h.b16 %v2790
        %v3554 = vunpack.c.l.b16 %v2791
        %v3555 = vunpack.c.h.b16 %v2791
        %v3556 = vunpack.c.l.b16 %v2792
        %v3557 = vunpack.c.h.b16 %v2792
        %v3558 = vunpack.c.l.b16 %v2793
        %v3559 = vunpack.c.h.b16 %v2793
        %v3560 = vunpack.c.l.b16 %v2794
        %v3561 = vunpack.c.h.b16 %v2794
        %v3562 = vunpack.c.l.b16 %v2795
        %v3563 = vunpack.c.h.b16 %v2795
        %v3564 = vunpack.c.l.b16 %v2796
        %v3565 = vunpack.c.h.b16 %v2796
        %v3566 = vunpack.c.l.b16 %v2797
        %v3567 = vunpack.c.h.b16 %v2797
        %v3568 = vunpack.c.l.b16 %v2798
        %v3569 = vunpack.c.h.b16 %v2798
        %v3570 = vunpack.c.l.b16 %v2799
        %v3571 = vunpack.c.h.b16 %v2799
        %v3572 = vunpack.c.l.b16 %v2800
        %v3573 = vunpack.c.h.b16 %v2800
        %v3574 = vunpack.c.l.b16 %v2801
        %v3575 = vunpack.c.h.b16 %v2801
        %v3576 = vunpack.c.l.b16 %v2802
        %v3577 = vunpack.c.h.b16 %v2802
        %v3578 = vunpack.c.l.b16 %v2803
        %v3579 = vunpack.c.h.b16 %v2803
        %v3580 = vunpack.c.l.b16 %v2804
        %v3581 = vunpack.c.h.b16 %v2804
        %v3582 = vunpack.c.l.b16 %v2805
        %v3583 = vunpack.c.h.b16 %v2805
        %v3584 = vunpack.c.l.b16 %v2806
        %v3585 = vunpack.c.h.b16 %v2806
        %v3586 = vunpack.c.l.b16 %v2807
        %v3587 = vunpack.c.h.b16 %v2807
        %v3588 = vunpack.c.l.b16 %v2808
        %v3589 = vunpack.c.h.b16 %v2808
        %v3590 = vunpack.c.l.b16 %v2809
        %v3591 = vunpack.c.h.b16 %v2809
        %v3592 = vunpack.c.l.b16 %v2810
        %v3593 = vunpack.c.h.b16 %v2810
        %v3594 = vunpack.c.l.b16 %v2811
        %v3595 = vunpack.c.h.b16 %v2811
        %v3596 = vunpack.c.l.b16 %v2812
        %v3597 = vunpack.c.h.b16 %v2812
        %v3598 = vunpack.c.l.b16 %v2813
        %v3599 = vunpack.c.h.b16 %v2813
        %v3600 = vunpack.c.l.b16 %v2814
        %v3601 = vunpack.c.h.b16 %v2814
        %v3602 = vunpack.c.l.b16 %v2815
        %v3603 = vunpack.c.h.b16 %v2815
        %v3604 = vunpack.c.l.b16 %v2816
        %v3605 = vunpack.c.h.b16 %v2816
        %v3606 = vunpack.c.l.b16 %v2817
        %v3607 = vunpack.c.h.b16 %v2817
        %v3608 = vunpack.c.l.b16 %v2818
        %v3609 = vunpack.c.h.b16 %v2818
        %v3610 = vunpack.c.l.b16 %v2819
        %v3611 = vunpack.c.h.b16 %v2819
        %v3612 = vunpack.c.l.b16 %v2820
        %v3613 = vunpack.c.h.b16 %v2820
        %v3614 = vunpack.c.l.b16 %v2821
        %v3615 = vunpack.c.h.b16 %v2821
        %v3616 = vunpack.c.l.b16 %v2822
        %v3617 = vunpack.c.h.b16 %v2822
        %v3618 = vunpack.c.l.b16 %v2823
        %v3619 = vunpack.c.h.b16 %v2823
        %v3620 = vunpack.c.l.b16 %v2824
        %v3621 = vunpack.c.h.b16 %v2824
        %v3622 = vunpack.c.l.b16 %v2825
        %v3623 = vunpack.c.h.b16 %v2825
        %v3624 = vunpack.c.l.b16 %v2826
        %v3625 = vunpack.c.h.b16 %v2826
        %v3626 = vunpack.c.l.b16 %v2827
        %v3627 = vunpack.c.h.b16 %v2827
        %v3628 = vunpack.c.l.b16 %v2828
        %v3629 = vunpack.c.h.b16 %v2828
        %v3630 = vunpack.c.l.b16 %v2829
        %v3631 = vunpack.c.h.b16 %v2829
        %v3632 = vunpack.c.l.b16 %v2830
        %v3633 = vunpack.c.h.b16 %v2830
        %v3634 = vunpack.c.l.b16 %v2831
        %v3635 = vunpack.c.h.b16 %v2831
        %v3636 = vunpack.c.l.b16 %v2832
        %v3637 = vunpack.c.h.b16 %v2832
        %v3638 = vunpack.c.l.b16 %v2833
        %v3639 = vunpack.c.h.b16 %v2833
        %v3640 = vunpack.c.l.b16 %v2834
        %v3641 = vunpack.c.h.b16 %v2834
        %v3642 = vunpack.c.l.b16 %v2835
        %v3643 = vunpack.c.h.b16 %v2835
        %v3644 = vunpack.c.l.b16 %v2836
        %v3645 = vunpack.c.h.b16 %v2836
        %v3646 = vunpack.c.l.b16 %v2837
        %v3647 = vunpack.c.h.b16 %v2837
        %v3648 = vunpack.c.l.b16 %v2838
        %v3649 = vunpack.c.h.b16 %v2838
        %v3650 = vunpack.c.l.b16 %v2839
        %v3651 = vunpack.c.h.b16 %v2839
        %v3652 = vunpack.c.l.b16 %v2840
        %v3653 = vunpack.c.h.b16 %v2840
        %v3654 = vunpack.c.l.b16 %v2841
        %v3655 = vunpack.c.h.b16 %v2841
        %v3656 = vunpack.c.l.b16 %v2842
        %v3657 = vunpack.c.h.b16 %v2842
        %v3658 = vunpack.c.l.b16 %v2843
        %v3659 = vunpack.c.h.b16 %v2843
        %v3660 = vunpack.c.l.b16 %v2844
        %v3661 = vunpack.c.h.b16 %v2844
        %v3662 = vunpack.c.l.b16 %v2845
        %v3663 = vunpack.c.h.b16 %v2845
        %v3664 = vunpack.c.l.b16 %v2846
        %v3665 = vunpack.c.h.b16 %v2846
        %v3666 = vunpack.c.l.b16 %v2847
        %v3667 = vunpack.c.h.b16 %v2847
        %v3668 = vunpack.c.l.b16 %v2848
        %v3669 = vunpack.c.h.b16 %v2848
        %v3670 = vunpack.c.l.b16 %v2849
        %v3671 = vunpack.c.h.b16 %v2849
        %v3672 = vunpack.c.l.b16 %v2850
        %v3673 = vunpack.c.h.b16 %v2850
        %v3674 = vunpack.c.l.b16 %v2851
        %v3675 = vunpack.c.h.b16 %v2851
        %v3676 = vunpack.c.l.b16 %v2852
        %v3677 = vunpack.c.h.b16 %v2852
        %v3678 = vunpack.c.l.b16 %v2853
        %v3679 = vunpack.c.h.b16 %v2853
        %v3680 = vunpack.c.l.b16 %v2854
        %v3681 = vunpack.c.h.b16 %v2854
        %v3682 = vunpack.c.l.b16 %v2855
        %v3683 = vunpack.c.h.b16 %v2855
        %v3684 = vunpack.c.l.b16 %v2856
        %v3685 = vunpack.c.h.b16 %v2856
        %v3686 = vunpack.c.l.b16 %v2857
        %v3687 = vunpack.c.h.b16 %v2857
        %v3688 = vunpack.c.l.b16 %v2858
        %v3689 = vunpack.c.h.b16 %v2858
        %v3690 = vunpack.c.l.b16 %v2859
        %v3691 = vunpack.c.h.b16 %v2859
        %v3692 = vunpack.c.l.b16 %v2860
        %v3693 = vunpack.c.h.b16 %v2860
        %v3694 = vunpack.c.l.b16 %v2861
        %v3695 = vunpack.c.h.b16 %v2861
        %v3696 = vunpack.c.l.b16 %v2862
        %v3697 = vunpack.c.h.b16 %v2862
        %v3698 = vunpack.c.l.b16 %v2863
        %v3699 = vunpack.c.h.b16 %v2863
        %v3700 = vunpack.c.l.b16 %v2864
        %v3701 = vunpack.c.h.b16 %v2864
        %v3702 = vunpack.c.l.b16 %v2865
        %v3703 = vunpack.c.h.b16 %v2865
        %v3704 = vunpack.c.l.b16 %v2866
        %v3705 = vunpack.c.h.b16 %v2866
        %v3706 = vunpack.c.l.b16 %v2867
        %v3707 = vunpack.c.h.b16 %v2867
        %v3708 = vunpack.c.l.b16 %v2868
        %v3709 = vunpack.c.h.b16 %v2868
        %v3710 = vunpack.c.l.b16 %v2869
        %v3711 = vunpack.c.h.b16 %v2869
        %v3712 = vunpack.c.l.b16 %v2870
        %v3713 = vunpack.c.h.b16 %v2870
        %v3714 = vunpack.c.l.b16 %v2871
        %v3715 = vunpack.c.h.b16 %v2871
        %v3716 = vunpack.c.l.b16 %v2872
        %v3717 = vunpack.c.h.b16 %v2872
        %v3718 = vunpack.c.l.b16 %v2873
        %v3719 = vunpack.c.h.b16 %v2873
        %v3720 = vunpack.c.l.b16 %v2874
        %v3721 = vunpack.c.h.b16 %v2874
        %v3722 = vunpack.c.l.b16 %v2875
        %v3723 = vunpack.c.h.b16 %v2875
        %v3724 = vunpack.c.l.b16 %v2876
        %v3725 = vunpack.c.h.b16 %v2876
        %v3726 = vunpack.c.l.b16 %v2877
        %v3727 = vunpack.c.h.b16 %v2877
        %v3728 = vunpack.c.l.b16 %v2878
        %v3729 = vunpack.c.h.b16 %v2878
        %v3730 = vunpack.c.l.b16 %v2879
        %v3731 = vunpack.c.h.b16 %v2879
        %v3732 = vunpack.c.l.b16 %v2880
        %v3733 = vunpack.c.h.b16 %v2880
        %v3734 = vunpack.c.l.b16 %v2881
        %v3735 = vunpack.c.h.b16 %v2881
        %v3736 = vunpack.c.l.b16 %v2882
        %v3737 = vunpack.c.h.b16 %v2882
        %v3738 = vunpack.c.l.b16 %v2883
        %v3739 = vunpack.c.h.b16 %v2883
        %v3740 = vunpack.c.l.b16 %v2884
        %v3741 = vunpack.c.h.b16 %v2884
        %v3742 = vunpack.c.l.b16 %v2885
        %v3743 = vunpack.c.h.b16 %v2885
        %v3744 = vunpack.c.l.b16 %v2886
        %v3745 = vunpack.c.h.b16 %v2886
        %v3746 = vunpack.c.l.b16 %v2887
        %v3747 = vunpack.c.h.b16 %v2887
        %v3748 = vunpack.c.l.b16 %v2888
        %v3749 = vunpack.c.h.b16 %v2888
        %v3750 = vunpack.c.l.b16 %v2889
        %v3751 = vunpack.c.h.b16 %v2889
        %v3752 = vunpack.c.l.b16 %v2890
        %v3753 = vunpack.c.h.b16 %v2890
        %v3754 = vunpack.c.l.b16 %v2891
        %v3755 = vunpack.c.h.b16 %v2891
        %v3756 = vunpack.c.l.b16 %v2892
        %v3757 = vunpack.c.h.b16 %v2892
        %v3758 = vunpack.c.l.b16 %v2893
        %v3759 = vunpack.c.h.b16 %v2893
        %v3760 = vunpack.c.l.b16 %v2894
        %v3761 = vunpack.c.h.b16 %v2894
        %v3762 = vunpack.c.l.b16 %v2895
        %v3763 = vunpack.c.h.b16 %v2895
        %v3764 = vunpack.c.l.b16 %v2896
        %v3765 = vunpack.c.h.b16 %v2896
        %v3766 = vunpack.c.l.b16 %v2897
        %v3767 = vunpack.c.h.b16 %v2897
        %v3768 = vunpack.c.l.b16 %v2898
        %v3769 = vunpack.c.h.b16 %v2898
        %v3770 = vunpack.c.l.b16 %v2899
        %v3771 = vunpack.c.h.b16 %v2899
        %v3772 = vunpack.c.l.b16 %v2900
        %v3773 = vunpack.c.h.b16 %v2900
        %v3774 = vunpack.c.l.b16 %v2901
        %v3775 = vunpack.c.h.b16 %v2901
        %v3776 = vunpack.c.l.b16 %v2902
        %v3777 = vunpack.c.h.b16 %v2902
        %v3778 = vunpack.c.l.b16 %v2903
        %v3779 = vunpack.c.h.b16 %v2903
        %v3780 = vunpack.c.l.b16 %v2904
        %v3781 = vunpack.c.h.b16 %v2904
        %v3782 = vunpack.c.l.b16 %v2905
        %v3783 = vunpack.c.h.b16 %v2905
        %v3784 = vpack.c.b16 %v3214, %v3208
        %v3785 = vpack.c.b16 %v3215, %v3209
        %v3786 = vpack.c.b16 %v3216, %v3210
        %v3787 = vpack.c.b16 %v3217, %v3211
        %v3788 = vpack.c.b16 %v3218, %v3212
        %v3789 = vpack.c.b16 %v3219, %v3213
        %v3790 = vpack.c.b16 %v3226, %v3220
        %v3791 = vpack.c.b16 %v3227, %v3221
        %v3792 = vpack.c.b16 %v3228, %v3222
        %v3793 = vpack.c.b16 %v3229, %v3223
        %v3794 = vpack.c.b16 %v3230, %v3224
        %v3795 = vpack.c.b16 %v3231, %v3225
        %v3796 = vpack.c.b16 %v3238, %v3232
        %v3797 = vpack.c.b16 %v3239, %v3233
        %v3798 = vpack.c.b16 %v3240, %v3234
        %v3799 = vpack.c.b16 %v3241, %v3235
        %v3800 = vpack.c.b16 %v3242, %v3236
        %v3801 = vpack.c.b16 %v3243, %v3237
        %v3802 = vpack.c.b16 %v3250, %v3244
        %v3803 = vpack.c.b16 %v3251, %v3245
        %v3804 = vpack.c.b16 %v3252, %v3246
        %v3805 = vpack.c.b16 %v3253, %v3247
        %v3806 = vpack.c.b16 %v3254, %v3248
        %v3807 = vpack.c.b16 %v3255, %v3249
        %v3808 = vpack.c.b16 %v3262, %v3256
        %v3809 = vpack.c.b16 %v3263, %v3257
        %v3810 = vpack.c.b16 %v3264, %v3258
        %v3811 = vpack.c.b16 %v3265, %v3259
        %v3812 = vpack.c.b16 %v3266, %v3260
        %v3813 = vpack.c.b16 %v3267, %v3261
        %v3814 = vpack.c.b16 %v3274, %v3268
        %v3815 = vpack.c.b16 %v3275, %v3269
        %v3816 = vpack.c.b16 %v3276, %v3270
        %v3817 = vpack.c.b16 %v3277, %v3271
        %v3818 = vpack.c.b16 %v3278, %v3272
        %v3819 = vpack.c.b16 %v3279, %v3273
        %v3820 = vpack.c.b16 %v3286, %v3280
        %v3821 = vpack.c.b16 %v3287, %v3281
        %v3822 = vpack.c.b16 %v3288, %v3282
        %v3823 = vpack.c.b16 %v3289, %v3283
        %v3824 = vpack.c.b16 %v3290, %v3284
        %v3825 = vpack.c.b16 %v3291, %v3285
        %v3826 = vpack.c.b16 %v3298, %v3292
        %v3827 = vpack.c.b16 %v3299, %v3293
        %v3828 = vpack.c.b16 %v3300, %v3294
        %v3829 = vpack.c.b16 %v3301, %v3295
        %v3830 = vpack.c.b16 %v3302, %v3296
        %v3831 = vpack.c.b16 %v3303, %v3297
        %v3832 = vpack.c.b16 %v3310, %v3304
        %v3833 = vpack.c.b16 %v3311, %v3305
        %v3834 = vpack.c.b16 %v3312, %v3306
        %v3835 = vpack.c.b16 %v3313, %v3307
        %v3836 = vpack.c.b16 %v3314, %v3308
        %v3837 = vpack.c.b16 %v3315, %v3309
        %v3838 = vpack.c.b16 %v3322, %v3316
        %v3839 = vpack.c.b16 %v3323, %v3317
        %v3840 = vpack.c.b16 %v3324, %v3318
        %v3841 = vpack.c.b16 %v3325, %v3319
        %v3842 = vpack.c.b16 %v3326, %v3320
        %v3843 = vpack.c.b16 %v3327, %v3321
        %v3844 = vpack.c.b16 %v3334, %v3328
        %v3845 = vpack.c.b16 %v3335, %v3329
        %v3846 = vpack.c.b16 %v3336, %v3330
        %v3847 = vpack.c.b16 %v3337, %v3331
        %v3848 = vpack.c.b16 %v3338, %v3332
        %v3849 = vpack.c.b16 %v3339, %v3333
        %v3850 = vpack.c.b16 %v3346, %v3340
        %v3851 = vpack.c.b16 %v3347, %v3341
        %v3852 = vpack.c.b16 %v3348, %v3342
        %v3853 = vpack.c.b16 %v3349, %v3343
        %v3854 = vpack.c.b16 %v3350, %v3344
        %v3855 = vpack.c.b16 %v3351, %v3345
        %v3856 = vpack.c.b16 %v3358, %v3352
        %v3857 = vpack.c.b16 %v3359, %v3353
        %v3858 = vpack.c.b16 %v3360, %v3354
        %v3859 = vpack.c.b16 %v3361, %v3355
        %v3860 = vpack.c.b16 %v3362, %v3356
        %v3861 = vpack.c.b16 %v3363, %v3357
        %v3862 = vpack.c.b16 %v3370, %v3364
        %v3863 = vpack.c.b16 %v3371, %v3365
        %v3864 = vpack.c.b16 %v3372, %v3366
        %v3865 = vpack.c.b16 %v3373, %v3367
        %v3866 = vpack.c.b16 %v3374, %v3368
        %v3867 = vpack.c.b16 %v3375, %v3369
        %v3868 = vpack.c.b16 %v3382, %v3376
        %v3869 = vpack.c.b16 %v3383, %v3377
        %v3870 = vpack.c.b16 %v3384, %v3378
        %v3871 = vpack.c.b16 %v3385, %v3379
        %v3872 = vpack.c.b16 %v3386, %v3380
        %v3873 = vpack.c.b16 %v3387, %v3381
        %v3874 = vpack.c.b16 %v3394, %v3388
        %v3875 = vpack.c.b16 %v3395, %v3389
        %v3876 = vpack.c.b16 %v3396, %v3390
        %v3877 = vpack.c.b16 %v3397, %v3391
        %v3878 = vpack.c.b16 %v3398, %v3392
        %v3879 = vpack.c.b16 %v3399, %v3393
        %v3880 = vpack.c.b16 %v3406, %v3400
        %v3881 = vpack.c.b16 %v3407, %v3401
        %v3882 = vpack.c.b16 %v3408, %v3402
        %v3883 = vpack.c.b16 %v3409, %v3403
        %v3884 = vpack.c.b16 %v3410, %v3404
        %v3885 = vpack.c.b16 %v3411, %v3405
        %v3886 = vpack.c.b16 %v3418, %v3412
        %v3887 = vpack.c.b16 %v3419, %v3413
        %v3888 = vpack.c.b16 %v3420, %v3414
        %v3889 = vpack.c.b16 %v3421, %v3415
        %v3890 = vpack.c.b16 %v3422, %v3416
        %v3891 = vpack.c.b16 %v3423, %v3417
        %v3892 = vpack.c.b16 %v3430, %v3424
        %v3893 = vpack.c.b16 %v3431, %v3425
        %v3894 = vpack.c.b16 %v3432, %v3426
        %v3895 = vpack.c.b16 %v3433, %v3427
        %v3896 = vpack.c.b16 %v3434, %v3428
        %v3897 = vpack.c.b16 %v3435, %v3429
        %v3898 = vpack.c.b16 %v3442, %v3436
        %v3899 = vpack.c.b16 %v3443, %v3437
        %v3900 = vpack.c.b16 %v3444, %v3438
        %v3901 = vpack.c.b16 %v3445, %v3439
        %v3902 = vpack.c.b16 %v3446, %v3440
        %v3903 = vpack.c.b16 %v3447, %v3441
        %v3904 = vpack.c.b16 %v3454, %v3448
        %v3905 = vpack.c.b16 %v3455, %v3449
        %v3906 = vpack.c.b16 %v3456, %v3450
        %v3907 = vpack.c.b16 %v3457, %v3451
        %v3908 = vpack.c.b16 %v3458, %v3452
        %v3909 = vpack.c.b16 %v3459, %v3453
        %v3910 = vpack.c.b16 %v3466, %v3460
        %v3911 = vpack.c.b16 %v3467, %v3461
        %v3912 = vpack.c.b16 %v3468, %v3462
        %v3913 = vpack.c.b16 %v3469, %v3463
        %v3914 = vpack.c.b16 %v3470, %v3464
        %v3915 = vpack.c.b16 %v3471, %v3465
        %v3916 = vpack.c.b16 %v3478, %v3472
        %v3917 = vpack.c.b16 %v3479, %v3473
        %v3918 = vpack.c.b16 %v3480, %v3474
        %v3919 = vpack.c.b16 %v3481, %v3475
        %v3920 = vpack.c.b16 %v3482, %v3476
        %v3921 = vpack.c.b16 %v3483, %v3477
        %v3922 = vpack.c.b16 %v3490, %v3484
        %v3923 = vpack.c.b16 %v3491, %v3485
        %v3924 = vpack.c.b16 %v3492, %v3486
        %v3925 = vpack.c.b16 %v3493, %v3487
        %v3926 = vpack.c.b16 %v3494, %v3488
        %v3927 = vpack.c.b16 %v3495, %v3489
        %v3928 = vpack.c.b16 %v3502, %v3496
        %v3929 = vpack.c.b16 %v3503, %v3497
        %v3930 = vpack.c.b16 %v3504, %v3498
        %v3931 = vpack.c.b16 %v3505, %v3499
        %v3932 = vpack.c.b16 %v3506, %v3500
        %v3933 = vpack.c.b16 %v3507, %v3501
        %v3934 = vpack.c.b16 %v3514, %v3508
        %v3935 = vpack.c.b16 %v3515, %v3509
        %v3936 = vpack.c.b16 %v3516, %v3510
        %v3937 = vpack.c.b16 %v3517, %v3511
        %v3938 = vpack.c.b16 %v3518, %v3512
        %v3939 = vpack.c.b16 %v3519, %v3513
        %v3940 = vpack.c.b16 %v3526, %v3520
        %v3941 = vpack.c.b16 %v3527, %v3521
        %v3942 = vpack.c.b16 %v3528, %v3522
        %v3943 = vpack.c.b16 %v3529, %v3523
        %v3944 = vpack.c.b16 %v3530, %v3524
        %v3945 = vpack.c.b16 %v3531, %v3525
        %v3946 = vpack.c.b16 %v3538, %v3532
        %v3947 = vpack.c.b16 %v3539, %v3533
        %v3948 = vpack.c.b16 %v3540, %v3534
        %v3949 = vpack.c.b16 %v3541, %v3535
        %v3950 = vpack.c.b16 %v3542, %v3536
        %v3951 = vpack.c.b16 %v3543, %v3537
        %v3952 = vpack.c.b16 %v3550, %v3544
        %v3953 = vpack.c.b16 %v3551, %v3545
        %v3954 = vpack.c.b16 %v3552, %v3546
        %v3955 = vpack.c.b16 %v3553, %v3547
        %v3956 = vpack.c.b16 %v3554, %v3548
        %v3957 = vpack.c.b16 %v3555, %v3549
        %v3958 = vpack.c.b16 %v3562, %v3556
        %v3959 = vpack.c.b16 %v3563, %v3557
        %v3960 = vpack.c.b16 %v3564, %v3558
        %v3961 = vpack.c.b16 %v3565, %v3559
        %v3962 = vpack.c.b16 %v3566, %v3560
        %v3963 = vpack.c.b16 %v3567, %v3561
        %v3964 = vpack.c.b16 %v3574, %v3568
        %v3965 = vpack.c.b16 %v3575, %v3569
        %v3966 = vpack.c.b16 %v3576, %v3570
        %v3967 = vpack.c.b16 %v3577, %v3571
        %v3968 = vpack.c.b16 %v3578, %v3572
        %v3969 = vpack.c.b16 %v3579, %v3573
        %v3970 = vpack.c.b16 %v3586, %v3580
        %v3971 = vpack.c.b16 %v3587, %v3581
        %v3972 = vpack.c.b16 %v3588, %v3582
        %v3973 = vpack.c.b16 %v3589, %v3583
        %v3974 = vpack.c.b16 %v3590, %v3584
        %v3975 = vpack.c.b16 %v3591, %v3585
        %v3976 = vpack.c.b16 %v3598, %v3592
        %v3977 = vpack.c.b16 %v3599, %v3593
        %v3978 = vpack.c.b16 %v3600, %v3594
        %v3979 = vpack.c.b16 %v3601, %v3595
        %v3980 = vpack.c.b16 %v3602, %v3596
        %v3981 = vpack.c.b16 %v3603, %v3597
        %v3982 = vpack.c.b16 %v3610, %v3604
        %v3983 = vpack.c.b16 %v3611, %v3605
        %v3984 = vpack.c.b16 %v3612, %v3606
        %v3985 = vpack.c.b16 %v3613, %v3607
        %v3986 = vpack.c.b16 %v3614, %v3608
        %v3987 = vpack.c.b16 %v3615, %v3609
        %v3988 = vpack.c.b16 %v3622, %v3616
        %v3989 = vpack.c.b16 %v3623, %v3617
        %v3990 = vpack.c.b16 %v3624, %v3618
        %v3991 = vpack.c.b16 %v3625, %v3619
        %v3992 = vpack.c.b16 %v3626, %v3620
        %v3993 = vpack.c.b16 %v3627, %v3621
        %v3994 = vpack.c.b16 %v3634, %v3628
        %v3995 = vpack.c.b16 %v3635, %v3629
        %v3996 = vpack.c.b16 %v3636, %v3630
        %v3997 = vpack.c.b16 %v3637, %v3631
        %v3998 = vpack.c.b16 %v3638, %v3632
        %v3999 = vpack.c.b16 %v3639, %v3633
        %v4000 = vpack.c.b16 %v3646, %v3640
        %v4001 = vpack.c.b16 %v3647, %v3641
        %v4002 = vpack.c.b16 %v3648, %v3642
        %v4003 = vpack.c.b16 %v3649, %v3643
        %v4004 = vpack.c.b16 %v3650, %v3644
        %v4005 = vpack.c.b16 %v3651, %v3645
        %v4006 = vpack.c.b16 %v3658, %v3652
        %v4007 = vpack.c.b16 %v3659, %v3653
        %v4008 = vpack.c.b16 %v3660, %v3654
        %v4009 = vpack.c.b16 %v3661, %v3655
        %v4010 = vpack.c.b16 %v3662, %v3656
        %v4011 = vpack.c.b16 %v3663, %v3657
        %v4012 = vpack.c.b16 %v3670, %v3664
        %v4013 = vpack.c.b16 %v3671, %v3665
        %v4014 = vpack.c.b16 %v3672, %v3666
        %v4015 = vpack.c.b16 %v3673, %v3667
        %v4016 = vpack.c.b16 %v3674, %v3668
        %v4017 = vpack.c.b16 %v3675, %v3669
        %v4018 = vpack.c.b16 %v3682, %v3676
        %v4019 = vpack.c.b16 %v3683, %v3677
        %v4020 = vpack.c.b16 %v3684, %v3678
        %v4021 = vpack.c.b16 %v3685, %v3679
        %v4022 = vpack.c.b16 %v3686, %v3680
        %v4023 = vpack.c.b16 %v3687, %v3681
        %v4024 = vpack.c.b16 %v3694, %v3688
        %v4025 = vpack.c.b16 %v3695, %v3689
        %v4026 = vpack.c.b16 %v3696, %v3690
        %v4027 = vpack.c.b16 %v3697, %v3691
        %v4028 = vpack.c.b16 %v3698, %v3692
        %v4029 = vpack.c.b16 %v3699, %v3693
        %v4030 = vpack.c.b16 %v3706, %v3700
        %v4031 = vpack.c.b16 %v3707, %v3701
        %v4032 = vpack.c.b16 %v3708, %v3702
        %v4033 = vpack.c.b16 %v3709, %v3703
        %v4034 = vpack.c.b16 %v3710, %v3704
        %v4035 = vpack.c.b16 %v3711, %v3705
        %v4036 = vpack.c.b16 %v3718, %v3712
        %v4037 = vpack.c.b16 %v3719, %v3713
        %v4038 = vpack.c.b16 %v3720, %v3714
        %v4039 = vpack.c.b16 %v3721, %v3715
        %v4040 = vpack.c.b16 %v3722, %v3716
        %v4041 = vpack.c.b16 %v3723, %v3717
        %v4042 = vpack.c.b16 %v3730, %v3724
        %v4043 = vpack.c.b16 %v3731, %v3725
        %v4044 = vpack.c.b16 %v3732, %v3726
        %v4045 = vpack.c.b16 %v3733, %v3727
        %v4046 = vpack.c.b16 %v3734, %v3728
        %v4047 = vpack.c.b16 %v3735, %v3729
        %v4048 = vpack.c.b16 %v3742, %v3736
        %v4049 = vpack.c.b16 %v3743, %v3737
        %v4050 = vpack.c.b16 %v3744, %v3738
        %v4051 = vpack.c.b16 %v3745, %v3739
        %v4052 = vpack.c.b16 %v3746, %v3740
        %v4053 = vpack.c.b16 %v3747, %v3741
        %v4054 = vpack.c.b16 %v3754, %v3748
        %v4055 = vpack.c.b16 %v3755, %v3749
        %v4056 = vpack.c.b16 %v3756, %v3750
        %v4057 = vpack.c.b16 %v3757, %v3751
        %v4058 = vpack.c.b16 %v3758, %v3752
        %v4059 = vpack.c.b16 %v3759, %v3753
        %v4060 = vpack.c.b16 %v3766, %v3760
        %v4061 = vpack.c.b16 %v3767, %v3761
        %v4062 = vpack.c.b16 %v3768, %v3762
        %v4063 = vpack.c.b16 %v3769, %v3763
        %v4064 = vpack.c.b16 %v3770, %v3764
        %v4065 = vpack.c.b16 %v3771, %v3765
        %v4066 = vpack.c.b16 %v3778, %v3772
        %v4067 = vpack.c.b16 %v3779, %v3773
        %v4068 = vpack.c.b16 %v3780, %v3774
        %v4069 = vpack.c.b16 %v3781, %v3775
        %v4070 = vpack.c.b16 %v3782, %v3776
        %v4071 = vpack.c.b16 %v3783, %v3777
        %4360 = vmatpush.bf16.msra.mxu0 %v3826
        %4361 = vmatpush.bf16.msra.mxu0 %v3820
        %4362 = vmatpush.bf16.msra.mxu0 %v3814
        %4363 = vmatpush.bf16.msra.mxu0 %v3808
        %4364 = vmatpush.bf16.msra.mxu0 %v3802
        %4365 = vmatpush.bf16.msra.mxu0 %v3796
        %4366 = vmatpush.bf16.msra.mxu0 %v3790
        %4367 = vmatpush.bf16.msra.mxu0 %v3784
        %4368 = vmatmul.bf16.gmra.mxu0 %v2612
        %v4369 = vpop.f32.mrf.mxu0
        %v4370 = vadd.f32 %v2908, %v4369
        %v4371 = vpop.f32.mrf.mxu0
        %4372 = vdwg.mxu0
        %4373 = vmatpush.bf16.msra.mxu0 %v3874
        %4374 = vmatpush.bf16.msra.mxu0 %v3868
        %4375 = vmatpush.bf16.msra.mxu0 %v3862
        %4376 = vmatpush.bf16.msra.mxu0 %v3856
        %4377 = vmatpush.bf16.msra.mxu0 %v3850
        %4378 = vmatpush.bf16.msra.mxu0 %v3844
        %4379 = vmatpush.bf16.msra.mxu0 %v3838
        %4380 = vmatpush.bf16.msra.mxu0 %v3832
        %4381 = vmatmul.bf16.gmra.mxu0 %v2613
        %v4382 = vpop.f32.mrf.mxu0
        %v4383 = vadd.f32 %v4370, %v4382
        %v4384 = vpop.f32.mrf.mxu0
        %4385 = vdwg.mxu0
        %4386 = vmatpush.bf16.msra.mxu0 %v3922
        %4387 = vmatpush.bf16.msra.mxu0 %v3916
        %4388 = vmatpush.bf16.msra.mxu0 %v3910
        %4389 = vmatpush.bf16.msra.mxu0 %v3904
        %4390 = vmatpush.bf16.msra.mxu0 %v3898
        %4391 = vmatpush.bf16.msra.mxu0 %v3892
        %4392 = vmatpush.bf16.msra.mxu0 %v3886
        %4393 = vmatpush.bf16.msra.mxu0 %v3880
        %4394 = vmatmul.bf16.gmra.mxu0 %v2614
        %v4395 = vpop.f32.mrf.mxu0
        %v4396 = vadd.f32 %v4383, %v4395
        %v4397 = vpop.f32.mrf.mxu0
        %4398 = vdwg.mxu0
        %4399 = vmatpush.bf16.msra.mxu0 %v3970
        %4400 = vmatpush.bf16.msra.mxu0 %v3964
        %4401 = vmatpush.bf16.msra.mxu0 %v3958
        %4402 = vmatpush.bf16.msra.mxu0 %v3952
        %4403 = vmatpush.bf16.msra.mxu0 %v3946
        %4404 = vmatpush.bf16.msra.mxu0 %v3940
        %4405 = vmatpush.bf16.msra.mxu0 %v3934
        %4406 = vmatpush.bf16.msra.mxu0 %v3928
        %4407 = vmatmul.bf16.gmra.mxu0 %v2615
        %v4408 = vpop.f32.mrf.mxu0
        %v4409 = vadd.f32 %v4396, %v4408
        %v4410 = vpop.f32.mrf.mxu0
        %4411 = vdwg.mxu0
        %4412 = vmatpush.bf16.msra.mxu0 %v4018
        %4413 = vmatpush.bf16.msra.mxu0 %v4012
        %4414 = vmatpush.bf16.msra.mxu0 %v4006
        %4415 = vmatpush.bf16.msra.mxu0 %v4000
        %4416 = vmatpush.bf16.msra.mxu0 %v3994
        %4417 = vmatpush.bf16.msra.mxu0 %v3988
        %4418 = vmatpush.bf16.msra.mxu0 %v3982
        %4419 = vmatpush.bf16.msra.mxu0 %v3976
        %4420 = vmatmul.bf16.gmra.mxu0 %v2616
        %v4421 = vpop.f32.mrf.mxu0
        %v4422 = vadd.f32 %v4409, %v4421
        %v4423 = vpop.f32.mrf.mxu0
        %4424 = vdwg.mxu0
        %4425 = vmatpush.bf16.msra.mxu0 %v4066
        %4426 = vmatpush.bf16.msra.mxu0 %v4060
        %4427 = vmatpush.bf16.msra.mxu0 %v4054
        %4428 = vmatpush.bf16.msra.mxu0 %v4048
        %4429 = vmatpush.bf16.msra.mxu0 %v4042
        %4430 = vmatpush.bf16.msra.mxu0 %v4036
        %4431 = vmatpush.bf16.msra.mxu0 %v4030
        %4432 = vmatpush.bf16.msra.mxu0 %v4024
        %4433 = vmatmul.bf16.gmra.mxu0 %v2617
        %v4434 = vpop.f32.mrf.mxu0
        %v4435 = vadd.f32 %v4422, %v4434
        %v4436 = vpop.f32.mrf.mxu0
        %4437 = vdwg.mxu0
        %4438 = vmatpush.bf16.msra.mxu0 %v3827
        %4439 = vmatpush.bf16.msra.mxu0 %v3821
        %4440 = vmatpush.bf16.msra.mxu0 %v3815
        %4441 = vmatpush.bf16.msra.mxu0 %v3809
        %4442 = vmatpush.bf16.msra.mxu0 %v3803
        %4443 = vmatpush.bf16.msra.mxu0 %v3797
        %4444 = vmatpush.bf16.msra.mxu0 %v3791
        %4445 = vmatpush.bf16.msra.mxu0 %v3785
        %4446 = vmatmul.bf16.gmra.mxu0 %v2612
        %v4447 = vpop.f32.mrf.mxu0
        %v4448 = vadd.f32 %v2909, %v4447
        %v4449 = vpop.f32.mrf.mxu0
        %4450 = vdwg.mxu0
        %4451 = vmatpush.bf16.msra.mxu0 %v3875
        %4452 = vmatpush.bf16.msra.mxu0 %v3869
        %4453 = vmatpush.bf16.msra.mxu0 %v3863
        %4454 = vmatpush.bf16.msra.mxu0 %v3857
        %4455 = vmatpush.bf16.msra.mxu0 %v3851
        %4456 = vmatpush.bf16.msra.mxu0 %v3845
        %4457 = vmatpush.bf16.msra.mxu0 %v3839
        %4458 = vmatpush.bf16.msra.mxu0 %v3833
        %4459 = vmatmul.bf16.gmra.mxu0 %v2613
        %v4460 = vpop.f32.mrf.mxu0
        %v4461 = vadd.f32 %v4448, %v4460
        %v4462 = vpop.f32.mrf.mxu0
        %4463 = vdwg.mxu0
        %4464 = vmatpush.bf16.msra.mxu0 %v3923
        %4465 = vmatpush.bf16.msra.mxu0 %v3917
        %4466 = vmatpush.bf16.msra.mxu0 %v3911
        %4467 = vmatpush.bf16.msra.mxu0 %v3905
        %4468 = vmatpush.bf16.msra.mxu0 %v3899
        %4469 = vmatpush.bf16.msra.mxu0 %v3893
        %4470 = vmatpush.bf16.msra.mxu0 %v3887
        %4471 = vmatpush.bf16.msra.mxu0 %v3881
        %4472 = vmatmul.bf16.gmra.mxu0 %v2614
        %v4473 = vpop.f32.mrf.mxu0
        %v4474 = vadd.f32 %v4461, %v4473
        %v4475 = vpop.f32.mrf.mxu0
        %4476 = vdwg.mxu0
        %4477 = vmatpush.bf16.msra.mxu0 %v3971
        %4478 = vmatpush.bf16.msra.mxu0 %v3965
        %4479 = vmatpush.bf16.msra.mxu0 %v3959
        %4480 = vmatpush.bf16.msra.mxu0 %v3953
        %4481 = vmatpush.bf16.msra.mxu0 %v3947
        %4482 = vmatpush.bf16.msra.mxu0 %v3941
        %4483 = vmatpush.bf16.msra.mxu0 %v3935
        %4484 = vmatpush.bf16.msra.mxu0 %v3929
        %4485 = vmatmul.bf16.gmra.mxu0 %v2615
        %v4486 = vpop.f32.mrf.mxu0
        %v4487 = vadd.f32 %v4474, %v4486
        %v4488 = vpop.f32.mrf.mxu0
        %4489 = vdwg.mxu0
        %4490 = vmatpush.bf16.msra.mxu0 %v4019
        %4491 = vmatpush.bf16.msra.mxu0 %v4013
        %4492 = vmatpush.bf16.msra.mxu0 %v4007
        %4493 = vmatpush.bf16.msra.mxu0 %v4001
        %4494 = vmatpush.bf16.msra.mxu0 %v3995
        %4495 = vmatpush.bf16.msra.mxu0 %v3989
        %4496 = vmatpush.bf16.msra.mxu0 %v3983
        %4497 = vmatpush.bf16.msra.mxu0 %v3977
        %4498 = vmatmul.bf16.gmra.mxu0 %v2616
        %v4499 = vpop.f32.mrf.mxu0
        %v4500 = vadd.f32 %v4487, %v4499
        %v4501 = vpop.f32.mrf.mxu0
        %4502 = vdwg.mxu0
        %4503 = vmatpush.bf16.msra.mxu0 %v4067
        %4504 = vmatpush.bf16.msra.mxu0 %v4061
        %4505 = vmatpush.bf16.msra.mxu0 %v4055
        %4506 = vmatpush.bf16.msra.mxu0 %v4049
        %4507 = vmatpush.bf16.msra.mxu0 %v4043
        %4508 = vmatpush.bf16.msra.mxu0 %v4037
        %4509 = vmatpush.bf16.msra.mxu0 %v4031
        %4510 = vmatpush.bf16.msra.mxu0 %v4025
        %4511 = vmatmul.bf16.gmra.mxu0 %v2617
        %v4512 = vpop.f32.mrf.mxu0
        %v4513 = vadd.f32 %v4500, %v4512
        %v4514 = vpop.f32.mrf.mxu0
        %4515 = vdwg.mxu0
        %4516 = vmatpush.bf16.msra.mxu0 %v3828
        %4517 = vmatpush.bf16.msra.mxu0 %v3822
        %4518 = vmatpush.bf16.msra.mxu0 %v3816
        %4519 = vmatpush.bf16.msra.mxu0 %v3810
        %4520 = vmatpush.bf16.msra.mxu0 %v3804
        %4521 = vmatpush.bf16.msra.mxu0 %v3798
        %4522 = vmatpush.bf16.msra.mxu0 %v3792
        %4523 = vmatpush.bf16.msra.mxu0 %v3786
        %4524 = vmatmul.bf16.gmra.mxu0 %v2612
        %v4525 = vpop.f32.mrf.mxu0
        %v4526 = vadd.f32 %v2910, %v4525
        %v4527 = vpop.f32.mrf.mxu0
        %4528 = vdwg.mxu0
        %4529 = vmatpush.bf16.msra.mxu0 %v3876
        %4530 = vmatpush.bf16.msra.mxu0 %v3870
        %4531 = vmatpush.bf16.msra.mxu0 %v3864
        %4532 = vmatpush.bf16.msra.mxu0 %v3858
        %4533 = vmatpush.bf16.msra.mxu0 %v3852
        %4534 = vmatpush.bf16.msra.mxu0 %v3846
        %4535 = vmatpush.bf16.msra.mxu0 %v3840
        %4536 = vmatpush.bf16.msra.mxu0 %v3834
        %4537 = vmatmul.bf16.gmra.mxu0 %v2613
        %v4538 = vpop.f32.mrf.mxu0
        %v4539 = vadd.f32 %v4526, %v4538
        %v4540 = vpop.f32.mrf.mxu0
        %4541 = vdwg.mxu0
        %4542 = vmatpush.bf16.msra.mxu0 %v3924
        %4543 = vmatpush.bf16.msra.mxu0 %v3918
        %4544 = vmatpush.bf16.msra.mxu0 %v3912
        %4545 = vmatpush.bf16.msra.mxu0 %v3906
        %4546 = vmatpush.bf16.msra.mxu0 %v3900
        %4547 = vmatpush.bf16.msra.mxu0 %v3894
        %4548 = vmatpush.bf16.msra.mxu0 %v3888
        %4549 = vmatpush.bf16.msra.mxu0 %v3882
        %4550 = vmatmul.bf16.gmra.mxu0 %v2614
        %v4551 = vpop.f32.mrf.mxu0
        %v4552 = vadd.f32 %v4539, %v4551
        %v4553 = vpop.f32.mrf.mxu0
        %4554 = vdwg.mxu0
        %4555 = vmatpush.bf16.msra.mxu0 %v3972
        %4556 = vmatpush.bf16.msra.mxu0 %v3966
        %4557 = vmatpush.bf16.msra.mxu0 %v3960
        %4558 = vmatpush.bf16.msra.mxu0 %v3954
        %4559 = vmatpush.bf16.msra.mxu0 %v3948
        %4560 = vmatpush.bf16.msra.mxu0 %v3942
        %4561 = vmatpush.bf16.msra.mxu0 %v3936
        %4562 = vmatpush.bf16.msra.mxu0 %v3930
        %4563 = vmatmul.bf16.gmra.mxu0 %v2615
        %v4564 = vpop.f32.mrf.mxu0
        %v4565 = vadd.f32 %v4552, %v4564
        %v4566 = vpop.f32.mrf.mxu0
        %4567 = vdwg.mxu0
        %4568 = vmatpush.bf16.msra.mxu0 %v4020
        %4569 = vmatpush.bf16.msra.mxu0 %v4014
        %4570 = vmatpush.bf16.msra.mxu0 %v4008
        %4571 = vmatpush.bf16.msra.mxu0 %v4002
        %4572 = vmatpush.bf16.msra.mxu0 %v3996
        %4573 = vmatpush.bf16.msra.mxu0 %v3990
        %4574 = vmatpush.bf16.msra.mxu0 %v3984
        %4575 = vmatpush.bf16.msra.mxu0 %v3978
        %4576 = vmatmul.bf16.gmra.mxu0 %v2616
        %v4577 = vpop.f32.mrf.mxu0
        %v4578 = vadd.f32 %v4565, %v4577
        %v4579 = vpop.f32.mrf.mxu0
        %4580 = vdwg.mxu0
        %4581 = vmatpush.bf16.msra.mxu0 %v4068
        %4582 = vmatpush.bf16.msra.mxu0 %v4062
        %4583 = vmatpush.bf16.msra.mxu0 %v4056
        %4584 = vmatpush.bf16.msra.mxu0 %v4050
        %4585 = vmatpush.bf16.msra.mxu0 %v4044
        %4586 = vmatpush.bf16.msra.mxu0 %v4038
        %4587 = vmatpush.bf16.msra.mxu0 %v4032
        %4588 = vmatpush.bf16.msra.mxu0 %v4026
        %4589 = vmatmul.bf16.gmra.mxu0 %v2617
        %v4590 = vpop.f32.mrf.mxu0
        %v4591 = vadd.f32 %v4578, %v4590
        %v4592 = vpop.f32.mrf.mxu0
        %4593 = vdwg.mxu0
        %4594 = vmatpush.bf16.msra.mxu0 %v3829
        %4595 = vmatpush.bf16.msra.mxu0 %v3823
        %4596 = vmatpush.bf16.msra.mxu0 %v3817
        %4597 = vmatpush.bf16.msra.mxu0 %v3811
        %4598 = vmatpush.bf16.msra.mxu0 %v3805
        %4599 = vmatpush.bf16.msra.mxu0 %v3799
        %4600 = vmatpush.bf16.msra.mxu0 %v3793
        %4601 = vmatpush.bf16.msra.mxu0 %v3787
        %4602 = vmatmul.bf16.gmra.mxu0 %v2612
        %v4603 = vpop.f32.mrf.mxu0
        %v4604 = vadd.f32 %v2911, %v4603
        %v4605 = vpop.f32.mrf.mxu0
        %4606 = vdwg.mxu0
        %4607 = vmatpush.bf16.msra.mxu0 %v3877
        %4608 = vmatpush.bf16.msra.mxu0 %v3871
        %4609 = vmatpush.bf16.msra.mxu0 %v3865
        %4610 = vmatpush.bf16.msra.mxu0 %v3859
        %4611 = vmatpush.bf16.msra.mxu0 %v3853
        %4612 = vmatpush.bf16.msra.mxu0 %v3847
        %4613 = vmatpush.bf16.msra.mxu0 %v3841
        %4614 = vmatpush.bf16.msra.mxu0 %v3835
        %4615 = vmatmul.bf16.gmra.mxu0 %v2613
        %v4616 = vpop.f32.mrf.mxu0
        %v4617 = vadd.f32 %v4604, %v4616
        %v4618 = vpop.f32.mrf.mxu0
        %4619 = vdwg.mxu0
        %4620 = vmatpush.bf16.msra.mxu0 %v3925
        %4621 = vmatpush.bf16.msra.mxu0 %v3919
        %4622 = vmatpush.bf16.msra.mxu0 %v3913
        %4623 = vmatpush.bf16.msra.mxu0 %v3907
        %4624 = vmatpush.bf16.msra.mxu0 %v3901
        %4625 = vmatpush.bf16.msra.mxu0 %v3895
        %4626 = vmatpush.bf16.msra.mxu0 %v3889
        %4627 = vmatpush.bf16.msra.mxu0 %v3883
        %4628 = vmatmul.bf16.gmra.mxu0 %v2614
        %v4629 = vpop.f32.mrf.mxu0
        %v4630 = vadd.f32 %v4617, %v4629
        %v4631 = vpop.f32.mrf.mxu0
        %4632 = vdwg.mxu0
        %4633 = vmatpush.bf16.msra.mxu0 %v3973
        %4634 = vmatpush.bf16.msra.mxu0 %v3967
        %4635 = vmatpush.bf16.msra.mxu0 %v3961
        %4636 = vmatpush.bf16.msra.mxu0 %v3955
        %4637 = vmatpush.bf16.msra.mxu0 %v3949
        %4638 = vmatpush.bf16.msra.mxu0 %v3943
        %4639 = vmatpush.bf16.msra.mxu0 %v3937
        %4640 = vmatpush.bf16.msra.mxu0 %v3931
        %4641 = vmatmul.bf16.gmra.mxu0 %v2615
        %v4642 = vpop.f32.mrf.mxu0
        %v4643 = vadd.f32 %v4630, %v4642
        %v4644 = vpop.f32.mrf.mxu0
        %4645 = vdwg.mxu0
        %4646 = vmatpush.bf16.msra.mxu0 %v4021
        %4647 = vmatpush.bf16.msra.mxu0 %v4015
        %4648 = vmatpush.bf16.msra.mxu0 %v4009
        %4649 = vmatpush.bf16.msra.mxu0 %v4003
        %4650 = vmatpush.bf16.msra.mxu0 %v3997
        %4651 = vmatpush.bf16.msra.mxu0 %v3991
        %4652 = vmatpush.bf16.msra.mxu0 %v3985
        %4653 = vmatpush.bf16.msra.mxu0 %v3979
        %4654 = vmatmul.bf16.gmra.mxu0 %v2616
        %v4655 = vpop.f32.mrf.mxu0
        %v4656 = vadd.f32 %v4643, %v4655
        %v4657 = vpop.f32.mrf.mxu0
        %4658 = vdwg.mxu0
        %4659 = vmatpush.bf16.msra.mxu0 %v4069
        %4660 = vmatpush.bf16.msra.mxu0 %v4063
        %4661 = vmatpush.bf16.msra.mxu0 %v4057
        %4662 = vmatpush.bf16.msra.mxu0 %v4051
        %4663 = vmatpush.bf16.msra.mxu0 %v4045
        %4664 = vmatpush.bf16.msra.mxu0 %v4039
        %4665 = vmatpush.bf16.msra.mxu0 %v4033
        %4666 = vmatpush.bf16.msra.mxu0 %v4027
        %4667 = vmatmul.bf16.gmra.mxu0 %v2617
        %v4668 = vpop.f32.mrf.mxu0
        %v4669 = vadd.f32 %v4656, %v4668
        %v4670 = vpop.f32.mrf.mxu0
        %4671 = vdwg.mxu0
        %4672 = vmatpush.bf16.msra.mxu0 %v3830
        %4673 = vmatpush.bf16.msra.mxu0 %v3824
        %4674 = vmatpush.bf16.msra.mxu0 %v3818
        %4675 = vmatpush.bf16.msra.mxu0 %v3812
        %4676 = vmatpush.bf16.msra.mxu0 %v3806
        %4677 = vmatpush.bf16.msra.mxu0 %v3800
        %4678 = vmatpush.bf16.msra.mxu0 %v3794
        %4679 = vmatpush.bf16.msra.mxu0 %v3788
        %4680 = vmatmul.bf16.gmra.mxu0 %v2612
        %v4681 = vpop.f32.mrf.mxu0
        %v4682 = vadd.f32 %v2912, %v4681
        %v4683 = vpop.f32.mrf.mxu0
        %4684 = vdwg.mxu0
        %4685 = vmatpush.bf16.msra.mxu0 %v3878
        %4686 = vmatpush.bf16.msra.mxu0 %v3872
        %4687 = vmatpush.bf16.msra.mxu0 %v3866
        %4688 = vmatpush.bf16.msra.mxu0 %v3860
        %4689 = vmatpush.bf16.msra.mxu0 %v3854
        %4690 = vmatpush.bf16.msra.mxu0 %v3848
        %4691 = vmatpush.bf16.msra.mxu0 %v3842
        %4692 = vmatpush.bf16.msra.mxu0 %v3836
        %4693 = vmatmul.bf16.gmra.mxu0 %v2613
        %v4694 = vpop.f32.mrf.mxu0
        %v4695 = vadd.f32 %v4682, %v4694
        %v4696 = vpop.f32.mrf.mxu0
        %4697 = vdwg.mxu0
        %4698 = vmatpush.bf16.msra.mxu0 %v3926
        %4699 = vmatpush.bf16.msra.mxu0 %v3920
        %4700 = vmatpush.bf16.msra.mxu0 %v3914
        %4701 = vmatpush.bf16.msra.mxu0 %v3908
        %4702 = vmatpush.bf16.msra.mxu0 %v3902
        %4703 = vmatpush.bf16.msra.mxu0 %v3896
        %4704 = vmatpush.bf16.msra.mxu0 %v3890
        %4705 = vmatpush.bf16.msra.mxu0 %v3884
        %4706 = vmatmul.bf16.gmra.mxu0 %v2614
        %v4707 = vpop.f32.mrf.mxu0
        %v4708 = vadd.f32 %v4695, %v4707
        %v4709 = vpop.f32.mrf.mxu0
        %4710 = vdwg.mxu0
        %4711 = vmatpush.bf16.msra.mxu0 %v3974
        %4712 = vmatpush.bf16.msra.mxu0 %v3968
        %4713 = vmatpush.bf16.msra.mxu0 %v3962
        %4714 = vmatpush.bf16.msra.mxu0 %v3956
        %4715 = vmatpush.bf16.msra.mxu0 %v3950
        %4716 = vmatpush.bf16.msra.mxu0 %v3944
        %4717 = vmatpush.bf16.msra.mxu0 %v3938
        %4718 = vmatpush.bf16.msra.mxu0 %v3932
        %4719 = vmatmul.bf16.gmra.mxu0 %v2615
        %v4720 = vpop.f32.mrf.mxu0
        %v4721 = vadd.f32 %v4708, %v4720
        %v4722 = vpop.f32.mrf.mxu0
        %4723 = vdwg.mxu0
        %4724 = vmatpush.bf16.msra.mxu0 %v4022
        %4725 = vmatpush.bf16.msra.mxu0 %v4016
        %4726 = vmatpush.bf16.msra.mxu0 %v4010
        %4727 = vmatpush.bf16.msra.mxu0 %v4004
        %4728 = vmatpush.bf16.msra.mxu0 %v3998
        %4729 = vmatpush.bf16.msra.mxu0 %v3992
        %4730 = vmatpush.bf16.msra.mxu0 %v3986
        %4731 = vmatpush.bf16.msra.mxu0 %v3980
        %4732 = vmatmul.bf16.gmra.mxu0 %v2616
        %v4733 = vpop.f32.mrf.mxu0
        %v4734 = vadd.f32 %v4721, %v4733
        %v4735 = vpop.f32.mrf.mxu0
        %4736 = vdwg.mxu0
        %4737 = vmatpush.bf16.msra.mxu0 %v4070
        %4738 = vmatpush.bf16.msra.mxu0 %v4064
        %4739 = vmatpush.bf16.msra.mxu0 %v4058
        %4740 = vmatpush.bf16.msra.mxu0 %v4052
        %4741 = vmatpush.bf16.msra.mxu0 %v4046
        %4742 = vmatpush.bf16.msra.mxu0 %v4040
        %4743 = vmatpush.bf16.msra.mxu0 %v4034
        %4744 = vmatpush.bf16.msra.mxu0 %v4028
        %4745 = vmatmul.bf16.gmra.mxu0 %v2617
        %v4746 = vpop.f32.mrf.mxu0
        %v4747 = vadd.f32 %v4734, %v4746
        %v4748 = vpop.f32.mrf.mxu0
        %4749 = vdwg.mxu0
        %4750 = vmatpush.bf16.msra.mxu0 %v3831
        %4751 = vmatpush.bf16.msra.mxu0 %v3825
        %4752 = vmatpush.bf16.msra.mxu0 %v3819
        %4753 = vmatpush.bf16.msra.mxu0 %v3813
        %4754 = vmatpush.bf16.msra.mxu0 %v3807
        %4755 = vmatpush.bf16.msra.mxu0 %v3801
        %4756 = vmatpush.bf16.msra.mxu0 %v3795
        %4757 = vmatpush.bf16.msra.mxu0 %v3789
        %4758 = vmatmul.bf16.gmra.mxu0 %v2612
        %v4759 = vpop.f32.mrf.mxu0
        %v4760 = vadd.f32 %v2913, %v4759
        %v4761 = vpop.f32.mrf.mxu0
        %4762 = vdwg.mxu0
        %4763 = vmatpush.bf16.msra.mxu0 %v3879
        %4764 = vmatpush.bf16.msra.mxu0 %v3873
        %4765 = vmatpush.bf16.msra.mxu0 %v3867
        %4766 = vmatpush.bf16.msra.mxu0 %v3861
        %4767 = vmatpush.bf16.msra.mxu0 %v3855
        %4768 = vmatpush.bf16.msra.mxu0 %v3849
        %4769 = vmatpush.bf16.msra.mxu0 %v3843
        %4770 = vmatpush.bf16.msra.mxu0 %v3837
        %4771 = vmatmul.bf16.gmra.mxu0 %v2613
        %v4772 = vpop.f32.mrf.mxu0
        %v4773 = vadd.f32 %v4760, %v4772
        %v4774 = vpop.f32.mrf.mxu0
        %4775 = vdwg.mxu0
        %4776 = vmatpush.bf16.msra.mxu0 %v3927
        %4777 = vmatpush.bf16.msra.mxu0 %v3921
        %4778 = vmatpush.bf16.msra.mxu0 %v3915
        %4779 = vmatpush.bf16.msra.mxu0 %v3909
        %4780 = vmatpush.bf16.msra.mxu0 %v3903
        %4781 = vmatpush.bf16.msra.mxu0 %v3897
        %4782 = vmatpush.bf16.msra.mxu0 %v3891
        %4783 = vmatpush.bf16.msra.mxu0 %v3885
        %4784 = vmatmul.bf16.gmra.mxu0 %v2614
        %v4785 = vpop.f32.mrf.mxu0
        %v4786 = vadd.f32 %v4773, %v4785
        %v4787 = vpop.f32.mrf.mxu0
        %4788 = vdwg.mxu0
        %4789 = vmatpush.bf16.msra.mxu0 %v3975
        %4790 = vmatpush.bf16.msra.mxu0 %v3969
        %4791 = vmatpush.bf16.msra.mxu0 %v3963
        %4792 = vmatpush.bf16.msra.mxu0 %v3957
        %4793 = vmatpush.bf16.msra.mxu0 %v3951
        %4794 = vmatpush.bf16.msra.mxu0 %v3945
        %4795 = vmatpush.bf16.msra.mxu0 %v3939
        %4796 = vmatpush.bf16.msra.mxu0 %v3933
        %4797 = vmatmul.bf16.gmra.mxu0 %v2615
        %v4798 = vpop.f32.mrf.mxu0
        %v4799 = vadd.f32 %v4786, %v4798
        %v4800 = vpop.f32.mrf.mxu0
        %4801 = vdwg.mxu0
        %4802 = vmatpush.bf16.msra.mxu0 %v4023
        %4803 = vmatpush.bf16.msra.mxu0 %v4017
        %4804 = vmatpush.bf16.msra.mxu0 %v4011
        %4805 = vmatpush.bf16.msra.mxu0 %v4005
        %4806 = vmatpush.bf16.msra.mxu0 %v3999
        %4807 = vmatpush.bf16.msra.mxu0 %v3993
        %4808 = vmatpush.bf16.msra.mxu0 %v3987
        %4809 = vmatpush.bf16.msra.mxu0 %v3981
        %4810 = vmatmul.bf16.gmra.mxu0 %v2616
        %v4811 = vpop.f32.mrf.mxu0
        %v4812 = vadd.f32 %v4799, %v4811
        %v4813 = vpop.f32.mrf.mxu0
        %4814 = vdwg.mxu0
        %4815 = vmatpush.bf16.msra.mxu0 %v4071
        %4816 = vmatpush.bf16.msra.mxu0 %v4065
        %4817 = vmatpush.bf16.msra.mxu0 %v4059
        %4818 = vmatpush.bf16.msra.mxu0 %v4053
        %4819 = vmatpush.bf16.msra.mxu0 %v4047
        %4820 = vmatpush.bf16.msra.mxu0 %v4041
        %4821 = vmatpush.bf16.msra.mxu0 %v4035
        %4822 = vmatpush.bf16.msra.mxu0 %v4029
        %4823 = vmatmul.bf16.gmra.mxu0 %v2617
        %v4824 = vpop.f32.mrf.mxu0
        %v4825 = vadd.f32 %v4812, %v4824
        %v4826 = vpop.f32.mrf.mxu0
        %4827 = vdwg.mxu0
        %v4828 = vpack.c.bf16 %v4435, %v4435
        %v4829 = vpack.c.bf16 %v4513, %v4513
        %v4830 = vpack.c.bf16 %v4591, %v4591
        %v4831 = vpack.c.bf16 %v4669, %v4669
        %v4832 = vpack.c.bf16 %v4747, %v4747
        %v4833 = vpack.c.bf16 %v4825, %v4825
        %v4834 = vld [vmem:[#allocation11] sm:$0xff]
        %v4835 = vld [vmem:[#allocation11 + $0x8] sm:$0xff]
        %v4836 = vld [vmem:[#allocation11 + $0x10] sm:$0xff]
        %v4837 = vld [vmem:[#allocation11 + $0x18] sm:$0xff]
        %v4838 = vld [vmem:[#allocation11 + $0x20] sm:$0xff]
        %v4839 = vld [vmem:[#allocation11 + $0x28] sm:$0xff]
        %v4840 = vld [vmem:[#allocation11 + $0x30] sm:$0xff]
        %v4841 = vld [vmem:[#allocation11 + $0x38] sm:$0xff]
        %v4842 = vld [vmem:[#allocation11 + $0x40] sm:$0xff]
        %v4843 = vld [vmem:[#allocation11 + $0x48] sm:$0xff]
        %v4844 = vld [vmem:[#allocation11 + $0x50] sm:$0xff]
        %v4845 = vld [vmem:[#allocation11 + $0x58] sm:$0xff]
        %v4846 = vld [vmem:[#allocation11 + $0x60] sm:$0xff]
        %v4847 = vld [vmem:[#allocation11 + $0x68] sm:$0xff]
        %v4848 = vld [vmem:[#allocation11 + $0x70] sm:$0xff]
        %v4849 = vld [vmem:[#allocation11 + $0x78] sm:$0xff]
        %v4850 = vld [vmem:[#allocation11 + $0x80] sm:$0xff]
        %v4851 = vld [vmem:[#allocation11 + $0x88] sm:$0xff]
        %v4852 = vld [vmem:[#allocation11 + $0x90] sm:$0xff]
        %v4853 = vld [vmem:[#allocation11 + $0x98] sm:$0xff]
        %v4854 = vld [vmem:[#allocation11 + $0xa0] sm:$0xff]
        %v4855 = vld [vmem:[#allocation11 + $0xa8] sm:$0xff]
        %v4856 = vld [vmem:[#allocation11 + $0xb0] sm:$0xff]
        %v4857 = vld [vmem:[#allocation11 + $0xb8] sm:$0xff]
        %v4858 = vld [vmem:[#allocation11 + $0xc0] sm:$0xff]
        %v4859 = vld [vmem:[#allocation11 + $0xc8] sm:$0xff]
        %v4860 = vld [vmem:[#allocation11 + $0xd0] sm:$0xff]
        %v4861 = vld [vmem:[#allocation11 + $0xd8] sm:$0xff]
        %v4862 = vld [vmem:[#allocation11 + $0xe0] sm:$0xff]
        %v4863 = vld [vmem:[#allocation11 + $0xe8] sm:$0xff]
        %v4864 = vld [vmem:[#allocation11 + $0xf0] sm:$0xff]
        %v4865 = vld [vmem:[#allocation11 + $0xf8] sm:$0xff]
        %v4866 = vld [vmem:[#allocation11 + $0x100] sm:$0xff]
        %v4867 = vld [vmem:[#allocation11 + $0x108] sm:$0xff]
        %v4868 = vld [vmem:[#allocation11 + $0x110] sm:$0xff]
        %v4869 = vld [vmem:[#allocation11 + $0x118] sm:$0xff]
        %v4870 = vld [vmem:[#allocation11 + $0x120] sm:$0xff]
        %v4871 = vld [vmem:[#allocation11 + $0x128] sm:$0xff]
        %v4872 = vld [vmem:[#allocation11 + $0x130] sm:$0xff]
        %v4873 = vld [vmem:[#allocation11 + $0x138] sm:$0xff]
        %v4874 = vld [vmem:[#allocation11 + $0x140] sm:$0xff]
        %v4875 = vld [vmem:[#allocation11 + $0x148] sm:$0xff]
        %v4876 = vld [vmem:[#allocation11 + $0x150] sm:$0xff]
        %v4877 = vld [vmem:[#allocation11 + $0x158] sm:$0xff]
        %v4878 = vld [vmem:[#allocation11 + $0x160] sm:$0xff]
        %v4879 = vld [vmem:[#allocation11 + $0x168] sm:$0xff]
        %v4880 = vld [vmem:[#allocation11 + $0x170] sm:$0xff]
        %v4881 = vld [vmem:[#allocation11 + $0x178] sm:$0xff]
        %v4882 = vld [vmem:[#allocation11 + $0x180] sm:$0xff]
        %v4883 = vld [vmem:[#allocation11 + $0x188] sm:$0xff]
        %v4884 = vld [vmem:[#allocation11 + $0x190] sm:$0xff]
        %v4885 = vld [vmem:[#allocation11 + $0x198] sm:$0xff]
        %v4886 = vld [vmem:[#allocation11 + $0x1a0] sm:$0xff]
        %v4887 = vld [vmem:[#allocation11 + $0x1a8] sm:$0xff]
        %v4888 = vld [vmem:[#allocation11 + $0x1b0] sm:$0xff]
        %v4889 = vld [vmem:[#allocation11 + $0x1b8] sm:$0xff]
        %v4890 = vld [vmem:[#allocation11 + $0x1c0] sm:$0xff]
        %v4891 = vld [vmem:[#allocation11 + $0x1c8] sm:$0xff]
        %v4892 = vld [vmem:[#allocation11 + $0x1d0] sm:$0xff]
        %v4893 = vld [vmem:[#allocation11 + $0x1d8] sm:$0xff]
        %v4894 = vld [vmem:[#allocation11 + $0x1e0] sm:$0xff]
        %v4895 = vld [vmem:[#allocation11 + $0x1e8] sm:$0xff]
        %v4896 = vld [vmem:[#allocation11 + $0x1f0] sm:$0xff]
        %v4897 = vld [vmem:[#allocation11 + $0x1f8] sm:$0xff]
        %v4898 = vld [vmem:[#allocation11 + $0x200] sm:$0xff]
        %v4899 = vld [vmem:[#allocation11 + $0x208] sm:$0xff]
        %v4900 = vld [vmem:[#allocation11 + $0x210] sm:$0xff]
        %v4901 = vld [vmem:[#allocation11 + $0x218] sm:$0xff]
        %v4902 = vld [vmem:[#allocation11 + $0x220] sm:$0xff]
        %v4903 = vld [vmem:[#allocation11 + $0x228] sm:$0xff]
        %v4904 = vld [vmem:[#allocation11 + $0x230] sm:$0xff]
        %v4905 = vld [vmem:[#allocation11 + $0x238] sm:$0xff]
        %v4906 = vld [vmem:[#allocation11 + $0x240] sm:$0xff]
        %v4907 = vld [vmem:[#allocation11 + $0x248] sm:$0xff]
        %v4908 = vld [vmem:[#allocation11 + $0x250] sm:$0xff]
        %v4909 = vld [vmem:[#allocation11 + $0x258] sm:$0xff]
        %v4910 = vld [vmem:[#allocation11 + $0x260] sm:$0xff]
        %v4911 = vld [vmem:[#allocation11 + $0x268] sm:$0xff]
        %v4912 = vld [vmem:[#allocation11 + $0x270] sm:$0xff]
        %v4913 = vld [vmem:[#allocation11 + $0x278] sm:$0xff]
        %v4914 = vld [vmem:[#allocation11 + $0x280] sm:$0xff]
        %v4915 = vld [vmem:[#allocation11 + $0x288] sm:$0xff]
        %v4916 = vld [vmem:[#allocation11 + $0x290] sm:$0xff]
        %v4917 = vld [vmem:[#allocation11 + $0x298] sm:$0xff]
        %v4918 = vld [vmem:[#allocation11 + $0x2a0] sm:$0xff]
        %v4919 = vld [vmem:[#allocation11 + $0x2a8] sm:$0xff]
        %v4920 = vld [vmem:[#allocation11 + $0x2b0] sm:$0xff]
        %v4921 = vld [vmem:[#allocation11 + $0x2b8] sm:$0xff]
        %v4922 = vld [vmem:[#allocation11 + $0x2c0] sm:$0xff]
        %v4923 = vld [vmem:[#allocation11 + $0x2c8] sm:$0xff]
        %v4924 = vld [vmem:[#allocation11 + $0x2d0] sm:$0xff]
        %v4925 = vld [vmem:[#allocation11 + $0x2d8] sm:$0xff]
        %v4926 = vld [vmem:[#allocation11 + $0x2e0] sm:$0xff]
        %v4927 = vld [vmem:[#allocation11 + $0x2e8] sm:$0xff]
        %v4928 = vld [vmem:[#allocation11 + $0x2f0] sm:$0xff]
        %v4929 = vld [vmem:[#allocation11 + $0x2f8] sm:$0xff]
        %v4930 = vld [vmem:[#allocation11 + $0x300] sm:$0xff]
        %v4931 = vld [vmem:[#allocation11 + $0x308] sm:$0xff]
        %v4932 = vld [vmem:[#allocation11 + $0x310] sm:$0xff]
        %v4933 = vld [vmem:[#allocation11 + $0x318] sm:$0xff]
        %v4934 = vld [vmem:[#allocation11 + $0x320] sm:$0xff]
        %v4935 = vld [vmem:[#allocation11 + $0x328] sm:$0xff]
        %v4936 = vld [vmem:[#allocation11 + $0x330] sm:$0xff]
        %v4937 = vld [vmem:[#allocation11 + $0x338] sm:$0xff]
        %v4938 = vld [vmem:[#allocation11 + $0x340] sm:$0xff]
        %v4939 = vld [vmem:[#allocation11 + $0x348] sm:$0xff]
        %v4940 = vld [vmem:[#allocation11 + $0x350] sm:$0xff]
        %v4941 = vld [vmem:[#allocation11 + $0x358] sm:$0xff]
        %v4942 = vld [vmem:[#allocation11 + $0x360] sm:$0xff]
        %v4943 = vld [vmem:[#allocation11 + $0x368] sm:$0xff]
        %v4944 = vld [vmem:[#allocation11 + $0x370] sm:$0xff]
        %v4945 = vld [vmem:[#allocation11 + $0x378] sm:$0xff]
        %v4946 = vld [vmem:[#allocation11 + $0x380] sm:$0xff]
        %v4947 = vld [vmem:[#allocation11 + $0x388] sm:$0xff]
        %v4948 = vld [vmem:[#allocation11 + $0x390] sm:$0xff]
        %v4949 = vld [vmem:[#allocation11 + $0x398] sm:$0xff]
        %v4950 = vld [vmem:[#allocation11 + $0x3a0] sm:$0xff]
        %v4951 = vld [vmem:[#allocation11 + $0x3a8] sm:$0xff]
        %v4952 = vld [vmem:[#allocation11 + $0x3b0] sm:$0xff]
        %v4953 = vld [vmem:[#allocation11 + $0x3b8] sm:$0xff]
        %v4954 = vld [vmem:[#allocation11 + $0x3c0] sm:$0xff]
        %v4955 = vld [vmem:[#allocation11 + $0x3c8] sm:$0xff]
        %v4956 = vld [vmem:[#allocation11 + $0x3d0] sm:$0xff]
        %v4957 = vld [vmem:[#allocation11 + $0x3d8] sm:$0xff]
        %v4958 = vld [vmem:[#allocation11 + $0x3e0] sm:$0xff]
        %v4959 = vld [vmem:[#allocation11 + $0x3e8] sm:$0xff]
        %v4960 = vld [vmem:[#allocation11 + $0x3f0] sm:$0xff]
        %v4961 = vld [vmem:[#allocation11 + $0x3f8] sm:$0xff]
        %v4962 = vld [vmem:[#allocation11 + $0x400] sm:$0xff]
        %v4963 = vld [vmem:[#allocation11 + $0x408] sm:$0xff]
        %v4964 = vld [vmem:[#allocation11 + $0x410] sm:$0xff]
        %v4965 = vld [vmem:[#allocation11 + $0x418] sm:$0xff]
        %v4966 = vld [vmem:[#allocation11 + $0x420] sm:$0xff]
        %v4967 = vld [vmem:[#allocation11 + $0x428] sm:$0xff]
        %v4968 = vld [vmem:[#allocation11 + $0x430] sm:$0xff]
        %v4969 = vld [vmem:[#allocation11 + $0x438] sm:$0xff]
        %v4970 = vld [vmem:[#allocation11 + $0x440] sm:$0xff]
        %v4971 = vld [vmem:[#allocation11 + $0x448] sm:$0xff]
        %v4972 = vld [vmem:[#allocation11 + $0x450] sm:$0xff]
        %v4973 = vld [vmem:[#allocation11 + $0x458] sm:$0xff]
        %v4974 = vld [vmem:[#allocation11 + $0x460] sm:$0xff]
        %v4975 = vld [vmem:[#allocation11 + $0x468] sm:$0xff]
        %v4976 = vld [vmem:[#allocation11 + $0x470] sm:$0xff]
        %v4977 = vld [vmem:[#allocation11 + $0x478] sm:$0xff]
        %v4978 = vld [vmem:[#allocation11 + $0x480] sm:$0xff]
        %v4979 = vld [vmem:[#allocation11 + $0x488] sm:$0xff]
        %v4980 = vld [vmem:[#allocation11 + $0x490] sm:$0xff]
        %v4981 = vld [vmem:[#allocation11 + $0x498] sm:$0xff]
        %v4982 = vld [vmem:[#allocation11 + $0x4a0] sm:$0xff]
        %v4983 = vld [vmem:[#allocation11 + $0x4a8] sm:$0xff]
        %v4984 = vld [vmem:[#allocation11 + $0x4b0] sm:$0xff]
        %v4985 = vld [vmem:[#allocation11 + $0x4b8] sm:$0xff]
        %v4986 = vld [vmem:[#allocation11 + $0x4c0] sm:$0xff]
        %v4987 = vld [vmem:[#allocation11 + $0x4c8] sm:$0xff]
        %v4988 = vld [vmem:[#allocation11 + $0x4d0] sm:$0xff]
        %v4989 = vld [vmem:[#allocation11 + $0x4d8] sm:$0xff]
        %v4990 = vld [vmem:[#allocation11 + $0x4e0] sm:$0xff]
        %v4991 = vld [vmem:[#allocation11 + $0x4e8] sm:$0xff]
        %v4992 = vld [vmem:[#allocation11 + $0x4f0] sm:$0xff]
        %v4993 = vld [vmem:[#allocation11 + $0x4f8] sm:$0xff]
        %v4994 = vld [vmem:[#allocation11 + $0x500] sm:$0xff]
        %v4995 = vld [vmem:[#allocation11 + $0x508] sm:$0xff]
        %v4996 = vld [vmem:[#allocation11 + $0x510] sm:$0xff]
        %v4997 = vld [vmem:[#allocation11 + $0x518] sm:$0xff]
        %v4998 = vld [vmem:[#allocation11 + $0x520] sm:$0xff]
        %v4999 = vld [vmem:[#allocation11 + $0x528] sm:$0xff]
        %v5000 = vld [vmem:[#allocation11 + $0x530] sm:$0xff]
        %v5001 = vld [vmem:[#allocation11 + $0x538] sm:$0xff]
        %v5002 = vld [vmem:[#allocation11 + $0x540] sm:$0xff]
        %v5003 = vld [vmem:[#allocation11 + $0x548] sm:$0xff]
        %v5004 = vld [vmem:[#allocation11 + $0x550] sm:$0xff]
        %v5005 = vld [vmem:[#allocation11 + $0x558] sm:$0xff]
        %v5006 = vld [vmem:[#allocation11 + $0x560] sm:$0xff]
        %v5007 = vld [vmem:[#allocation11 + $0x568] sm:$0xff]
        %v5008 = vld [vmem:[#allocation11 + $0x570] sm:$0xff]
        %v5009 = vld [vmem:[#allocation11 + $0x578] sm:$0xff]
        %v5010 = vld [vmem:[#allocation11 + $0x580] sm:$0xff]
        %v5011 = vld [vmem:[#allocation11 + $0x588] sm:$0xff]
        %v5012 = vld [vmem:[#allocation11 + $0x590] sm:$0xff]
        %v5013 = vld [vmem:[#allocation11 + $0x598] sm:$0xff]
        %v5014 = vld [vmem:[#allocation11 + $0x5a0] sm:$0xff]
        %v5015 = vld [vmem:[#allocation11 + $0x5a8] sm:$0xff]
        %v5016 = vld [vmem:[#allocation11 + $0x5b0] sm:$0xff]
        %v5017 = vld [vmem:[#allocation11 + $0x5b8] sm:$0xff]
        %v5018 = vld [vmem:[#allocation11 + $0x5c0] sm:$0xff]
        %v5019 = vld [vmem:[#allocation11 + $0x5c8] sm:$0xff]
        %v5020 = vld [vmem:[#allocation11 + $0x5d0] sm:$0xff]
        %v5021 = vld [vmem:[#allocation11 + $0x5d8] sm:$0xff]
        %v5022 = vld [vmem:[#allocation11 + $0x5e0] sm:$0xff]
        %v5023 = vld [vmem:[#allocation11 + $0x5e8] sm:$0xff]
        %v5024 = vld [vmem:[#allocation11 + $0x5f0] sm:$0xff]
        %v5025 = vld [vmem:[#allocation11 + $0x5f8] sm:$0xff]
        %v5026 = vld [vmem:[#allocation11 + $0x600] sm:$0xff]
        %v5027 = vld [vmem:[#allocation11 + $0x608] sm:$0xff]
        %v5028 = vld [vmem:[#allocation11 + $0x610] sm:$0xff]
        %v5029 = vld [vmem:[#allocation11 + $0x618] sm:$0xff]
        %v5030 = vld [vmem:[#allocation11 + $0x620] sm:$0xff]
        %v5031 = vld [vmem:[#allocation11 + $0x628] sm:$0xff]
        %v5032 = vld [vmem:[#allocation11 + $0x630] sm:$0xff]
        %v5033 = vld [vmem:[#allocation11 + $0x638] sm:$0xff]
        %v5034 = vld [vmem:[#allocation11 + $0x640] sm:$0xff]
        %v5035 = vld [vmem:[#allocation11 + $0x648] sm:$0xff]
        %v5036 = vld [vmem:[#allocation11 + $0x650] sm:$0xff]
        %v5037 = vld [vmem:[#allocation11 + $0x658] sm:$0xff]
        %v5038 = vld [vmem:[#allocation11 + $0x660] sm:$0xff]
        %v5039 = vld [vmem:[#allocation11 + $0x668] sm:$0xff]
        %v5040 = vld [vmem:[#allocation11 + $0x670] sm:$0xff]
        %v5041 = vld [vmem:[#allocation11 + $0x678] sm:$0xff]
        %v5042 = vld [vmem:[#allocation11 + $0x680] sm:$0xff]
        %v5043 = vld [vmem:[#allocation11 + $0x688] sm:$0xff]
        %v5044 = vld [vmem:[#allocation11 + $0x690] sm:$0xff]
        %v5045 = vld [vmem:[#allocation11 + $0x698] sm:$0xff]
        %v5046 = vld [vmem:[#allocation11 + $0x6a0] sm:$0xff]
        %v5047 = vld [vmem:[#allocation11 + $0x6a8] sm:$0xff]
        %v5048 = vld [vmem:[#allocation11 + $0x6b0] sm:$0xff]
        %v5049 = vld [vmem:[#allocation11 + $0x6b8] sm:$0xff]
        %v5050 = vld [vmem:[#allocation11 + $0x6c0] sm:$0xff]
        %v5051 = vld [vmem:[#allocation11 + $0x6c8] sm:$0xff]
        %v5052 = vld [vmem:[#allocation11 + $0x6d0] sm:$0xff]
        %v5053 = vld [vmem:[#allocation11 + $0x6d8] sm:$0xff]
        %v5054 = vld [vmem:[#allocation11 + $0x6e0] sm:$0xff]
        %v5055 = vld [vmem:[#allocation11 + $0x6e8] sm:$0xff]
        %v5056 = vld [vmem:[#allocation11 + $0x6f0] sm:$0xff]
        %v5057 = vld [vmem:[#allocation11 + $0x6f8] sm:$0xff]
        %v5058 = vld [vmem:[#allocation11 + $0x700] sm:$0xff]
        %v5059 = vld [vmem:[#allocation11 + $0x708] sm:$0xff]
        %v5060 = vld [vmem:[#allocation11 + $0x710] sm:$0xff]
        %v5061 = vld [vmem:[#allocation11 + $0x718] sm:$0xff]
        %v5062 = vld [vmem:[#allocation11 + $0x720] sm:$0xff]
        %v5063 = vld [vmem:[#allocation11 + $0x728] sm:$0xff]
        %v5064 = vld [vmem:[#allocation11 + $0x730] sm:$0xff]
        %v5065 = vld [vmem:[#allocation11 + $0x738] sm:$0xff]
        %v5066 = vld [vmem:[#allocation11 + $0x740] sm:$0xff]
        %v5067 = vld [vmem:[#allocation11 + $0x748] sm:$0xff]
        %v5068 = vld [vmem:[#allocation11 + $0x750] sm:$0xff]
        %v5069 = vld [vmem:[#allocation11 + $0x758] sm:$0xff]
        %v5070 = vld [vmem:[#allocation11 + $0x760] sm:$0xff]
        %v5071 = vld [vmem:[#allocation11 + $0x768] sm:$0xff]
        %v5072 = vld [vmem:[#allocation11 + $0x770] sm:$0xff]
        %v5073 = vld [vmem:[#allocation11 + $0x778] sm:$0xff]
        %v5074 = vld [vmem:[#allocation11 + $0x780] sm:$0xff]
        %v5075 = vld [vmem:[#allocation11 + $0x788] sm:$0xff]
        %v5076 = vld [vmem:[#allocation11 + $0x790] sm:$0xff]
        %v5077 = vld [vmem:[#allocation11 + $0x798] sm:$0xff]
        %v5078 = vld [vmem:[#allocation11 + $0x7a0] sm:$0xff]
        %v5079 = vld [vmem:[#allocation11 + $0x7a8] sm:$0xff]
        %v5080 = vld [vmem:[#allocation11 + $0x7b0] sm:$0xff]
        %v5081 = vld [vmem:[#allocation11 + $0x7b8] sm:$0xff]
        %v5082 = vld [vmem:[#allocation11 + $0x7c0] sm:$0xff]
        %v5083 = vld [vmem:[#allocation11 + $0x7c8] sm:$0xff]
        %v5084 = vld [vmem:[#allocation11 + $0x7d0] sm:$0xff]
        %v5085 = vld [vmem:[#allocation11 + $0x7d8] sm:$0xff]
        %v5086 = vld [vmem:[#allocation11 + $0x7e0] sm:$0xff]
        %v5087 = vld [vmem:[#allocation11 + $0x7e8] sm:$0xff]
        %v5088 = vld [vmem:[#allocation11 + $0x7f0] sm:$0xff]
        %v5089 = vld [vmem:[#allocation11 + $0x7f8] sm:$0xff]
        %v5090 = vld [vmem:[#allocation11 + $0x800] sm:$0xff]
        %v5091 = vld [vmem:[#allocation11 + $0x808] sm:$0xff]
        %v5092 = vld [vmem:[#allocation11 + $0x810] sm:$0xff]
        %v5093 = vld [vmem:[#allocation11 + $0x818] sm:$0xff]
        %v5094 = vld [vmem:[#allocation11 + $0x820] sm:$0xff]
        %v5095 = vld [vmem:[#allocation11 + $0x828] sm:$0xff]
        %v5096 = vld [vmem:[#allocation11 + $0x830] sm:$0xff]
        %v5097 = vld [vmem:[#allocation11 + $0x838] sm:$0xff]
        %v5098 = vld [vmem:[#allocation11 + $0x840] sm:$0xff]
        %v5099 = vld [vmem:[#allocation11 + $0x848] sm:$0xff]
        %v5100 = vld [vmem:[#allocation11 + $0x850] sm:$0xff]
        %v5101 = vld [vmem:[#allocation11 + $0x858] sm:$0xff]
        %v5102 = vld [vmem:[#allocation11 + $0x860] sm:$0xff]
        %v5103 = vld [vmem:[#allocation11 + $0x868] sm:$0xff]
        %v5104 = vld [vmem:[#allocation11 + $0x870] sm:$0xff]
        %v5105 = vld [vmem:[#allocation11 + $0x878] sm:$0xff]
        %v5106 = vld [vmem:[#allocation11 + $0x880] sm:$0xff]
        %v5107 = vld [vmem:[#allocation11 + $0x888] sm:$0xff]
        %v5108 = vld [vmem:[#allocation11 + $0x890] sm:$0xff]
        %v5109 = vld [vmem:[#allocation11 + $0x898] sm:$0xff]
        %v5110 = vld [vmem:[#allocation11 + $0x8a0] sm:$0xff]
        %v5111 = vld [vmem:[#allocation11 + $0x8a8] sm:$0xff]
        %v5112 = vld [vmem:[#allocation11 + $0x8b0] sm:$0xff]
        %v5113 = vld [vmem:[#allocation11 + $0x8b8] sm:$0xff]
        %v5114 = vld [vmem:[#allocation11 + $0x8c0] sm:$0xff]
        %v5115 = vld [vmem:[#allocation11 + $0x8c8] sm:$0xff]
        %v5116 = vld [vmem:[#allocation11 + $0x8d0] sm:$0xff]
        %v5117 = vld [vmem:[#allocation11 + $0x8d8] sm:$0xff]
        %v5118 = vld [vmem:[#allocation11 + $0x8e0] sm:$0xff]
        %v5119 = vld [vmem:[#allocation11 + $0x8e8] sm:$0xff]
        %v5120 = vld [vmem:[#allocation11 + $0x8f0] sm:$0xff]
        %v5121 = vld [vmem:[#allocation11 + $0x8f8] sm:$0xff]
        %v5122 = vld [vmem:[#allocation13] sm:$0x3f]
        %v5124 = vperm.slane %v5122, 0
        %v5125 = vperm.slane %v5122, 1
        %v5126 = vperm.slane %v5122, 2
        %v5127 = vperm.slane %v5122, 3
        %v5128 = vperm.slane %v5122, 4
        %v5129 = vperm.slane %v5122, 5
        %v5424 = vunpack.c.l.b16 %v4834
        %v5425 = vunpack.c.h.b16 %v4834
        %v5426 = vunpack.c.l.b16 %v4835
        %v5427 = vunpack.c.h.b16 %v4835
        %v5428 = vunpack.c.l.b16 %v4836
        %v5429 = vunpack.c.h.b16 %v4836
        %v5430 = vunpack.c.l.b16 %v4837
        %v5431 = vunpack.c.h.b16 %v4837
        %v5432 = vunpack.c.l.b16 %v4838
        %v5433 = vunpack.c.h.b16 %v4838
        %v5434 = vunpack.c.l.b16 %v4839
        %v5435 = vunpack.c.h.b16 %v4839
        %v5436 = vunpack.c.l.b16 %v4840
        %v5437 = vunpack.c.h.b16 %v4840
        %v5438 = vunpack.c.l.b16 %v4841
        %v5439 = vunpack.c.h.b16 %v4841
        %v5440 = vunpack.c.l.b16 %v4842
        %v5441 = vunpack.c.h.b16 %v4842
        %v5442 = vunpack.c.l.b16 %v4843
        %v5443 = vunpack.c.h.b16 %v4843
        %v5444 = vunpack.c.l.b16 %v4844
        %v5445 = vunpack.c.h.b16 %v4844
        %v5446 = vunpack.c.l.b16 %v4845
        %v5447 = vunpack.c.h.b16 %v4845
        %v5448 = vunpack.c.l.b16 %v4846
        %v5449 = vunpack.c.h.b16 %v4846
        %v5450 = vunpack.c.l.b16 %v4847
        %v5451 = vunpack.c.h.b16 %v4847
        %v5452 = vunpack.c.l.b16 %v4848
        %v5453 = vunpack.c.h.b16 %v4848
        %v5454 = vunpack.c.l.b16 %v4849
        %v5455 = vunpack.c.h.b16 %v4849
        %v5456 = vunpack.c.l.b16 %v4850
        %v5457 = vunpack.c.h.b16 %v4850
        %v5458 = vunpack.c.l.b16 %v4851
        %v5459 = vunpack.c.h.b16 %v4851
        %v5460 = vunpack.c.l.b16 %v4852
        %v5461 = vunpack.c.h.b16 %v4852
        %v5462 = vunpack.c.l.b16 %v4853
        %v5463 = vunpack.c.h.b16 %v4853
        %v5464 = vunpack.c.l.b16 %v4854
        %v5465 = vunpack.c.h.b16 %v4854
        %v5466 = vunpack.c.l.b16 %v4855
        %v5467 = vunpack.c.h.b16 %v4855
        %v5468 = vunpack.c.l.b16 %v4856
        %v5469 = vunpack.c.h.b16 %v4856
        %v5470 = vunpack.c.l.b16 %v4857
        %v5471 = vunpack.c.h.b16 %v4857
        %v5472 = vunpack.c.l.b16 %v4858
        %v5473 = vunpack.c.h.b16 %v4858
        %v5474 = vunpack.c.l.b16 %v4859
        %v5475 = vunpack.c.h.b16 %v4859
        %v5476 = vunpack.c.l.b16 %v4860
        %v5477 = vunpack.c.h.b16 %v4860
        %v5478 = vunpack.c.l.b16 %v4861
        %v5479 = vunpack.c.h.b16 %v4861
        %v5480 = vunpack.c.l.b16 %v4862
        %v5481 = vunpack.c.h.b16 %v4862
        %v5482 = vunpack.c.l.b16 %v4863
        %v5483 = vunpack.c.h.b16 %v4863
        %v5484 = vunpack.c.l.b16 %v4864
        %v5485 = vunpack.c.h.b16 %v4864
        %v5486 = vunpack.c.l.b16 %v4865
        %v5487 = vunpack.c.h.b16 %v4865
        %v5488 = vunpack.c.l.b16 %v4866
        %v5489 = vunpack.c.h.b16 %v4866
        %v5490 = vunpack.c.l.b16 %v4867
        %v5491 = vunpack.c.h.b16 %v4867
        %v5492 = vunpack.c.l.b16 %v4868
        %v5493 = vunpack.c.h.b16 %v4868
        %v5494 = vunpack.c.l.b16 %v4869
        %v5495 = vunpack.c.h.b16 %v4869
        %v5496 = vunpack.c.l.b16 %v4870
        %v5497 = vunpack.c.h.b16 %v4870
        %v5498 = vunpack.c.l.b16 %v4871
        %v5499 = vunpack.c.h.b16 %v4871
        %v5500 = vunpack.c.l.b16 %v4872
        %v5501 = vunpack.c.h.b16 %v4872
        %v5502 = vunpack.c.l.b16 %v4873
        %v5503 = vunpack.c.h.b16 %v4873
        %v5504 = vunpack.c.l.b16 %v4874
        %v5505 = vunpack.c.h.b16 %v4874
        %v5506 = vunpack.c.l.b16 %v4875
        %v5507 = vunpack.c.h.b16 %v4875
        %v5508 = vunpack.c.l.b16 %v4876
        %v5509 = vunpack.c.h.b16 %v4876
        %v5510 = vunpack.c.l.b16 %v4877
        %v5511 = vunpack.c.h.b16 %v4877
        %v5512 = vunpack.c.l.b16 %v4878
        %v5513 = vunpack.c.h.b16 %v4878
        %v5514 = vunpack.c.l.b16 %v4879
        %v5515 = vunpack.c.h.b16 %v4879
        %v5516 = vunpack.c.l.b16 %v4880
        %v5517 = vunpack.c.h.b16 %v4880
        %v5518 = vunpack.c.l.b16 %v4881
        %v5519 = vunpack.c.h.b16 %v4881
        %v5520 = vunpack.c.l.b16 %v4882
        %v5521 = vunpack.c.h.b16 %v4882
        %v5522 = vunpack.c.l.b16 %v4883
        %v5523 = vunpack.c.h.b16 %v4883
        %v5524 = vunpack.c.l.b16 %v4884
        %v5525 = vunpack.c.h.b16 %v4884
        %v5526 = vunpack.c.l.b16 %v4885
        %v5527 = vunpack.c.h.b16 %v4885
        %v5528 = vunpack.c.l.b16 %v4886
        %v5529 = vunpack.c.h.b16 %v4886
        %v5530 = vunpack.c.l.b16 %v4887
        %v5531 = vunpack.c.h.b16 %v4887
        %v5532 = vunpack.c.l.b16 %v4888
        %v5533 = vunpack.c.h.b16 %v4888
        %v5534 = vunpack.c.l.b16 %v4889
        %v5535 = vunpack.c.h.b16 %v4889
        %v5536 = vunpack.c.l.b16 %v4890
        %v5537 = vunpack.c.h.b16 %v4890
        %v5538 = vunpack.c.l.b16 %v4891
        %v5539 = vunpack.c.h.b16 %v4891
        %v5540 = vunpack.c.l.b16 %v4892
        %v5541 = vunpack.c.h.b16 %v4892
        %v5542 = vunpack.c.l.b16 %v4893
        %v5543 = vunpack.c.h.b16 %v4893
        %v5544 = vunpack.c.l.b16 %v4894
        %v5545 = vunpack.c.h.b16 %v4894
        %v5546 = vunpack.c.l.b16 %v4895
        %v5547 = vunpack.c.h.b16 %v4895
        %v5548 = vunpack.c.l.b16 %v4896
        %v5549 = vunpack.c.h.b16 %v4896
        %v5550 = vunpack.c.l.b16 %v4897
        %v5551 = vunpack.c.h.b16 %v4897
        %v5552 = vunpack.c.l.b16 %v4898
        %v5553 = vunpack.c.h.b16 %v4898
        %v5554 = vunpack.c.l.b16 %v4899
        %v5555 = vunpack.c.h.b16 %v4899
        %v5556 = vunpack.c.l.b16 %v4900
        %v5557 = vunpack.c.h.b16 %v4900
        %v5558 = vunpack.c.l.b16 %v4901
        %v5559 = vunpack.c.h.b16 %v4901
        %v5560 = vunpack.c.l.b16 %v4902
        %v5561 = vunpack.c.h.b16 %v4902
        %v5562 = vunpack.c.l.b16 %v4903
        %v5563 = vunpack.c.h.b16 %v4903
        %v5564 = vunpack.c.l.b16 %v4904
        %v5565 = vunpack.c.h.b16 %v4904
        %v5566 = vunpack.c.l.b16 %v4905
        %v5567 = vunpack.c.h.b16 %v4905
        %v5568 = vunpack.c.l.b16 %v4906
        %v5569 = vunpack.c.h.b16 %v4906
        %v5570 = vunpack.c.l.b16 %v4907
        %v5571 = vunpack.c.h.b16 %v4907
        %v5572 = vunpack.c.l.b16 %v4908
        %v5573 = vunpack.c.h.b16 %v4908
        %v5574 = vunpack.c.l.b16 %v4909
        %v5575 = vunpack.c.h.b16 %v4909
        %v5576 = vunpack.c.l.b16 %v4910
        %v5577 = vunpack.c.h.b16 %v4910
        %v5578 = vunpack.c.l.b16 %v4911
        %v5579 = vunpack.c.h.b16 %v4911
        %v5580 = vunpack.c.l.b16 %v4912
        %v5581 = vunpack.c.h.b16 %v4912
        %v5582 = vunpack.c.l.b16 %v4913
        %v5583 = vunpack.c.h.b16 %v4913
        %v5584 = vunpack.c.l.b16 %v4914
        %v5585 = vunpack.c.h.b16 %v4914
        %v5586 = vunpack.c.l.b16 %v4915
        %v5587 = vunpack.c.h.b16 %v4915
        %v5588 = vunpack.c.l.b16 %v4916
        %v5589 = vunpack.c.h.b16 %v4916
        %v5590 = vunpack.c.l.b16 %v4917
        %v5591 = vunpack.c.h.b16 %v4917
        %v5592 = vunpack.c.l.b16 %v4918
        %v5593 = vunpack.c.h.b16 %v4918
        %v5594 = vunpack.c.l.b16 %v4919
        %v5595 = vunpack.c.h.b16 %v4919
        %v5596 = vunpack.c.l.b16 %v4920
        %v5597 = vunpack.c.h.b16 %v4920
        %v5598 = vunpack.c.l.b16 %v4921
        %v5599 = vunpack.c.h.b16 %v4921
        %v5600 = vunpack.c.l.b16 %v4922
        %v5601 = vunpack.c.h.b16 %v4922
        %v5602 = vunpack.c.l.b16 %v4923
        %v5603 = vunpack.c.h.b16 %v4923
        %v5604 = vunpack.c.l.b16 %v4924
        %v5605 = vunpack.c.h.b16 %v4924
        %v5606 = vunpack.c.l.b16 %v4925
        %v5607 = vunpack.c.h.b16 %v4925
        %v5608 = vunpack.c.l.b16 %v4926
        %v5609 = vunpack.c.h.b16 %v4926
        %v5610 = vunpack.c.l.b16 %v4927
        %v5611 = vunpack.c.h.b16 %v4927
        %v5612 = vunpack.c.l.b16 %v4928
        %v5613 = vunpack.c.h.b16 %v4928
        %v5614 = vunpack.c.l.b16 %v4929
        %v5615 = vunpack.c.h.b16 %v4929
        %v5616 = vunpack.c.l.b16 %v4930
        %v5617 = vunpack.c.h.b16 %v4930
        %v5618 = vunpack.c.l.b16 %v4931
        %v5619 = vunpack.c.h.b16 %v4931
        %v5620 = vunpack.c.l.b16 %v4932
        %v5621 = vunpack.c.h.b16 %v4932
        %v5622 = vunpack.c.l.b16 %v4933
        %v5623 = vunpack.c.h.b16 %v4933
        %v5624 = vunpack.c.l.b16 %v4934
        %v5625 = vunpack.c.h.b16 %v4934
        %v5626 = vunpack.c.l.b16 %v4935
        %v5627 = vunpack.c.h.b16 %v4935
        %v5628 = vunpack.c.l.b16 %v4936
        %v5629 = vunpack.c.h.b16 %v4936
        %v5630 = vunpack.c.l.b16 %v4937
        %v5631 = vunpack.c.h.b16 %v4937
        %v5632 = vunpack.c.l.b16 %v4938
        %v5633 = vunpack.c.h.b16 %v4938
        %v5634 = vunpack.c.l.b16 %v4939
        %v5635 = vunpack.c.h.b16 %v4939
        %v5636 = vunpack.c.l.b16 %v4940
        %v5637 = vunpack.c.h.b16 %v4940
        %v5638 = vunpack.c.l.b16 %v4941
        %v5639 = vunpack.c.h.b16 %v4941
        %v5640 = vunpack.c.l.b16 %v4942
        %v5641 = vunpack.c.h.b16 %v4942
        %v5642 = vunpack.c.l.b16 %v4943
        %v5643 = vunpack.c.h.b16 %v4943
        %v5644 = vunpack.c.l.b16 %v4944
        %v5645 = vunpack.c.h.b16 %v4944
        %v5646 = vunpack.c.l.b16 %v4945
        %v5647 = vunpack.c.h.b16 %v4945
        %v5648 = vunpack.c.l.b16 %v4946
        %v5649 = vunpack.c.h.b16 %v4946
        %v5650 = vunpack.c.l.b16 %v4947
        %v5651 = vunpack.c.h.b16 %v4947
        %v5652 = vunpack.c.l.b16 %v4948
        %v5653 = vunpack.c.h.b16 %v4948
        %v5654 = vunpack.c.l.b16 %v4949
        %v5655 = vunpack.c.h.b16 %v4949
        %v5656 = vunpack.c.l.b16 %v4950
        %v5657 = vunpack.c.h.b16 %v4950
        %v5658 = vunpack.c.l.b16 %v4951
        %v5659 = vunpack.c.h.b16 %v4951
        %v5660 = vunpack.c.l.b16 %v4952
        %v5661 = vunpack.c.h.b16 %v4952
        %v5662 = vunpack.c.l.b16 %v4953
        %v5663 = vunpack.c.h.b16 %v4953
        %v5664 = vunpack.c.l.b16 %v4954
        %v5665 = vunpack.c.h.b16 %v4954
        %v5666 = vunpack.c.l.b16 %v4955
        %v5667 = vunpack.c.h.b16 %v4955
        %v5668 = vunpack.c.l.b16 %v4956
        %v5669 = vunpack.c.h.b16 %v4956
        %v5670 = vunpack.c.l.b16 %v4957
        %v5671 = vunpack.c.h.b16 %v4957
        %v5672 = vunpack.c.l.b16 %v4958
        %v5673 = vunpack.c.h.b16 %v4958
        %v5674 = vunpack.c.l.b16 %v4959
        %v5675 = vunpack.c.h.b16 %v4959
        %v5676 = vunpack.c.l.b16 %v4960
        %v5677 = vunpack.c.h.b16 %v4960
        %v5678 = vunpack.c.l.b16 %v4961
        %v5679 = vunpack.c.h.b16 %v4961
        %v5680 = vunpack.c.l.b16 %v4962
        %v5681 = vunpack.c.h.b16 %v4962
        %v5682 = vunpack.c.l.b16 %v4963
        %v5683 = vunpack.c.h.b16 %v4963
        %v5684 = vunpack.c.l.b16 %v4964
        %v5685 = vunpack.c.h.b16 %v4964
        %v5686 = vunpack.c.l.b16 %v4965
        %v5687 = vunpack.c.h.b16 %v4965
        %v5688 = vunpack.c.l.b16 %v4966
        %v5689 = vunpack.c.h.b16 %v4966
        %v5690 = vunpack.c.l.b16 %v4967
        %v5691 = vunpack.c.h.b16 %v4967
        %v5692 = vunpack.c.l.b16 %v4968
        %v5693 = vunpack.c.h.b16 %v4968
        %v5694 = vunpack.c.l.b16 %v4969
        %v5695 = vunpack.c.h.b16 %v4969
        %v5696 = vunpack.c.l.b16 %v4970
        %v5697 = vunpack.c.h.b16 %v4970
        %v5698 = vunpack.c.l.b16 %v4971
        %v5699 = vunpack.c.h.b16 %v4971
        %v5700 = vunpack.c.l.b16 %v4972
        %v5701 = vunpack.c.h.b16 %v4972
        %v5702 = vunpack.c.l.b16 %v4973
        %v5703 = vunpack.c.h.b16 %v4973
        %v5704 = vunpack.c.l.b16 %v4974
        %v5705 = vunpack.c.h.b16 %v4974
        %v5706 = vunpack.c.l.b16 %v4975
        %v5707 = vunpack.c.h.b16 %v4975
        %v5708 = vunpack.c.l.b16 %v4976
        %v5709 = vunpack.c.h.b16 %v4976
        %v5710 = vunpack.c.l.b16 %v4977
        %v5711 = vunpack.c.h.b16 %v4977
        %v5712 = vunpack.c.l.b16 %v4978
        %v5713 = vunpack.c.h.b16 %v4978
        %v5714 = vunpack.c.l.b16 %v4979
        %v5715 = vunpack.c.h.b16 %v4979
        %v5716 = vunpack.c.l.b16 %v4980
        %v5717 = vunpack.c.h.b16 %v4980
        %v5718 = vunpack.c.l.b16 %v4981
        %v5719 = vunpack.c.h.b16 %v4981
        %v5720 = vunpack.c.l.b16 %v4982
        %v5721 = vunpack.c.h.b16 %v4982
        %v5722 = vunpack.c.l.b16 %v4983
        %v5723 = vunpack.c.h.b16 %v4983
        %v5724 = vunpack.c.l.b16 %v4984
        %v5725 = vunpack.c.h.b16 %v4984
        %v5726 = vunpack.c.l.b16 %v4985
        %v5727 = vunpack.c.h.b16 %v4985
        %v5728 = vunpack.c.l.b16 %v4986
        %v5729 = vunpack.c.h.b16 %v4986
        %v5730 = vunpack.c.l.b16 %v4987
        %v5731 = vunpack.c.h.b16 %v4987
        %v5732 = vunpack.c.l.b16 %v4988
        %v5733 = vunpack.c.h.b16 %v4988
        %v5734 = vunpack.c.l.b16 %v4989
        %v5735 = vunpack.c.h.b16 %v4989
        %v5736 = vunpack.c.l.b16 %v4990
        %v5737 = vunpack.c.h.b16 %v4990
        %v5738 = vunpack.c.l.b16 %v4991
        %v5739 = vunpack.c.h.b16 %v4991
        %v5740 = vunpack.c.l.b16 %v4992
        %v5741 = vunpack.c.h.b16 %v4992
        %v5742 = vunpack.c.l.b16 %v4993
        %v5743 = vunpack.c.h.b16 %v4993
        %v5744 = vunpack.c.l.b16 %v4994
        %v5745 = vunpack.c.h.b16 %v4994
        %v5746 = vunpack.c.l.b16 %v4995
        %v5747 = vunpack.c.h.b16 %v4995
        %v5748 = vunpack.c.l.b16 %v4996
        %v5749 = vunpack.c.h.b16 %v4996
        %v5750 = vunpack.c.l.b16 %v4997
        %v5751 = vunpack.c.h.b16 %v4997
        %v5752 = vunpack.c.l.b16 %v4998
        %v5753 = vunpack.c.h.b16 %v4998
        %v5754 = vunpack.c.l.b16 %v4999
        %v5755 = vunpack.c.h.b16 %v4999
        %v5756 = vunpack.c.l.b16 %v5000
        %v5757 = vunpack.c.h.b16 %v5000
        %v5758 = vunpack.c.l.b16 %v5001
        %v5759 = vunpack.c.h.b16 %v5001
        %v5760 = vunpack.c.l.b16 %v5002
        %v5761 = vunpack.c.h.b16 %v5002
        %v5762 = vunpack.c.l.b16 %v5003
        %v5763 = vunpack.c.h.b16 %v5003
        %v5764 = vunpack.c.l.b16 %v5004
        %v5765 = vunpack.c.h.b16 %v5004
        %v5766 = vunpack.c.l.b16 %v5005
        %v5767 = vunpack.c.h.b16 %v5005
        %v5768 = vunpack.c.l.b16 %v5006
        %v5769 = vunpack.c.h.b16 %v5006
        %v5770 = vunpack.c.l.b16 %v5007
        %v5771 = vunpack.c.h.b16 %v5007
        %v5772 = vunpack.c.l.b16 %v5008
        %v5773 = vunpack.c.h.b16 %v5008
        %v5774 = vunpack.c.l.b16 %v5009
        %v5775 = vunpack.c.h.b16 %v5009
        %v5776 = vunpack.c.l.b16 %v5010
        %v5777 = vunpack.c.h.b16 %v5010
        %v5778 = vunpack.c.l.b16 %v5011
        %v5779 = vunpack.c.h.b16 %v5011
        %v5780 = vunpack.c.l.b16 %v5012
        %v5781 = vunpack.c.h.b16 %v5012
        %v5782 = vunpack.c.l.b16 %v5013
        %v5783 = vunpack.c.h.b16 %v5013
        %v5784 = vunpack.c.l.b16 %v5014
        %v5785 = vunpack.c.h.b16 %v5014
        %v5786 = vunpack.c.l.b16 %v5015
        %v5787 = vunpack.c.h.b16 %v5015
        %v5788 = vunpack.c.l.b16 %v5016
        %v5789 = vunpack.c.h.b16 %v5016
        %v5790 = vunpack.c.l.b16 %v5017
        %v5791 = vunpack.c.h.b16 %v5017
        %v5792 = vunpack.c.l.b16 %v5018
        %v5793 = vunpack.c.h.b16 %v5018
        %v5794 = vunpack.c.l.b16 %v5019
        %v5795 = vunpack.c.h.b16 %v5019
        %v5796 = vunpack.c.l.b16 %v5020
        %v5797 = vunpack.c.h.b16 %v5020
        %v5798 = vunpack.c.l.b16 %v5021
        %v5799 = vunpack.c.h.b16 %v5021
        %v5800 = vunpack.c.l.b16 %v5022
        %v5801 = vunpack.c.h.b16 %v5022
        %v5802 = vunpack.c.l.b16 %v5023
        %v5803 = vunpack.c.h.b16 %v5023
        %v5804 = vunpack.c.l.b16 %v5024
        %v5805 = vunpack.c.h.b16 %v5024
        %v5806 = vunpack.c.l.b16 %v5025
        %v5807 = vunpack.c.h.b16 %v5025
        %v5808 = vunpack.c.l.b16 %v5026
        %v5809 = vunpack.c.h.b16 %v5026
        %v5810 = vunpack.c.l.b16 %v5027
        %v5811 = vunpack.c.h.b16 %v5027
        %v5812 = vunpack.c.l.b16 %v5028
        %v5813 = vunpack.c.h.b16 %v5028
        %v5814 = vunpack.c.l.b16 %v5029
        %v5815 = vunpack.c.h.b16 %v5029
        %v5816 = vunpack.c.l.b16 %v5030
        %v5817 = vunpack.c.h.b16 %v5030
        %v5818 = vunpack.c.l.b16 %v5031
        %v5819 = vunpack.c.h.b16 %v5031
        %v5820 = vunpack.c.l.b16 %v5032
        %v5821 = vunpack.c.h.b16 %v5032
        %v5822 = vunpack.c.l.b16 %v5033
        %v5823 = vunpack.c.h.b16 %v5033
        %v5824 = vunpack.c.l.b16 %v5034
        %v5825 = vunpack.c.h.b16 %v5034
        %v5826 = vunpack.c.l.b16 %v5035
        %v5827 = vunpack.c.h.b16 %v5035
        %v5828 = vunpack.c.l.b16 %v5036
        %v5829 = vunpack.c.h.b16 %v5036
        %v5830 = vunpack.c.l.b16 %v5037
        %v5831 = vunpack.c.h.b16 %v5037
        %v5832 = vunpack.c.l.b16 %v5038
        %v5833 = vunpack.c.h.b16 %v5038
        %v5834 = vunpack.c.l.b16 %v5039
        %v5835 = vunpack.c.h.b16 %v5039
        %v5836 = vunpack.c.l.b16 %v5040
        %v5837 = vunpack.c.h.b16 %v5040
        %v5838 = vunpack.c.l.b16 %v5041
        %v5839 = vunpack.c.h.b16 %v5041
        %v5840 = vunpack.c.l.b16 %v5042
        %v5841 = vunpack.c.h.b16 %v5042
        %v5842 = vunpack.c.l.b16 %v5043
        %v5843 = vunpack.c.h.b16 %v5043
        %v5844 = vunpack.c.l.b16 %v5044
        %v5845 = vunpack.c.h.b16 %v5044
        %v5846 = vunpack.c.l.b16 %v5045
        %v5847 = vunpack.c.h.b16 %v5045
        %v5848 = vunpack.c.l.b16 %v5046
        %v5849 = vunpack.c.h.b16 %v5046
        %v5850 = vunpack.c.l.b16 %v5047
        %v5851 = vunpack.c.h.b16 %v5047
        %v5852 = vunpack.c.l.b16 %v5048
        %v5853 = vunpack.c.h.b16 %v5048
        %v5854 = vunpack.c.l.b16 %v5049
        %v5855 = vunpack.c.h.b16 %v5049
        %v5856 = vunpack.c.l.b16 %v5050
        %v5857 = vunpack.c.h.b16 %v5050
        %v5858 = vunpack.c.l.b16 %v5051
        %v5859 = vunpack.c.h.b16 %v5051
        %v5860 = vunpack.c.l.b16 %v5052
        %v5861 = vunpack.c.h.b16 %v5052
        %v5862 = vunpack.c.l.b16 %v5053
        %v5863 = vunpack.c.h.b16 %v5053
        %v5864 = vunpack.c.l.b16 %v5054
        %v5865 = vunpack.c.h.b16 %v5054
        %v5866 = vunpack.c.l.b16 %v5055
        %v5867 = vunpack.c.h.b16 %v5055
        %v5868 = vunpack.c.l.b16 %v5056
        %v5869 = vunpack.c.h.b16 %v5056
        %v5870 = vunpack.c.l.b16 %v5057
        %v5871 = vunpack.c.h.b16 %v5057
        %v5872 = vunpack.c.l.b16 %v5058
        %v5873 = vunpack.c.h.b16 %v5058
        %v5874 = vunpack.c.l.b16 %v5059
        %v5875 = vunpack.c.h.b16 %v5059
        %v5876 = vunpack.c.l.b16 %v5060
        %v5877 = vunpack.c.h.b16 %v5060
        %v5878 = vunpack.c.l.b16 %v5061
        %v5879 = vunpack.c.h.b16 %v5061
        %v5880 = vunpack.c.l.b16 %v5062
        %v5881 = vunpack.c.h.b16 %v5062
        %v5882 = vunpack.c.l.b16 %v5063
        %v5883 = vunpack.c.h.b16 %v5063
        %v5884 = vunpack.c.l.b16 %v5064
        %v5885 = vunpack.c.h.b16 %v5064
        %v5886 = vunpack.c.l.b16 %v5065
        %v5887 = vunpack.c.h.b16 %v5065
        %v5888 = vunpack.c.l.b16 %v5066
        %v5889 = vunpack.c.h.b16 %v5066
        %v5890 = vunpack.c.l.b16 %v5067
        %v5891 = vunpack.c.h.b16 %v5067
        %v5892 = vunpack.c.l.b16 %v5068
        %v5893 = vunpack.c.h.b16 %v5068
        %v5894 = vunpack.c.l.b16 %v5069
        %v5895 = vunpack.c.h.b16 %v5069
        %v5896 = vunpack.c.l.b16 %v5070
        %v5897 = vunpack.c.h.b16 %v5070
        %v5898 = vunpack.c.l.b16 %v5071
        %v5899 = vunpack.c.h.b16 %v5071
        %v5900 = vunpack.c.l.b16 %v5072
        %v5901 = vunpack.c.h.b16 %v5072
        %v5902 = vunpack.c.l.b16 %v5073
        %v5903 = vunpack.c.h.b16 %v5073
        %v5904 = vunpack.c.l.b16 %v5074
        %v5905 = vunpack.c.h.b16 %v5074
        %v5906 = vunpack.c.l.b16 %v5075
        %v5907 = vunpack.c.h.b16 %v5075
        %v5908 = vunpack.c.l.b16 %v5076
        %v5909 = vunpack.c.h.b16 %v5076
        %v5910 = vunpack.c.l.b16 %v5077
        %v5911 = vunpack.c.h.b16 %v5077
        %v5912 = vunpack.c.l.b16 %v5078
        %v5913 = vunpack.c.h.b16 %v5078
        %v5914 = vunpack.c.l.b16 %v5079
        %v5915 = vunpack.c.h.b16 %v5079
        %v5916 = vunpack.c.l.b16 %v5080
        %v5917 = vunpack.c.h.b16 %v5080
        %v5918 = vunpack.c.l.b16 %v5081
        %v5919 = vunpack.c.h.b16 %v5081
        %v5920 = vunpack.c.l.b16 %v5082
        %v5921 = vunpack.c.h.b16 %v5082
        %v5922 = vunpack.c.l.b16 %v5083
        %v5923 = vunpack.c.h.b16 %v5083
        %v5924 = vunpack.c.l.b16 %v5084
        %v5925 = vunpack.c.h.b16 %v5084
        %v5926 = vunpack.c.l.b16 %v5085
        %v5927 = vunpack.c.h.b16 %v5085
        %v5928 = vunpack.c.l.b16 %v5086
        %v5929 = vunpack.c.h.b16 %v5086
        %v5930 = vunpack.c.l.b16 %v5087
        %v5931 = vunpack.c.h.b16 %v5087
        %v5932 = vunpack.c.l.b16 %v5088
        %v5933 = vunpack.c.h.b16 %v5088
        %v5934 = vunpack.c.l.b16 %v5089
        %v5935 = vunpack.c.h.b16 %v5089
        %v5936 = vunpack.c.l.b16 %v5090
        %v5937 = vunpack.c.h.b16 %v5090
        %v5938 = vunpack.c.l.b16 %v5091
        %v5939 = vunpack.c.h.b16 %v5091
        %v5940 = vunpack.c.l.b16 %v5092
        %v5941 = vunpack.c.h.b16 %v5092
        %v5942 = vunpack.c.l.b16 %v5093
        %v5943 = vunpack.c.h.b16 %v5093
        %v5944 = vunpack.c.l.b16 %v5094
        %v5945 = vunpack.c.h.b16 %v5094
        %v5946 = vunpack.c.l.b16 %v5095
        %v5947 = vunpack.c.h.b16 %v5095
        %v5948 = vunpack.c.l.b16 %v5096
        %v5949 = vunpack.c.h.b16 %v5096
        %v5950 = vunpack.c.l.b16 %v5097
        %v5951 = vunpack.c.h.b16 %v5097
        %v5952 = vunpack.c.l.b16 %v5098
        %v5953 = vunpack.c.h.b16 %v5098
        %v5954 = vunpack.c.l.b16 %v5099
        %v5955 = vunpack.c.h.b16 %v5099
        %v5956 = vunpack.c.l.b16 %v5100
        %v5957 = vunpack.c.h.b16 %v5100
        %v5958 = vunpack.c.l.b16 %v5101
        %v5959 = vunpack.c.h.b16 %v5101
        %v5960 = vunpack.c.l.b16 %v5102
        %v5961 = vunpack.c.h.b16 %v5102
        %v5962 = vunpack.c.l.b16 %v5103
        %v5963 = vunpack.c.h.b16 %v5103
        %v5964 = vunpack.c.l.b16 %v5104
        %v5965 = vunpack.c.h.b16 %v5104
        %v5966 = vunpack.c.l.b16 %v5105
        %v5967 = vunpack.c.h.b16 %v5105
        %v5968 = vunpack.c.l.b16 %v5106
        %v5969 = vunpack.c.h.b16 %v5106
        %v5970 = vunpack.c.l.b16 %v5107
        %v5971 = vunpack.c.h.b16 %v5107
        %v5972 = vunpack.c.l.b16 %v5108
        %v5973 = vunpack.c.h.b16 %v5108
        %v5974 = vunpack.c.l.b16 %v5109
        %v5975 = vunpack.c.h.b16 %v5109
        %v5976 = vunpack.c.l.b16 %v5110
        %v5977 = vunpack.c.h.b16 %v5110
        %v5978 = vunpack.c.l.b16 %v5111
        %v5979 = vunpack.c.h.b16 %v5111
        %v5980 = vunpack.c.l.b16 %v5112
        %v5981 = vunpack.c.h.b16 %v5112
        %v5982 = vunpack.c.l.b16 %v5113
        %v5983 = vunpack.c.h.b16 %v5113
        %v5984 = vunpack.c.l.b16 %v5114
        %v5985 = vunpack.c.h.b16 %v5114
        %v5986 = vunpack.c.l.b16 %v5115
        %v5987 = vunpack.c.h.b16 %v5115
        %v5988 = vunpack.c.l.b16 %v5116
        %v5989 = vunpack.c.h.b16 %v5116
        %v5990 = vunpack.c.l.b16 %v5117
        %v5991 = vunpack.c.h.b16 %v5117
        %v5992 = vunpack.c.l.b16 %v5118
        %v5993 = vunpack.c.h.b16 %v5118
        %v5994 = vunpack.c.l.b16 %v5119
        %v5995 = vunpack.c.h.b16 %v5119
        %v5996 = vunpack.c.l.b16 %v5120
        %v5997 = vunpack.c.h.b16 %v5120
        %v5998 = vunpack.c.l.b16 %v5121
        %v5999 = vunpack.c.h.b16 %v5121
        %v6000 = vpack.c.b16 %v5430, %v5424
        %v6001 = vpack.c.b16 %v5431, %v5425
        %v6002 = vpack.c.b16 %v5432, %v5426
        %v6003 = vpack.c.b16 %v5433, %v5427
        %v6004 = vpack.c.b16 %v5434, %v5428
        %v6005 = vpack.c.b16 %v5435, %v5429
        %v6006 = vpack.c.b16 %v5442, %v5436
        %v6007 = vpack.c.b16 %v5443, %v5437
        %v6008 = vpack.c.b16 %v5444, %v5438
        %v6009 = vpack.c.b16 %v5445, %v5439
        %v6010 = vpack.c.b16 %v5446, %v5440
        %v6011 = vpack.c.b16 %v5447, %v5441
        %v6012 = vpack.c.b16 %v5454, %v5448
        %v6013 = vpack.c.b16 %v5455, %v5449
        %v6014 = vpack.c.b16 %v5456, %v5450
        %v6015 = vpack.c.b16 %v5457, %v5451
        %v6016 = vpack.c.b16 %v5458, %v5452
        %v6017 = vpack.c.b16 %v5459, %v5453
        %v6018 = vpack.c.b16 %v5466, %v5460
        %v6019 = vpack.c.b16 %v5467, %v5461
        %v6020 = vpack.c.b16 %v5468, %v5462
        %v6021 = vpack.c.b16 %v5469, %v5463
        %v6022 = vpack.c.b16 %v5470, %v5464
        %v6023 = vpack.c.b16 %v5471, %v5465
        %v6024 = vpack.c.b16 %v5478, %v5472
        %v6025 = vpack.c.b16 %v5479, %v5473
        %v6026 = vpack.c.b16 %v5480, %v5474
        %v6027 = vpack.c.b16 %v5481, %v5475
        %v6028 = vpack.c.b16 %v5482, %v5476
        %v6029 = vpack.c.b16 %v5483, %v5477
        %v6030 = vpack.c.b16 %v5490, %v5484
        %v6031 = vpack.c.b16 %v5491, %v5485
        %v6032 = vpack.c.b16 %v5492, %v5486
        %v6033 = vpack.c.b16 %v5493, %v5487
        %v6034 = vpack.c.b16 %v5494, %v5488
        %v6035 = vpack.c.b16 %v5495, %v5489
        %v6036 = vpack.c.b16 %v5502, %v5496
        %v6037 = vpack.c.b16 %v5503, %v5497
        %v6038 = vpack.c.b16 %v5504, %v5498
        %v6039 = vpack.c.b16 %v5505, %v5499
        %v6040 = vpack.c.b16 %v5506, %v5500
        %v6041 = vpack.c.b16 %v5507, %v5501
        %v6042 = vpack.c.b16 %v5514, %v5508
        %v6043 = vpack.c.b16 %v5515, %v5509
        %v6044 = vpack.c.b16 %v5516, %v5510
        %v6045 = vpack.c.b16 %v5517, %v5511
        %v6046 = vpack.c.b16 %v5518, %v5512
        %v6047 = vpack.c.b16 %v5519, %v5513
        %v6048 = vpack.c.b16 %v5526, %v5520
        %v6049 = vpack.c.b16 %v5527, %v5521
        %v6050 = vpack.c.b16 %v5528, %v5522
        %v6051 = vpack.c.b16 %v5529, %v5523
        %v6052 = vpack.c.b16 %v5530, %v5524
        %v6053 = vpack.c.b16 %v5531, %v5525
        %v6054 = vpack.c.b16 %v5538, %v5532
        %v6055 = vpack.c.b16 %v5539, %v5533
        %v6056 = vpack.c.b16 %v5540, %v5534
        %v6057 = vpack.c.b16 %v5541, %v5535
        %v6058 = vpack.c.b16 %v5542, %v5536
        %v6059 = vpack.c.b16 %v5543, %v5537
        %v6060 = vpack.c.b16 %v5550, %v5544
        %v6061 = vpack.c.b16 %v5551, %v5545
        %v6062 = vpack.c.b16 %v5552, %v5546
        %v6063 = vpack.c.b16 %v5553, %v5547
        %v6064 = vpack.c.b16 %v5554, %v5548
        %v6065 = vpack.c.b16 %v5555, %v5549
        %v6066 = vpack.c.b16 %v5562, %v5556
        %v6067 = vpack.c.b16 %v5563, %v5557
        %v6068 = vpack.c.b16 %v5564, %v5558
        %v6069 = vpack.c.b16 %v5565, %v5559
        %v6070 = vpack.c.b16 %v5566, %v5560
        %v6071 = vpack.c.b16 %v5567, %v5561
        %v6072 = vpack.c.b16 %v5574, %v5568
        %v6073 = vpack.c.b16 %v5575, %v5569
        %v6074 = vpack.c.b16 %v5576, %v5570
        %v6075 = vpack.c.b16 %v5577, %v5571
        %v6076 = vpack.c.b16 %v5578, %v5572
        %v6077 = vpack.c.b16 %v5579, %v5573
        %v6078 = vpack.c.b16 %v5586, %v5580
        %v6079 = vpack.c.b16 %v5587, %v5581
        %v6080 = vpack.c.b16 %v5588, %v5582
        %v6081 = vpack.c.b16 %v5589, %v5583
        %v6082 = vpack.c.b16 %v5590, %v5584
        %v6083 = vpack.c.b16 %v5591, %v5585
        %v6084 = vpack.c.b16 %v5598, %v5592
        %v6085 = vpack.c.b16 %v5599, %v5593
        %v6086 = vpack.c.b16 %v5600, %v5594
        %v6087 = vpack.c.b16 %v5601, %v5595
        %v6088 = vpack.c.b16 %v5602, %v5596
        %v6089 = vpack.c.b16 %v5603, %v5597
        %v6090 = vpack.c.b16 %v5610, %v5604
        %v6091 = vpack.c.b16 %v5611, %v5605
        %v6092 = vpack.c.b16 %v5612, %v5606
        %v6093 = vpack.c.b16 %v5613, %v5607
        %v6094 = vpack.c.b16 %v5614, %v5608
        %v6095 = vpack.c.b16 %v5615, %v5609
        %v6096 = vpack.c.b16 %v5622, %v5616
        %v6097 = vpack.c.b16 %v5623, %v5617
        %v6098 = vpack.c.b16 %v5624, %v5618
        %v6099 = vpack.c.b16 %v5625, %v5619
        %v6100 = vpack.c.b16 %v5626, %v5620
        %v6101 = vpack.c.b16 %v5627, %v5621
        %v6102 = vpack.c.b16 %v5634, %v5628
        %v6103 = vpack.c.b16 %v5635, %v5629
        %v6104 = vpack.c.b16 %v5636, %v5630
        %v6105 = vpack.c.b16 %v5637, %v5631
        %v6106 = vpack.c.b16 %v5638, %v5632
        %v6107 = vpack.c.b16 %v5639, %v5633
        %v6108 = vpack.c.b16 %v5646, %v5640
        %v6109 = vpack.c.b16 %v5647, %v5641
        %v6110 = vpack.c.b16 %v5648, %v5642
        %v6111 = vpack.c.b16 %v5649, %v5643
        %v6112 = vpack.c.b16 %v5650, %v5644
        %v6113 = vpack.c.b16 %v5651, %v5645
        %v6114 = vpack.c.b16 %v5658, %v5652
        %v6115 = vpack.c.b16 %v5659, %v5653
        %v6116 = vpack.c.b16 %v5660, %v5654
        %v6117 = vpack.c.b16 %v5661, %v5655
        %v6118 = vpack.c.b16 %v5662, %v5656
        %v6119 = vpack.c.b16 %v5663, %v5657
        %v6120 = vpack.c.b16 %v5670, %v5664
        %v6121 = vpack.c.b16 %v5671, %v5665
        %v6122 = vpack.c.b16 %v5672, %v5666
        %v6123 = vpack.c.b16 %v5673, %v5667
        %v6124 = vpack.c.b16 %v5674, %v5668
        %v6125 = vpack.c.b16 %v5675, %v5669
        %v6126 = vpack.c.b16 %v5682, %v5676
        %v6127 = vpack.c.b16 %v5683, %v5677
        %v6128 = vpack.c.b16 %v5684, %v5678
        %v6129 = vpack.c.b16 %v5685, %v5679
        %v6130 = vpack.c.b16 %v5686, %v5680
        %v6131 = vpack.c.b16 %v5687, %v5681
        %v6132 = vpack.c.b16 %v5694, %v5688
        %v6133 = vpack.c.b16 %v5695, %v5689
        %v6134 = vpack.c.b16 %v5696, %v5690
        %v6135 = vpack.c.b16 %v5697, %v5691
        %v6136 = vpack.c.b16 %v5698, %v5692
        %v6137 = vpack.c.b16 %v5699, %v5693
        %v6138 = vpack.c.b16 %v5706, %v5700
        %v6139 = vpack.c.b16 %v5707, %v5701
        %v6140 = vpack.c.b16 %v5708, %v5702
        %v6141 = vpack.c.b16 %v5709, %v5703
        %v6142 = vpack.c.b16 %v5710, %v5704
        %v6143 = vpack.c.b16 %v5711, %v5705
        %v6144 = vpack.c.b16 %v5718, %v5712
        %v6145 = vpack.c.b16 %v5719, %v5713
        %v6146 = vpack.c.b16 %v5720, %v5714
        %v6147 = vpack.c.b16 %v5721, %v5715
        %v6148 = vpack.c.b16 %v5722, %v5716
        %v6149 = vpack.c.b16 %v5723, %v5717
        %v6150 = vpack.c.b16 %v5730, %v5724
        %v6151 = vpack.c.b16 %v5731, %v5725
        %v6152 = vpack.c.b16 %v5732, %v5726
        %v6153 = vpack.c.b16 %v5733, %v5727
        %v6154 = vpack.c.b16 %v5734, %v5728
        %v6155 = vpack.c.b16 %v5735, %v5729
        %v6156 = vpack.c.b16 %v5742, %v5736
        %v6157 = vpack.c.b16 %v5743, %v5737
        %v6158 = vpack.c.b16 %v5744, %v5738
        %v6159 = vpack.c.b16 %v5745, %v5739
        %v6160 = vpack.c.b16 %v5746, %v5740
        %v6161 = vpack.c.b16 %v5747, %v5741
        %v6162 = vpack.c.b16 %v5754, %v5748
        %v6163 = vpack.c.b16 %v5755, %v5749
        %v6164 = vpack.c.b16 %v5756, %v5750
        %v6165 = vpack.c.b16 %v5757, %v5751
        %v6166 = vpack.c.b16 %v5758, %v5752
        %v6167 = vpack.c.b16 %v5759, %v5753
        %v6168 = vpack.c.b16 %v5766, %v5760
        %v6169 = vpack.c.b16 %v5767, %v5761
        %v6170 = vpack.c.b16 %v5768, %v5762
        %v6171 = vpack.c.b16 %v5769, %v5763
        %v6172 = vpack.c.b16 %v5770, %v5764
        %v6173 = vpack.c.b16 %v5771, %v5765
        %v6174 = vpack.c.b16 %v5778, %v5772
        %v6175 = vpack.c.b16 %v5779, %v5773
        %v6176 = vpack.c.b16 %v5780, %v5774
        %v6177 = vpack.c.b16 %v5781, %v5775
        %v6178 = vpack.c.b16 %v5782, %v5776
        %v6179 = vpack.c.b16 %v5783, %v5777
        %v6180 = vpack.c.b16 %v5790, %v5784
        %v6181 = vpack.c.b16 %v5791, %v5785
        %v6182 = vpack.c.b16 %v5792, %v5786
        %v6183 = vpack.c.b16 %v5793, %v5787
        %v6184 = vpack.c.b16 %v5794, %v5788
        %v6185 = vpack.c.b16 %v5795, %v5789
        %v6186 = vpack.c.b16 %v5802, %v5796
        %v6187 = vpack.c.b16 %v5803, %v5797
        %v6188 = vpack.c.b16 %v5804, %v5798
        %v6189 = vpack.c.b16 %v5805, %v5799
        %v6190 = vpack.c.b16 %v5806, %v5800
        %v6191 = vpack.c.b16 %v5807, %v5801
        %v6192 = vpack.c.b16 %v5814, %v5808
        %v6193 = vpack.c.b16 %v5815, %v5809
        %v6194 = vpack.c.b16 %v5816, %v5810
        %v6195 = vpack.c.b16 %v5817, %v5811
        %v6196 = vpack.c.b16 %v5818, %v5812
        %v6197 = vpack.c.b16 %v5819, %v5813
        %v6198 = vpack.c.b16 %v5826, %v5820
        %v6199 = vpack.c.b16 %v5827, %v5821
        %v6200 = vpack.c.b16 %v5828, %v5822
        %v6201 = vpack.c.b16 %v5829, %v5823
        %v6202 = vpack.c.b16 %v5830, %v5824
        %v6203 = vpack.c.b16 %v5831, %v5825
        %v6204 = vpack.c.b16 %v5838, %v5832
        %v6205 = vpack.c.b16 %v5839, %v5833
        %v6206 = vpack.c.b16 %v5840, %v5834
        %v6207 = vpack.c.b16 %v5841, %v5835
        %v6208 = vpack.c.b16 %v5842, %v5836
        %v6209 = vpack.c.b16 %v5843, %v5837
        %v6210 = vpack.c.b16 %v5850, %v5844
        %v6211 = vpack.c.b16 %v5851, %v5845
        %v6212 = vpack.c.b16 %v5852, %v5846
        %v6213 = vpack.c.b16 %v5853, %v5847
        %v6214 = vpack.c.b16 %v5854, %v5848
        %v6215 = vpack.c.b16 %v5855, %v5849
        %v6216 = vpack.c.b16 %v5862, %v5856
        %v6217 = vpack.c.b16 %v5863, %v5857
        %v6218 = vpack.c.b16 %v5864, %v5858
        %v6219 = vpack.c.b16 %v5865, %v5859
        %v6220 = vpack.c.b16 %v5866, %v5860
        %v6221 = vpack.c.b16 %v5867, %v5861
        %v6222 = vpack.c.b16 %v5874, %v5868
        %v6223 = vpack.c.b16 %v5875, %v5869
        %v6224 = vpack.c.b16 %v5876, %v5870
        %v6225 = vpack.c.b16 %v5877, %v5871
        %v6226 = vpack.c.b16 %v5878, %v5872
        %v6227 = vpack.c.b16 %v5879, %v5873
        %v6228 = vpack.c.b16 %v5886, %v5880
        %v6229 = vpack.c.b16 %v5887, %v5881
        %v6230 = vpack.c.b16 %v5888, %v5882
        %v6231 = vpack.c.b16 %v5889, %v5883
        %v6232 = vpack.c.b16 %v5890, %v5884
        %v6233 = vpack.c.b16 %v5891, %v5885
        %v6234 = vpack.c.b16 %v5898, %v5892
        %v6235 = vpack.c.b16 %v5899, %v5893
        %v6236 = vpack.c.b16 %v5900, %v5894
        %v6237 = vpack.c.b16 %v5901, %v5895
        %v6238 = vpack.c.b16 %v5902, %v5896
        %v6239 = vpack.c.b16 %v5903, %v5897
        %v6240 = vpack.c.b16 %v5910, %v5904
        %v6241 = vpack.c.b16 %v5911, %v5905
        %v6242 = vpack.c.b16 %v5912, %v5906
        %v6243 = vpack.c.b16 %v5913, %v5907
        %v6244 = vpack.c.b16 %v5914, %v5908
        %v6245 = vpack.c.b16 %v5915, %v5909
        %v6246 = vpack.c.b16 %v5922, %v5916
        %v6247 = vpack.c.b16 %v5923, %v5917
        %v6248 = vpack.c.b16 %v5924, %v5918
        %v6249 = vpack.c.b16 %v5925, %v5919
        %v6250 = vpack.c.b16 %v5926, %v5920
        %v6251 = vpack.c.b16 %v5927, %v5921
        %v6252 = vpack.c.b16 %v5934, %v5928
        %v6253 = vpack.c.b16 %v5935, %v5929
        %v6254 = vpack.c.b16 %v5936, %v5930
        %v6255 = vpack.c.b16 %v5937, %v5931
        %v6256 = vpack.c.b16 %v5938, %v5932
        %v6257 = vpack.c.b16 %v5939, %v5933
        %v6258 = vpack.c.b16 %v5946, %v5940
        %v6259 = vpack.c.b16 %v5947, %v5941
        %v6260 = vpack.c.b16 %v5948, %v5942
        %v6261 = vpack.c.b16 %v5949, %v5943
        %v6262 = vpack.c.b16 %v5950, %v5944
        %v6263 = vpack.c.b16 %v5951, %v5945
        %v6264 = vpack.c.b16 %v5958, %v5952
        %v6265 = vpack.c.b16 %v5959, %v5953
        %v6266 = vpack.c.b16 %v5960, %v5954
        %v6267 = vpack.c.b16 %v5961, %v5955
        %v6268 = vpack.c.b16 %v5962, %v5956
        %v6269 = vpack.c.b16 %v5963, %v5957
        %v6270 = vpack.c.b16 %v5970, %v5964
        %v6271 = vpack.c.b16 %v5971, %v5965
        %v6272 = vpack.c.b16 %v5972, %v5966
        %v6273 = vpack.c.b16 %v5973, %v5967
        %v6274 = vpack.c.b16 %v5974, %v5968
        %v6275 = vpack.c.b16 %v5975, %v5969
        %v6276 = vpack.c.b16 %v5982, %v5976
        %v6277 = vpack.c.b16 %v5983, %v5977
        %v6278 = vpack.c.b16 %v5984, %v5978
        %v6279 = vpack.c.b16 %v5985, %v5979
        %v6280 = vpack.c.b16 %v5986, %v5980
        %v6281 = vpack.c.b16 %v5987, %v5981
        %v6282 = vpack.c.b16 %v5994, %v5988
        %v6283 = vpack.c.b16 %v5995, %v5989
        %v6284 = vpack.c.b16 %v5996, %v5990
        %v6285 = vpack.c.b16 %v5997, %v5991
        %v6286 = vpack.c.b16 %v5998, %v5992
        %v6287 = vpack.c.b16 %v5999, %v5993
        %6576 = vmatpush.bf16.msra.mxu0 %v6042
        %6577 = vmatpush.bf16.msra.mxu0 %v6036
        %6578 = vmatpush.bf16.msra.mxu0 %v6030
        %6579 = vmatpush.bf16.msra.mxu0 %v6024
        %6580 = vmatpush.bf16.msra.mxu0 %v6018
        %6581 = vmatpush.bf16.msra.mxu0 %v6012
        %6582 = vmatpush.bf16.msra.mxu0 %v6006
        %6583 = vmatpush.bf16.msra.mxu0 %v6000
        %6584 = vmatmul.bf16.gmra.mxu0 %v4828
        %v6585 = vpop.f32.mrf.mxu0
        %v6586 = vadd.f32 %v5124, %v6585
        %v6587 = vpop.f32.mrf.mxu0
        %6588 = vdwg.mxu0
        %6589 = vmatpush.bf16.msra.mxu0 %v6090
        %6590 = vmatpush.bf16.msra.mxu0 %v6084
        %6591 = vmatpush.bf16.msra.mxu0 %v6078
        %6592 = vmatpush.bf16.msra.mxu0 %v6072
        %6593 = vmatpush.bf16.msra.mxu0 %v6066
        %6594 = vmatpush.bf16.msra.mxu0 %v6060
        %6595 = vmatpush.bf16.msra.mxu0 %v6054
        %6596 = vmatpush.bf16.msra.mxu0 %v6048
        %6597 = vmatmul.bf16.gmra.mxu0 %v4829
        %v6598 = vpop.f32.mrf.mxu0
        %v6599 = vadd.f32 %v6586, %v6598
        %v6600 = vpop.f32.mrf.mxu0
        %6601 = vdwg.mxu0
        %6602 = vmatpush.bf16.msra.mxu0 %v6138
        %6603 = vmatpush.bf16.msra.mxu0 %v6132
        %6604 = vmatpush.bf16.msra.mxu0 %v6126
        %6605 = vmatpush.bf16.msra.mxu0 %v6120
        %6606 = vmatpush.bf16.msra.mxu0 %v6114
        %6607 = vmatpush.bf16.msra.mxu0 %v6108
        %6608 = vmatpush.bf16.msra.mxu0 %v6102
        %6609 = vmatpush.bf16.msra.mxu0 %v6096
        %6610 = vmatmul.bf16.gmra.mxu0 %v4830
        %v6611 = vpop.f32.mrf.mxu0
        %v6612 = vadd.f32 %v6599, %v6611
        %v6613 = vpop.f32.mrf.mxu0
        %6614 = vdwg.mxu0
        %6615 = vmatpush.bf16.msra.mxu0 %v6186
        %6616 = vmatpush.bf16.msra.mxu0 %v6180
        %6617 = vmatpush.bf16.msra.mxu0 %v6174
        %6618 = vmatpush.bf16.msra.mxu0 %v6168
        %6619 = vmatpush.bf16.msra.mxu0 %v6162
        %6620 = vmatpush.bf16.msra.mxu0 %v6156
        %6621 = vmatpush.bf16.msra.mxu0 %v6150
        %6622 = vmatpush.bf16.msra.mxu0 %v6144
        %6623 = vmatmul.bf16.gmra.mxu0 %v4831
        %v6624 = vpop.f32.mrf.mxu0
        %v6625 = vadd.f32 %v6612, %v6624
        %v6626 = vpop.f32.mrf.mxu0
        %6627 = vdwg.mxu0
        %6628 = vmatpush.bf16.msra.mxu0 %v6234
        %6629 = vmatpush.bf16.msra.mxu0 %v6228
        %6630 = vmatpush.bf16.msra.mxu0 %v6222
        %6631 = vmatpush.bf16.msra.mxu0 %v6216
        %6632 = vmatpush.bf16.msra.mxu0 %v6210
        %6633 = vmatpush.bf16.msra.mxu0 %v6204
        %6634 = vmatpush.bf16.msra.mxu0 %v6198
        %6635 = vmatpush.bf16.msra.mxu0 %v6192
        %6636 = vmatmul.bf16.gmra.mxu0 %v4832
        %v6637 = vpop.f32.mrf.mxu0
        %v6638 = vadd.f32 %v6625, %v6637
        %v6639 = vpop.f32.mrf.mxu0
        %6640 = vdwg.mxu0
        %6641 = vmatpush.bf16.msra.mxu0 %v6282
        %6642 = vmatpush.bf16.msra.mxu0 %v6276
        %6643 = vmatpush.bf16.msra.mxu0 %v6270
        %6644 = vmatpush.bf16.msra.mxu0 %v6264
        %6645 = vmatpush.bf16.msra.mxu0 %v6258
        %6646 = vmatpush.bf16.msra.mxu0 %v6252
        %6647 = vmatpush.bf16.msra.mxu0 %v6246
        %6648 = vmatpush.bf16.msra.mxu0 %v6240
        %6649 = vmatmul.bf16.gmra.mxu0 %v4833
        %v6650 = vpop.f32.mrf.mxu0
        %v6651 = vadd.f32 %v6638, %v6650
        %v6652 = vpop.f32.mrf.mxu0
        %6653 = vdwg.mxu0
        %6654 = vmatpush.bf16.msra.mxu0 %v6043
        %6655 = vmatpush.bf16.msra.mxu0 %v6037
        %6656 = vmatpush.bf16.msra.mxu0 %v6031
        %6657 = vmatpush.bf16.msra.mxu0 %v6025
        %6658 = vmatpush.bf16.msra.mxu0 %v6019
        %6659 = vmatpush.bf16.msra.mxu0 %v6013
        %6660 = vmatpush.bf16.msra.mxu0 %v6007
        %6661 = vmatpush.bf16.msra.mxu0 %v6001
        %6662 = vmatmul.bf16.gmra.mxu0 %v4828
        %v6663 = vpop.f32.mrf.mxu0
        %v6664 = vadd.f32 %v5125, %v6663
        %v6665 = vpop.f32.mrf.mxu0
        %6666 = vdwg.mxu0
        %6667 = vmatpush.bf16.msra.mxu0 %v6091
        %6668 = vmatpush.bf16.msra.mxu0 %v6085
        %6669 = vmatpush.bf16.msra.mxu0 %v6079
        %6670 = vmatpush.bf16.msra.mxu0 %v6073
        %6671 = vmatpush.bf16.msra.mxu0 %v6067
        %6672 = vmatpush.bf16.msra.mxu0 %v6061
        %6673 = vmatpush.bf16.msra.mxu0 %v6055
        %6674 = vmatpush.bf16.msra.mxu0 %v6049
        %6675 = vmatmul.bf16.gmra.mxu0 %v4829
        %v6676 = vpop.f32.mrf.mxu0
        %v6677 = vadd.f32 %v6664, %v6676
        %v6678 = vpop.f32.mrf.mxu0
        %6679 = vdwg.mxu0
        %6680 = vmatpush.bf16.msra.mxu0 %v6139
        %6681 = vmatpush.bf16.msra.mxu0 %v6133
        %6682 = vmatpush.bf16.msra.mxu0 %v6127
        %6683 = vmatpush.bf16.msra.mxu0 %v6121
        %6684 = vmatpush.bf16.msra.mxu0 %v6115
        %6685 = vmatpush.bf16.msra.mxu0 %v6109
        %6686 = vmatpush.bf16.msra.mxu0 %v6103
        %6687 = vmatpush.bf16.msra.mxu0 %v6097
        %6688 = vmatmul.bf16.gmra.mxu0 %v4830
        %v6689 = vpop.f32.mrf.mxu0
        %v6690 = vadd.f32 %v6677, %v6689
        %v6691 = vpop.f32.mrf.mxu0
        %6692 = vdwg.mxu0
        %6693 = vmatpush.bf16.msra.mxu0 %v6187
        %6694 = vmatpush.bf16.msra.mxu0 %v6181
        %6695 = vmatpush.bf16.msra.mxu0 %v6175
        %6696 = vmatpush.bf16.msra.mxu0 %v6169
        %6697 = vmatpush.bf16.msra.mxu0 %v6163
        %6698 = vmatpush.bf16.msra.mxu0 %v6157
        %6699 = vmatpush.bf16.msra.mxu0 %v6151
        %6700 = vmatpush.bf16.msra.mxu0 %v6145
        %6701 = vmatmul.bf16.gmra.mxu0 %v4831
        %v6702 = vpop.f32.mrf.mxu0
        %v6703 = vadd.f32 %v6690, %v6702
        %v6704 = vpop.f32.mrf.mxu0
        %6705 = vdwg.mxu0
        %6706 = vmatpush.bf16.msra.mxu0 %v6235
        %6707 = vmatpush.bf16.msra.mxu0 %v6229
        %6708 = vmatpush.bf16.msra.mxu0 %v6223
        %6709 = vmatpush.bf16.msra.mxu0 %v6217
        %6710 = vmatpush.bf16.msra.mxu0 %v6211
        %6711 = vmatpush.bf16.msra.mxu0 %v6205
        %6712 = vmatpush.bf16.msra.mxu0 %v6199
        %6713 = vmatpush.bf16.msra.mxu0 %v6193
        %6714 = vmatmul.bf16.gmra.mxu0 %v4832
        %v6715 = vpop.f32.mrf.mxu0
        %v6716 = vadd.f32 %v6703, %v6715
        %v6717 = vpop.f32.mrf.mxu0
        %6718 = vdwg.mxu0
        %6719 = vmatpush.bf16.msra.mxu0 %v6283
        %6720 = vmatpush.bf16.msra.mxu0 %v6277
        %6721 = vmatpush.bf16.msra.mxu0 %v6271
        %6722 = vmatpush.bf16.msra.mxu0 %v6265
        %6723 = vmatpush.bf16.msra.mxu0 %v6259
        %6724 = vmatpush.bf16.msra.mxu0 %v6253
        %6725 = vmatpush.bf16.msra.mxu0 %v6247
        %6726 = vmatpush.bf16.msra.mxu0 %v6241
        %6727 = vmatmul.bf16.gmra.mxu0 %v4833
        %v6728 = vpop.f32.mrf.mxu0
        %v6729 = vadd.f32 %v6716, %v6728
        %v6730 = vpop.f32.mrf.mxu0
        %6731 = vdwg.mxu0
        %6732 = vmatpush.bf16.msra.mxu0 %v6044
        %6733 = vmatpush.bf16.msra.mxu0 %v6038
        %6734 = vmatpush.bf16.msra.mxu0 %v6032
        %6735 = vmatpush.bf16.msra.mxu0 %v6026
        %6736 = vmatpush.bf16.msra.mxu0 %v6020
        %6737 = vmatpush.bf16.msra.mxu0 %v6014
        %6738 = vmatpush.bf16.msra.mxu0 %v6008
        %6739 = vmatpush.bf16.msra.mxu0 %v6002
        %6740 = vmatmul.bf16.gmra.mxu0 %v4828
        %v6741 = vpop.f32.mrf.mxu0
        %v6742 = vadd.f32 %v5126, %v6741
        %v6743 = vpop.f32.mrf.mxu0
        %6744 = vdwg.mxu0
        %6745 = vmatpush.bf16.msra.mxu0 %v6092
        %6746 = vmatpush.bf16.msra.mxu0 %v6086
        %6747 = vmatpush.bf16.msra.mxu0 %v6080
        %6748 = vmatpush.bf16.msra.mxu0 %v6074
        %6749 = vmatpush.bf16.msra.mxu0 %v6068
        %6750 = vmatpush.bf16.msra.mxu0 %v6062
        %6751 = vmatpush.bf16.msra.mxu0 %v6056
        %6752 = vmatpush.bf16.msra.mxu0 %v6050
        %6753 = vmatmul.bf16.gmra.mxu0 %v4829
        %v6754 = vpop.f32.mrf.mxu0
        %v6755 = vadd.f32 %v6742, %v6754
        %v6756 = vpop.f32.mrf.mxu0
        %6757 = vdwg.mxu0
        %6758 = vmatpush.bf16.msra.mxu0 %v6140
        %6759 = vmatpush.bf16.msra.mxu0 %v6134
        %6760 = vmatpush.bf16.msra.mxu0 %v6128
        %6761 = vmatpush.bf16.msra.mxu0 %v6122
        %6762 = vmatpush.bf16.msra.mxu0 %v6116
        %6763 = vmatpush.bf16.msra.mxu0 %v6110
        %6764 = vmatpush.bf16.msra.mxu0 %v6104
        %6765 = vmatpush.bf16.msra.mxu0 %v6098
        %6766 = vmatmul.bf16.gmra.mxu0 %v4830
        %v6767 = vpop.f32.mrf.mxu0
        %v6768 = vadd.f32 %v6755, %v6767
        %v6769 = vpop.f32.mrf.mxu0
        %6770 = vdwg.mxu0
        %6771 = vmatpush.bf16.msra.mxu0 %v6188
        %6772 = vmatpush.bf16.msra.mxu0 %v6182
        %6773 = vmatpush.bf16.msra.mxu0 %v6176
        %6774 = vmatpush.bf16.msra.mxu0 %v6170
        %6775 = vmatpush.bf16.msra.mxu0 %v6164
        %6776 = vmatpush.bf16.msra.mxu0 %v6158
        %6777 = vmatpush.bf16.msra.mxu0 %v6152
        %6778 = vmatpush.bf16.msra.mxu0 %v6146
        %6779 = vmatmul.bf16.gmra.mxu0 %v4831
        %v6780 = vpop.f32.mrf.mxu0
        %v6781 = vadd.f32 %v6768, %v6780
        %v6782 = vpop.f32.mrf.mxu0
        %6783 = vdwg.mxu0
        %6784 = vmatpush.bf16.msra.mxu0 %v6236
        %6785 = vmatpush.bf16.msra.mxu0 %v6230
        %6786 = vmatpush.bf16.msra.mxu0 %v6224
        %6787 = vmatpush.bf16.msra.mxu0 %v6218
        %6788 = vmatpush.bf16.msra.mxu0 %v6212
        %6789 = vmatpush.bf16.msra.mxu0 %v6206
        %6790 = vmatpush.bf16.msra.mxu0 %v6200
        %6791 = vmatpush.bf16.msra.mxu0 %v6194
        %6792 = vmatmul.bf16.gmra.mxu0 %v4832
        %v6793 = vpop.f32.mrf.mxu0
        %v6794 = vadd.f32 %v6781, %v6793
        %v6795 = vpop.f32.mrf.mxu0
        %6796 = vdwg.mxu0
        %6797 = vmatpush.bf16.msra.mxu0 %v6284
        %6798 = vmatpush.bf16.msra.mxu0 %v6278
        %6799 = vmatpush.bf16.msra.mxu0 %v6272
        %6800 = vmatpush.bf16.msra.mxu0 %v6266
        %6801 = vmatpush.bf16.msra.mxu0 %v6260
        %6802 = vmatpush.bf16.msra.mxu0 %v6254
        %6803 = vmatpush.bf16.msra.mxu0 %v6248
        %6804 = vmatpush.bf16.msra.mxu0 %v6242
        %6805 = vmatmul.bf16.gmra.mxu0 %v4833
        %v6806 = vpop.f32.mrf.mxu0
        %v6807 = vadd.f32 %v6794, %v6806
        %v6808 = vpop.f32.mrf.mxu0
        %6809 = vdwg.mxu0
        %6810 = vmatpush.bf16.msra.mxu0 %v6045
        %6811 = vmatpush.bf16.msra.mxu0 %v6039
        %6812 = vmatpush.bf16.msra.mxu0 %v6033
        %6813 = vmatpush.bf16.msra.mxu0 %v6027
        %6814 = vmatpush.bf16.msra.mxu0 %v6021
        %6815 = vmatpush.bf16.msra.mxu0 %v6015
        %6816 = vmatpush.bf16.msra.mxu0 %v6009
        %6817 = vmatpush.bf16.msra.mxu0 %v6003
        %6818 = vmatmul.bf16.gmra.mxu0 %v4828
        %v6819 = vpop.f32.mrf.mxu0
        %v6820 = vadd.f32 %v5127, %v6819
        %v6821 = vpop.f32.mrf.mxu0
        %6822 = vdwg.mxu0
        %6823 = vmatpush.bf16.msra.mxu0 %v6093
        %6824 = vmatpush.bf16.msra.mxu0 %v6087
        %6825 = vmatpush.bf16.msra.mxu0 %v6081
        %6826 = vmatpush.bf16.msra.mxu0 %v6075
        %6827 = vmatpush.bf16.msra.mxu0 %v6069
        %6828 = vmatpush.bf16.msra.mxu0 %v6063
        %6829 = vmatpush.bf16.msra.mxu0 %v6057
        %6830 = vmatpush.bf16.msra.mxu0 %v6051
        %6831 = vmatmul.bf16.gmra.mxu0 %v4829
        %v6832 = vpop.f32.mrf.mxu0
        %v6833 = vadd.f32 %v6820, %v6832
        %v6834 = vpop.f32.mrf.mxu0
        %6835 = vdwg.mxu0
        %6836 = vmatpush.bf16.msra.mxu0 %v6141
        %6837 = vmatpush.bf16.msra.mxu0 %v6135
        %6838 = vmatpush.bf16.msra.mxu0 %v6129
        %6839 = vmatpush.bf16.msra.mxu0 %v6123
        %6840 = vmatpush.bf16.msra.mxu0 %v6117
        %6841 = vmatpush.bf16.msra.mxu0 %v6111
        %6842 = vmatpush.bf16.msra.mxu0 %v6105
        %6843 = vmatpush.bf16.msra.mxu0 %v6099
        %6844 = vmatmul.bf16.gmra.mxu0 %v4830
        %v6845 = vpop.f32.mrf.mxu0
        %v6846 = vadd.f32 %v6833, %v6845
        %v6847 = vpop.f32.mrf.mxu0
        %6848 = vdwg.mxu0
        %6849 = vmatpush.bf16.msra.mxu0 %v6189
        %6850 = vmatpush.bf16.msra.mxu0 %v6183
        %6851 = vmatpush.bf16.msra.mxu0 %v6177
        %6852 = vmatpush.bf16.msra.mxu0 %v6171
        %6853 = vmatpush.bf16.msra.mxu0 %v6165
        %6854 = vmatpush.bf16.msra.mxu0 %v6159
        %6855 = vmatpush.bf16.msra.mxu0 %v6153
        %6856 = vmatpush.bf16.msra.mxu0 %v6147
        %6857 = vmatmul.bf16.gmra.mxu0 %v4831
        %v6858 = vpop.f32.mrf.mxu0
        %v6859 = vadd.f32 %v6846, %v6858
        %v6860 = vpop.f32.mrf.mxu0
        %6861 = vdwg.mxu0
        %6862 = vmatpush.bf16.msra.mxu0 %v6237
        %6863 = vmatpush.bf16.msra.mxu0 %v6231
        %6864 = vmatpush.bf16.msra.mxu0 %v6225
        %6865 = vmatpush.bf16.msra.mxu0 %v6219
        %6866 = vmatpush.bf16.msra.mxu0 %v6213
        %6867 = vmatpush.bf16.msra.mxu0 %v6207
        %6868 = vmatpush.bf16.msra.mxu0 %v6201
        %6869 = vmatpush.bf16.msra.mxu0 %v6195
        %6870 = vmatmul.bf16.gmra.mxu0 %v4832
        %v6871 = vpop.f32.mrf.mxu0
        %v6872 = vadd.f32 %v6859, %v6871
        %v6873 = vpop.f32.mrf.mxu0
        %6874 = vdwg.mxu0
        %6875 = vmatpush.bf16.msra.mxu0 %v6285
        %6876 = vmatpush.bf16.msra.mxu0 %v6279
        %6877 = vmatpush.bf16.msra.mxu0 %v6273
        %6878 = vmatpush.bf16.msra.mxu0 %v6267
        %6879 = vmatpush.bf16.msra.mxu0 %v6261
        %6880 = vmatpush.bf16.msra.mxu0 %v6255
        %6881 = vmatpush.bf16.msra.mxu0 %v6249
        %6882 = vmatpush.bf16.msra.mxu0 %v6243
        %6883 = vmatmul.bf16.gmra.mxu0 %v4833
        %v6884 = vpop.f32.mrf.mxu0
        %v6885 = vadd.f32 %v6872, %v6884
        %v6886 = vpop.f32.mrf.mxu0
        %6887 = vdwg.mxu0
        %6888 = vmatpush.bf16.msra.mxu0 %v6046
        %6889 = vmatpush.bf16.msra.mxu0 %v6040
        %6890 = vmatpush.bf16.msra.mxu0 %v6034
        %6891 = vmatpush.bf16.msra.mxu0 %v6028
        %6892 = vmatpush.bf16.msra.mxu0 %v6022
        %6893 = vmatpush.bf16.msra.mxu0 %v6016
        %6894 = vmatpush.bf16.msra.mxu0 %v6010
        %6895 = vmatpush.bf16.msra.mxu0 %v6004
        %6896 = vmatmul.bf16.gmra.mxu0 %v4828
        %v6897 = vpop.f32.mrf.mxu0
        %v6898 = vadd.f32 %v5128, %v6897
        %v6899 = vpop.f32.mrf.mxu0
        %6900 = vdwg.mxu0
        %6901 = vmatpush.bf16.msra.mxu0 %v6094
        %6902 = vmatpush.bf16.msra.mxu0 %v6088
        %6903 = vmatpush.bf16.msra.mxu0 %v6082
        %6904 = vmatpush.bf16.msra.mxu0 %v6076
        %6905 = vmatpush.bf16.msra.mxu0 %v6070
        %6906 = vmatpush.bf16.msra.mxu0 %v6064
        %6907 = vmatpush.bf16.msra.mxu0 %v6058
        %6908 = vmatpush.bf16.msra.mxu0 %v6052
        %6909 = vmatmul.bf16.gmra.mxu0 %v4829
        %v6910 = vpop.f32.mrf.mxu0
        %v6911 = vadd.f32 %v6898, %v6910
        %v6912 = vpop.f32.mrf.mxu0
        %6913 = vdwg.mxu0
        %6914 = vmatpush.bf16.msra.mxu0 %v6142
        %6915 = vmatpush.bf16.msra.mxu0 %v6136
        %6916 = vmatpush.bf16.msra.mxu0 %v6130
        %6917 = vmatpush.bf16.msra.mxu0 %v6124
        %6918 = vmatpush.bf16.msra.mxu0 %v6118
        %6919 = vmatpush.bf16.msra.mxu0 %v6112
        %6920 = vmatpush.bf16.msra.mxu0 %v6106
        %6921 = vmatpush.bf16.msra.mxu0 %v6100
        %6922 = vmatmul.bf16.gmra.mxu0 %v4830
        %v6923 = vpop.f32.mrf.mxu0
        %v6924 = vadd.f32 %v6911, %v6923
        %v6925 = vpop.f32.mrf.mxu0
        %6926 = vdwg.mxu0
        %6927 = vmatpush.bf16.msra.mxu0 %v6190
        %6928 = vmatpush.bf16.msra.mxu0 %v6184
        %6929 = vmatpush.bf16.msra.mxu0 %v6178
        %6930 = vmatpush.bf16.msra.mxu0 %v6172
        %6931 = vmatpush.bf16.msra.mxu0 %v6166
        %6932 = vmatpush.bf16.msra.mxu0 %v6160
        %6933 = vmatpush.bf16.msra.mxu0 %v6154
        %6934 = vmatpush.bf16.msra.mxu0 %v6148
        %6935 = vmatmul.bf16.gmra.mxu0 %v4831
        %v6936 = vpop.f32.mrf.mxu0
        %v6937 = vadd.f32 %v6924, %v6936
        %v6938 = vpop.f32.mrf.mxu0
        %6939 = vdwg.mxu0
        %6940 = vmatpush.bf16.msra.mxu0 %v6238
        %6941 = vmatpush.bf16.msra.mxu0 %v6232
        %6942 = vmatpush.bf16.msra.mxu0 %v6226
        %6943 = vmatpush.bf16.msra.mxu0 %v6220
        %6944 = vmatpush.bf16.msra.mxu0 %v6214
        %6945 = vmatpush.bf16.msra.mxu0 %v6208
        %6946 = vmatpush.bf16.msra.mxu0 %v6202
        %6947 = vmatpush.bf16.msra.mxu0 %v6196
        %6948 = vmatmul.bf16.gmra.mxu0 %v4832
        %v6949 = vpop.f32.mrf.mxu0
        %v6950 = vadd.f32 %v6937, %v6949
        %v6951 = vpop.f32.mrf.mxu0
        %6952 = vdwg.mxu0
        %6953 = vmatpush.bf16.msra.mxu0 %v6286
        %6954 = vmatpush.bf16.msra.mxu0 %v6280
        %6955 = vmatpush.bf16.msra.mxu0 %v6274
        %6956 = vmatpush.bf16.msra.mxu0 %v6268
        %6957 = vmatpush.bf16.msra.mxu0 %v6262
        %6958 = vmatpush.bf16.msra.mxu0 %v6256
        %6959 = vmatpush.bf16.msra.mxu0 %v6250
        %6960 = vmatpush.bf16.msra.mxu0 %v6244
        %6961 = vmatmul.bf16.gmra.mxu0 %v4833
        %v6962 = vpop.f32.mrf.mxu0
        %v6963 = vadd.f32 %v6950, %v6962
        %v6964 = vpop.f32.mrf.mxu0
        %6965 = vdwg.mxu0
        %6966 = vmatpush.bf16.msra.mxu0 %v6047
        %6967 = vmatpush.bf16.msra.mxu0 %v6041
        %6968 = vmatpush.bf16.msra.mxu0 %v6035
        %6969 = vmatpush.bf16.msra.mxu0 %v6029
        %6970 = vmatpush.bf16.msra.mxu0 %v6023
        %6971 = vmatpush.bf16.msra.mxu0 %v6017
        %6972 = vmatpush.bf16.msra.mxu0 %v6011
        %6973 = vmatpush.bf16.msra.mxu0 %v6005
        %6974 = vmatmul.bf16.gmra.mxu0 %v4828
        %v6975 = vpop.f32.mrf.mxu0
        %v6976 = vadd.f32 %v5129, %v6975
        %v6977 = vpop.f32.mrf.mxu0
        %6978 = vdwg.mxu0
        %6979 = vmatpush.bf16.msra.mxu0 %v6095
        %6980 = vmatpush.bf16.msra.mxu0 %v6089
        %6981 = vmatpush.bf16.msra.mxu0 %v6083
        %6982 = vmatpush.bf16.msra.mxu0 %v6077
        %6983 = vmatpush.bf16.msra.mxu0 %v6071
        %6984 = vmatpush.bf16.msra.mxu0 %v6065
        %6985 = vmatpush.bf16.msra.mxu0 %v6059
        %6986 = vmatpush.bf16.msra.mxu0 %v6053
        %6987 = vmatmul.bf16.gmra.mxu0 %v4829
        %v6988 = vpop.f32.mrf.mxu0
        %v6989 = vadd.f32 %v6976, %v6988
        %v6990 = vpop.f32.mrf.mxu0
        %6991 = vdwg.mxu0
        %6992 = vmatpush.bf16.msra.mxu0 %v6143
        %6993 = vmatpush.bf16.msra.mxu0 %v6137
        %6994 = vmatpush.bf16.msra.mxu0 %v6131
        %6995 = vmatpush.bf16.msra.mxu0 %v6125
        %6996 = vmatpush.bf16.msra.mxu0 %v6119
        %6997 = vmatpush.bf16.msra.mxu0 %v6113
        %6998 = vmatpush.bf16.msra.mxu0 %v6107
        %6999 = vmatpush.bf16.msra.mxu0 %v6101
        %7000 = vmatmul.bf16.gmra.mxu0 %v4830
        %v7001 = vpop.f32.mrf.mxu0
        %v7002 = vadd.f32 %v6989, %v7001
        %v7003 = vpop.f32.mrf.mxu0
        %7004 = vdwg.mxu0
        %7005 = vmatpush.bf16.msra.mxu0 %v6191
        %7006 = vmatpush.bf16.msra.mxu0 %v6185
        %7007 = vmatpush.bf16.msra.mxu0 %v6179
        %7008 = vmatpush.bf16.msra.mxu0 %v6173
        %7009 = vmatpush.bf16.msra.mxu0 %v6167
        %7010 = vmatpush.bf16.msra.mxu0 %v6161
        %7011 = vmatpush.bf16.msra.mxu0 %v6155
        %7012 = vmatpush.bf16.msra.mxu0 %v6149
        %7013 = vmatmul.bf16.gmra.mxu0 %v4831
        %v7014 = vpop.f32.mrf.mxu0
        %v7015 = vadd.f32 %v7002, %v7014
        %v7016 = vpop.f32.mrf.mxu0
        %7017 = vdwg.mxu0
        %7018 = vmatpush.bf16.msra.mxu0 %v6239
        %7019 = vmatpush.bf16.msra.mxu0 %v6233
        %7020 = vmatpush.bf16.msra.mxu0 %v6227
        %7021 = vmatpush.bf16.msra.mxu0 %v6221
        %7022 = vmatpush.bf16.msra.mxu0 %v6215
        %7023 = vmatpush.bf16.msra.mxu0 %v6209
        %7024 = vmatpush.bf16.msra.mxu0 %v6203
        %7025 = vmatpush.bf16.msra.mxu0 %v6197
        %7026 = vmatmul.bf16.gmra.mxu0 %v4832
        %v7027 = vpop.f32.mrf.mxu0
        %v7028 = vadd.f32 %v7015, %v7027
        %v7029 = vpop.f32.mrf.mxu0
        %7030 = vdwg.mxu0
        %7031 = vmatpush.bf16.msra.mxu0 %v6287
        %7032 = vmatpush.bf16.msra.mxu0 %v6281
        %7033 = vmatpush.bf16.msra.mxu0 %v6275
        %7034 = vmatpush.bf16.msra.mxu0 %v6269
        %7035 = vmatpush.bf16.msra.mxu0 %v6263
        %7036 = vmatpush.bf16.msra.mxu0 %v6257
        %7037 = vmatpush.bf16.msra.mxu0 %v6251
        %7038 = vmatpush.bf16.msra.mxu0 %v6245
        %7039 = vmatmul.bf16.gmra.mxu0 %v4833
        %v7040 = vpop.f32.mrf.mxu0
        %v7041 = vadd.f32 %v7028, %v7040
        %v7042 = vpop.f32.mrf.mxu0
        %7043 = vdwg.mxu0
        %v7044 = vrot.slane %v6651, 4
        %v7045 = vadd.f32 %v6651, %v7044
        %v7046 = vrot.slane %v7045, 2
        %v7047 = vadd.f32 %v7045, %v7046
        %v7048 = vrot.slane %v7047, 1
        %v7049 = vadd.f32 %v7047, %v7048
        %v7050 = vrot.slane %v6729, 4
        %v7051 = vadd.f32 %v6729, %v7050
        %v7052 = vrot.slane %v7051, 2
        %v7053 = vadd.f32 %v7051, %v7052
        %v7054 = vrot.slane %v7053, 1
        %v7055 = vadd.f32 %v7053, %v7054
        %v7056 = vrot.slane %v6807, 4
        %v7057 = vadd.f32 %v6807, %v7056
        %v7058 = vrot.slane %v7057, 2
        %v7059 = vadd.f32 %v7057, %v7058
        %v7060 = vrot.slane %v7059, 1
        %v7061 = vadd.f32 %v7059, %v7060
        %v7062 = vrot.slane %v6885, 4
        %v7063 = vadd.f32 %v6885, %v7062
        %v7064 = vrot.slane %v7063, 2
        %v7065 = vadd.f32 %v7063, %v7064
        %v7066 = vrot.slane %v7065, 1
        %v7067 = vadd.f32 %v7065, %v7066
        %v7068 = vrot.slane %v6963, 4
        %v7069 = vadd.f32 %v6963, %v7068
        %v7070 = vrot.slane %v7069, 2
        %v7071 = vadd.f32 %v7069, %v7070
        %v7072 = vrot.slane %v7071, 1
        %v7073 = vadd.f32 %v7071, %v7072
        %v7074 = vrot.slane %v7041, 4
        %v7075 = vadd.f32 %v7041, %v7074
        %v7076 = vrot.slane %v7075, 2
        %v7077 = vadd.f32 %v7075, %v7076
        %v7078 = vrot.slane %v7077, 1
        %v7079 = vadd.f32 %v7077, %v7078
        %v7080 = vrcp.pop 8.0
        %v7081 = vmul.f32 8.0, %v7080
        %v7082 = vsub.f32 1.0, %v7081
        %v7083 = vmul.f32 %v7080, %v7082
        %v7084 = vadd.f32 %v7080, %v7083
        %vm7085 = vweird.f32 %v7080
        %v7086 = vsel %vm7085, %v7080, %v7084
        %v7087 = vmul.f32 %v7049, %v7086
        %v7088 = vmul.f32 %v7055, %v7086
        %v7089 = vmul.f32 %v7061, %v7086
        %v7090 = vmul.f32 %v7067, %v7086
        %v7091 = vmul.f32 %v7073, %v7086
        %v7092 = vmul.f32 %v7079, %v7086
        %v7099 = vrot.slane %v7088, 7
        %v7100 = vrot.slane %v7089, 6
        %v7101 = vrot.slane %v7090, 5
        %v7102 = vrot.slane %v7091, 4
        %v7103 = vrot.slane %v7092, 3
        %vm7104 = vcmask 1040384
        %v7105 = vsel %vm7104, %v7087, %v7099
        %vm7106 = vcmask 1041408
        %v7107 = vsel %vm7106, %v7105, %v7100
        %vm7108 = vcmask 1043459
        %v7109 = vsel %vm7108, %v7101, %v7102
        %vm7110 = vcmask 1044483
        %v7111 = vsel %vm7110, %v7109, %v7103
        %vm7112 = vcmask 1042432
        %v7113 = vsel %vm7112, %v7107, %v7111
        %v7115 = vlaneseq
        %vm7116 = vcmp.ge.s32.totalorder %v7115, 0
        %vm7117 = vcmp.lt.s32.totalorder %v7115, 768
        %vm7118 = vmand %vm7116, %vm7117
        %7119 = vst.msk [vmem:[%s389] sm:$0x3f] %vm7118, %v7113
        %s7120 = sand.u32 %s187, 1
        %s7121 = scalar_lea.sflag [#allocation4], %s7120
        %s7122 = sand.u32 %s187, 1
        %s7123 = smul.addr %s7122, 6
        %s7124 = scalar_lea.vmem [#allocation14], %s7123
        // Predicated region
        $region77: #{tpu_custom_call.1} parent=47 // pred_check
          %p7125 = pneg %p197
        $region78: #{tpu_custom_call.1} parent=47 // pred_check_branch
          %7127 = sbr.rel (%p7125) target = $region80
        $region79: #{tpu_custom_call.1} parent=47 // pred_region
          %7129 = vsyncadd %s7121, 0
          %s7130 = smul.addr %s27, 6
          %s7131 = scalar_lea.hbm %s7, %s7130
          %s7133 = sshll.u32 %s7124, 4
          %s7134 = int_to_ptr.vmem [resolvable:$true] %s7133
          %s7135 = sshll.u32 %s7131, 4
          %s7136 = int_to_ptr.hbm [resolvable:$true] %s7135
          %7138 = dma.vmem_to_hbm [thread:$0]  %s7134, 96, %s7136, %s7121
        $region80: #{tpu_custom_call.1} parent=47 // pred_fallthru
          _
      $region48: #{tpu_custom_call.1} parent=5 // pred_fallthru
        _
      %p7139 = scmp.le.s32.totalorder 2, %s22
      // Predicated region
      $region81: #{tpu_custom_call.1} parent=5 // pred_check
        %p7140 = pneg %p7139
      $region82: #{tpu_custom_call.1} parent=5 // pred_check_branch
        %7142 = sbr.rel (%p7140) target = $region84
      $region83: #{tpu_custom_call.1} parent=5 // pred_region
        %s7143 = ssub.s32 %s22, 2
        // Predicated region
        $region85: #{tpu_custom_call.1} parent=83 // pred_check
          %p7144 = pneg %p203
        $region86: #{tpu_custom_call.1} parent=83 // pred_check_branch
          %7146 = sbr.rel (%p7144) target = $region88
        $region87: #{tpu_custom_call.1} parent=83 // pred_region
          %s7147 = sand.u32 %s188, 1
          %s7148 = scalar_lea.sflag [#allocation4], %s7147
          %s7149 = sand.u32 %s188, 1
          %s7150 = smul.addr %s7149, 6
          %s7151 = scalar_lea.vmem [#allocation14], %s7150
          %7153 = dma.done %s7148, 96
        $region88: #{tpu_custom_call.1} parent=83 // pred_fallthru
          _
      $region84: #{tpu_custom_call.1} parent=5 // pred_fallthru
        _
    $region6: #{tpu_custom_call.1} parent=1 // loop_footer
      %s26 = sadd.s32 1, %s22
    $region7: #{tpu_custom_call.1} parent=1 // loop_footer_branch
      %21 = sbr.rel target = $region3
    $region8: #{tpu_custom_call.1} parent=1 // loop_exit
      _
    %7154 = vsyncpa [#allocation3], 1
    %s7155 = scalar_lea.sflag [#allocation3], 1
    %7156 = vsyncpa %s7155, 1
    %7157 = vsyncpa [#allocation6], 1
    %7158 = vsyncpa [#allocation9], 1
    %7159 = vsyncpa [#allocation12], 1
    %7160 = vsyncpa [#allocation4], 1
    %s7161 = scalar_lea.sflag [#allocation4], 1
    %7162 = vsyncpa %s7161, 1

</llo_original>
